<compile_context>
chip_gen: v6e
topology: v6e:2x2x1
jax: 0.10.0
libtpu: 0.0.40
codegen_flags: <defaults>
</compile_context>

<pallas_src>
from functools import partial

import jax
import jax.numpy as jnp
from jax import lax
from jax.experimental import pallas as pl
from jax.experimental.pallas import tpu as pltpu

# Indices from the PyTorch module
SECTION_INFO_DIM = 2
MYIELD_START = 24
MYIELD_END = 24 + (6 - 1) * SECTION_INFO_DIM + 1   # 35 -> cols 24,26,28,30,32,34
OUTPUT_START = 12
OUTPUT_END = 18
NSEC = 6


def _plastic_hinge_kernel(yf_ref, xm_ref, pred_ref, real_ref, counts_ref,
                          acc_p_ref, acc_r_ref, *,
                          B, T, TB, TT, C, need_b_mask, need_t_mask):
    # yf_ref    : (1,) f32 SMEM            yield factor
    # xm_ref    : (TB, C) f32 VMEM         yield moments scattered onto lanes 12:18 (0 elsewhere)
    # pred_ref  : (TB, TT, C) native VMEM  node_out block
    # real_ref  : (TB, TT, C) native VMEM  node_y  block
    # counts_ref: (1, 8, 128) int32 VMEM   per-batch-tile [TP, FP, FN, TN] at [0, 0, 0:4]
    # acc_*_ref : (TB, C) native VMEM      running per-(row, channel) |.|-max
    b = pl.program_id(0)
    t = pl.program_id(1)
    nt = pl.num_programs(1)

    @pl.when(t == 0)
    def _init():
        acc_p_ref[...] = jnp.zeros_like(acc_p_ref)
        acc_r_ref[...] = jnp.zeros_like(acc_r_ref)

    def _update(mask_tail):
        a_p = jnp.abs(pred_ref[...])                        # (TB, TT, C)
        a_r = jnp.abs(real_ref[...])
        if mask_tail:  # static: only traced for the ragged last time tile
            t_ids = lax.broadcasted_iota(jnp.int32, (1, TT, C), 1)
            ok = t_ids < (T - t * TT)
            a_p = jnp.where(ok, a_p, 0)
            a_r = jnp.where(ok, a_r, 0)
        # Fold the time axis per block (sublane reduce) into the tiny (TB, C)
        # accumulator -> no full-block scratch stores in the hot loop.
        acc_p_ref[...] = jnp.maximum(acc_p_ref[...], jnp.max(a_p, axis=1))
        acc_r_ref[...] = jnp.maximum(acc_r_ref[...], jnp.max(a_r, axis=1))

    if need_t_mask:
        @pl.when(t != nt - 1)
        def _full_tile():
            _update(False)

        @pl.when(t == nt - 1)
        def _ragged_tile():
            _update(True)
    else:
        _update(False)

    @pl.when(t == nt - 1)
    def _finalize():
        pred_max = acc_p_ref[...].astype(jnp.float32)       # (TB, C)
        real_max = acc_r_ref[...].astype(jnp.float32)

        xm = xm_ref[...]                   # nonzero only on section lanes 12:18
        thr = yf_ref[0] * xm

        if need_b_mask:  # static: only traced when B % TB != 0
            nrows = B - b * TB                              # rows of this tile in bounds
            rows = lax.broadcasted_iota(jnp.int32, (TB, C), 0)
            valid = rows < nrows
            nz = (xm != 0.0) & valid
            total = NSEC * jnp.minimum(jnp.int32(TB), nrows)
        else:
            nz = xm != 0.0
            total = jnp.int32(NSEC * TB)

        # nz is False on non-section lanes (xm == 0 there) and on out-of-bounds
        # batch rows, so garbage that flowed into the accumulators never counts.
        ph_real = (real_max >= thr) & nz
        ph_pred = (pred_max >= thr) & nz

        both = jnp.sum((ph_real & ph_pred).astype(jnp.int32))
        n_real = jnp.sum(ph_real.astype(jnp.int32))
        n_pred = jnp.sum(ph_pred.astype(jnp.int32))

        tp = both
        fp = n_pred - both
        fn = n_real - both
        tn = total - n_real - n_pred + both   # xm==0 sections land in TN (matches torch)

        lane = lax.broadcasted_iota(jnp.int32, (1, 8, 128), 2)
        sub = lax.broadcasted_iota(jnp.int32, (1, 8, 128), 1)
        row0 = sub == 0
        counts_ref[...] = (jnp.where(row0 & (lane == 0), tp, 0)
                           + jnp.where(row0 & (lane == 1), fp, 0)
                           + jnp.where(row0 & (lane == 2), fn, 0)
                           + jnp.where(row0 & (lane == 3), tn, 0)).astype(jnp.int32)


def _choose_batch_tile(B, want):
    """TB is a multiple of 8 (sublane granularity of the 2-D xm block) unless it
    spans the full batch; aim for >= 2 batch tiles so the 'parallel' batch axis
    can split across both TensorCores on v7x."""
    if B <= 8:
        return B
    half = -(-B // 2)
    tb = min(int(want), half, B)
    return max((tb // 8) * 8, 8)


def _choose_time_tile(T, want, TB, padded_c, itemsize, budget_bytes):
    """Largest time tile whose double-buffered, lane-padded node_out/node_y
    blocks (2 tensors x 2 buffers) fit the VMEM budget; multiple of 32 when tiled."""
    tt = int(min(want, T))
    while tt > 32 and 4 * TB * tt * padded_c * itemsize > budget_bytes:
        tt //= 2
    if tt < T:
        tt = max((tt // 32) * 32, 8)
    return tt


# 2 input tensors x 2 pipeline buffers of lane-padded blocks must fit here.
# Sized for v7x (64 MiB physical VMEM); comfortable on v5e/v6e (128 MiB).
_INPUT_VMEM_BUDGET = 24 << 20


@partial(jax.jit, static_argnames=("batch_tile", "time_tile"))
def plastic_hinge_counts(x, node_out, node_y, yield_factor=0.9, *,
                         batch_tile=8, time_tile=1024):
    """Returns int32[4] = [TP, FP, FN, TN] for one forward call."""
    B, T, C = node_out.shape
    assert node_y.shape == (B, T, C)
    assert C >= OUTPUT_END
    assert x.shape[0] == B and x.shape[1] >= MYIELD_END

    itemsize = max(jnp.dtype(node_out.dtype).itemsize,
                   jnp.dtype(node_y.dtype).itemsize)
    padded_c = -(-C // 128) * 128          # C lanes pad to full 128-lane rows in VMEM

    TB = _choose_batch_tile(B, batch_tile)
    TT = _choose_time_tile(T, time_tile, TB, padded_c, itemsize, _INPUT_VMEM_BUDGET)
    nB = -(-B // TB)
    nT = -(-T // TT)
    need_b_mask = (B % TB) != 0
    need_t_mask = (T % TT) != 0

    # Tiny glue only (B*C elements): strided yield-moment columns scattered onto
    # the section lanes 12:18 so the kernel never needs a lane shift.  The big
    # (B, T, C) tensors go into the kernel untouched, in their native dtype.
    xm6 = x[:, MYIELD_START:MYIELD_END:SECTION_INFO_DIM].astype(jnp.float32)   # (B, 6)
    xm = jnp.zeros((B, C), jnp.float32).at[:, OUTPUT_START:OUTPUT_END].set(xm6)
    yf = jnp.reshape(jnp.asarray(yield_factor, jnp.float32), (1,))

    kernel = partial(_plastic_hinge_kernel, B=B, T=T, TB=TB, TT=TT, C=C,
                     need_b_mask=need_b_mask, need_t_mask=need_t_mask)

    # VMEM actually used (lane-padded): pipelined inputs + xm + accumulators + counts.
    in_bytes = 4 * TB * TT * padded_c * itemsize            # 2 tensors x 2 buffers
    small_bytes = 2 * TB * padded_c * (4 + itemsize) + 2 * 8 * 128 * 4
    vmem_limit = int(min(max(in_bytes + small_bytes + (4 << 20), 32 << 20), 48 << 20))

    bytes_hbm = (B * T * C * jnp.dtype(node_out.dtype).itemsize
                 + B * T * C * jnp.dtype(node_y.dtype).itemsize
                 + B * C * 4 + nB * 8 * 128 * 4)
    cost = pl.CostEstimate(flops=4 * B * T * C, transcendentals=0,
                           bytes_accessed=bytes_hbm)

    partial_counts = pl.pallas_call(
        kernel,
        out_shape=jax.ShapeDtypeStruct((nB, 8, 128), jnp.int32),
        grid_spec=pltpu.PrefetchScalarGridSpec(
            num_scalar_prefetch=0,
            grid=(nB, nT),
            in_specs=[
                pl.BlockSpec(memory_space=pltpu.MemorySpace.SMEM),     # yield_factor
                pl.BlockSpec((TB, C), lambda b, t: (b, 0)),            # yield moments
                # TODO(synk): on v5e, sweep pipeline_mode=pl.Buffered(3) here if
                # the trace shows exposed DMA (review opt 8).
                pl.BlockSpec((TB, TT, C), lambda b, t: (b, t, 0)),     # node_out
                pl.BlockSpec((TB, TT, C), lambda b, t: (b, t, 0)),     # node_y
            ],
            out_specs=pl.BlockSpec((1, 8, 128), lambda b, t: (b, 0, 0)),
            scratch_shapes=[
                pltpu.VMEM((TB, C), node_out.dtype),
                pltpu.VMEM((TB, C), node_y.dtype),
            ],
        ),
        compiler_params=pltpu.CompilerParams(
            dimension_semantics=("parallel", "arbitrary"),
            vmem_limit_bytes=vmem_limit),
        cost_estimate=cost,
    )(yf, xm, node_out, node_y)

    return partial_counts[:, 0, :4].sum(axis=0).astype(jnp.int32)


class PlasticHingeClassifier:
    """Mirrors the PyTorch module's default (specific_location=False) forward.
    TP/FP/FN/TN accumulate on-device; no per-step host sync."""

    def __init__(self, yield_factor=0.9, specific_location=False, norm_dict=None):
        if specific_location:
            # TODO(synk): specific_location=True uses data-dependent boolean-mask
            # gathers (dynamic output sizes) with no clean static Pallas equivalent.
            raise NotImplementedError("specific_location=True is not supported")
        self.yield_factor = yield_factor
        self.norm_dict = norm_dict
        self.section_accuracy_Mz = jnp.zeros((4,), jnp.int32)

    def forward(self, x, node_out, node_y):
        counts = plastic_hinge_counts(x, node_out, node_y, self.yield_factor)
        self.section_accuracy_Mz = self.section_accuracy_Mz + counts   # device-side add
        return counts

    __call__ = forward

    def get_accuracy_and_reset(self, record_Mz=None, epoch=0, t_v=0):
        result_Mz = [int(v) for v in jax.device_get(self.section_accuracy_Mz)]
        if record_Mz is not None:
            record_Mz[t_v, epoch, 0:4] = result_Mz
        self.section_accuracy_Mz = jnp.zeros((4,), jnp.int32)
        return (result_Mz, record_Mz)


def _reference_counts(x, node_out, node_y, yield_factor=0.9):
    # Pure-JAX reference mirroring the torch code.
    xm = x[:, MYIELD_START:MYIELD_END:SECTION_INFO_DIM].astype(jnp.float32)
    cond_nz = xm != 0
    real_max = jnp.max(jnp.abs(node_y[:, :, OUTPUT_START:OUTPUT_END].astype(jnp.float32)), axis=1)
    pred_max = jnp.max(jnp.abs(node_out[:, :, OUTPUT_START:OUTPUT_END].astype(jnp.float32)), axis=1)
    thr = yield_factor * xm
    ph_real = (real_max >= thr) & cond_nz
    ph_pred = (pred_max >= thr) & cond_nz
    tp = jnp.sum(ph_real & ph_pred)
    fp = jnp.sum(~ph_real & ph_pred)
    fn = jnp.sum(ph_real & ~ph_pred)
    tn = jnp.sum(~ph_real & ~ph_pred)
    return jnp.stack([tp, fp, fn, tn]).astype(jnp.int32)


if __name__ == "__main__":
    # Small shapes consistent with the module's index layout, chosen to exercise
    # ragged batch tiling (B % TB != 0) and, with an explicit small time tile,
    # ragged time tiling (T % TT != 0).
    B, T, F, C = 10, 300, 36, 18

    key = jax.random.PRNGKey(0)
    kx, ko, ky = jax.random.split(key, 3)

    x = jax.random.normal(kx, (B, F), dtype=jnp.float32)
    x = x.at[0, MYIELD_START].set(0.0)            # exercise the not-zero mask
    x = x.at[3, MYIELD_START + 8].set(0.0)        # another zero yield moment (col 32)
    node_out = 0.5 * jax.random.normal(ko, (B, T, C), dtype=jnp.float32)
    node_y = 0.5 * jax.random.normal(ky, (B, T, C), dtype=jnp.float32)

    ref = _reference_counts(x, node_out, node_y, 0.9)

    # Default tiles: B split into 2 batch tiles (ragged), T fits one time tile.
    clf = PlasticHingeClassifier(yield_factor=0.9)
    counts = jax.block_until_ready(clf.forward(x, node_out, node_y))
    assert [int(v) for v in counts] == [int(v) for v in ref], (counts, ref)
    assert int(jnp.sum(counts)) == B * NSEC       # TP+FP+FN+TN == total sections

    # Small time tile: exercises the time grid axis, the masked ragged tail
    # (300 % 64 != 0) and the unmasked full-tile path.
    counts_small = jax.block_until_ready(
        plastic_hinge_counts(x, node_out, node_y, 0.9, batch_tile=8, time_tile=64))
    assert [int(v) for v in counts_small] == [int(v) for v in ref], (counts_small, ref)

    # Second step: accumulation stays on device, no host round-trip in forward().
    clf.forward(x, node_out, node_y)
    acc, _ = clf.get_accuracy_and_reset()
    assert acc == [2 * int(v) for v in ref], (acc, ref)

    print("KERNEL_OK")
</pallas_src>

<mosaic_0001>
module attributes {stable_mosaic.version = 11 : i64} {
  func.func @_plastic_hinge_kernel(%arg0: i32, %arg1: i32, %arg2: memref<1xf32, #tpu.memory_space<smem>>, %arg3: memref<8x18xf32, #tpu.memory_space<vmem>>, %arg4: memref<8x300x18xf32, #tpu.memory_space<vmem>>, %arg5: memref<8x300x18xf32, #tpu.memory_space<vmem>>, %arg6: memref<1x8x128xi32, #tpu.memory_space<vmem>>, %arg7: memref<8x18xf32, #tpu.memory_space<vmem>>, %arg8: memref<8x18xf32, #tpu.memory_space<vmem>>) attributes {dimension_semantics = [#tpu.dimension_semantics<parallel>, #tpu.dimension_semantics<arbitrary>], iteration_bounds = array<i64: 2, 1>, scalar_prefetch = 0 : i64, scratch_operands = 2 : i64, tpu.core_type = #tpu.core_type<tc>, window_params = [{transform_indices = @transform_0, window_bounds = array<i64: 1>}, {transform_indices = @transform_1, window_bounds = array<i64: 8, 18>}, {transform_indices = @transform_2, window_bounds = array<i64: 8, 300, 18>}, {transform_indices = @transform_3, window_bounds = array<i64: 8, 300, 18>}, {transform_indices = @transform_4, window_bounds = array<i64: 1, 8, 128>}]} {
    %c0_i32 = arith.constant 0 : i32
    %0 = arith.cmpi eq, %arg1, %c0_i32 : i32
    %1 = arith.extui %0 : i1 to i32
    %c0_i32_0 = arith.constant 0 : i32
    %2 = arith.cmpi ne, %1, %c0_i32_0 : i32
    scf.if %2 {
      %cst_17 = arith.constant 0.000000e+00 : f32
      %18 = vector.broadcast %cst_17 : f32 to vector<8x18xf32>
      %c0_18 = arith.constant 0 : index
      %c0_19 = arith.constant 0 : index
      %19 = vector.load %arg7[%c0_18, %c0_19] : memref<8x18xf32, #tpu.memory_space<vmem>>, vector<8x18xf32>
      tpu.vector_store %arg7[%c0_18, %c0_19], %18 {strides = array<i32>} : memref<8x18xf32, #tpu.memory_space<vmem>>, vector<8x18xf32>,
      %cst_20 = arith.constant 0.000000e+00 : f32
      %20 = vector.broadcast %cst_20 : f32 to vector<8x18xf32>
      %c0_21 = arith.constant 0 : index
      %c0_22 = arith.constant 0 : index
      %21 = vector.load %arg8[%c0_21, %c0_22] : memref<8x18xf32, #tpu.memory_space<vmem>>, vector<8x18xf32>
      tpu.vector_store %arg8[%c0_21, %c0_22], %20 {strides = array<i32>} : memref<8x18xf32, #tpu.memory_space<vmem>>, vector<8x18xf32>,
    } else {
    }
    %c0 = arith.constant 0 : index
    %c0_1 = arith.constant 0 : index
    %c0_2 = arith.constant 0 : index
    %3 = vector.load %arg4[%c0, %c0_1, %c0_2] : memref<8x300x18xf32, #tpu.memory_space<vmem>>, vector<8x300x18xf32>
    %4 = math.absf %3 : vector<8x300x18xf32>
    %c0_3 = arith.constant 0 : index
    %c0_4 = arith.constant 0 : index
    %c0_5 = arith.constant 0 : index
    %5 = vector.load %arg5[%c0_3, %c0_4, %c0_5] : memref<8x300x18xf32, #tpu.memory_space<vmem>>, vector<8x300x18xf32>
    %6 = math.absf %5 : vector<8x300x18xf32>
    %c0_6 = arith.constant 0 : index
    %c0_7 = arith.constant 0 : index
    %7 = vector.load %arg7[%c0_6, %c0_7] : memref<8x18xf32, #tpu.memory_space<vmem>>, vector<8x18xf32>
    %cst = arith.constant dense<0xFF800000> : vector<8x18xf32>
    %8 = vector.multi_reduction <maximumf>, %4, %cst [1] : vector<8x300x18xf32> to vector<8x18xf32>
    %9 = arith.maximumf %7, %8 : vector<8x18xf32>
    %c0_8 = arith.constant 0 : index
    %c0_9 = arith.constant 0 : index
    %10 = vector.load %arg7[%c0_8, %c0_9] : memref<8x18xf32, #tpu.memory_space<vmem>>, vector<8x18xf32>
    tpu.vector_store %arg7[%c0_8, %c0_9], %9 {strides = array<i32>} : memref<8x18xf32, #tpu.memory_space<vmem>>, vector<8x18xf32>,
    %c0_10 = arith.constant 0 : index
    %c0_11 = arith.constant 0 : index
    %11 = vector.load %arg8[%c0_10, %c0_11] : memref<8x18xf32, #tpu.memory_space<vmem>>, vector<8x18xf32>
    %cst_12 = arith.constant dense<0xFF800000> : vector<8x18xf32>
    %12 = vector.multi_reduction <maximumf>, %6, %cst_12 [1] : vector<8x300x18xf32> to vector<8x18xf32>
    %13 = arith.maximumf %11, %12 : vector<8x18xf32>
    %c0_13 = arith.constant 0 : index
    %c0_14 = arith.constant 0 : index
    %14 = vector.load %arg8[%c0_13, %c0_14] : memref<8x18xf32, #tpu.memory_space<vmem>>, vector<8x18xf32>
    tpu.vector_store %arg8[%c0_13, %c0_14], %13 {strides = array<i32>} : memref<8x18xf32, #tpu.memory_space<vmem>>, vector<8x18xf32>,
    %c0_i32_15 = arith.constant 0 : i32
    %15 = arith.cmpi eq, %arg1, %c0_i32_15 : i32
    %16 = arith.extui %15 : i1 to i32
    %c0_i32_16 = arith.constant 0 : i32
    %17 = arith.cmpi ne, %16, %c0_i32_16 : i32
    scf.if %17 {
      %c0_17 = arith.constant 0 : index
      %c0_18 = arith.constant 0 : index
      %18 = vector.load %arg7[%c0_17, %c0_18] : memref<8x18xf32, #tpu.memory_space<vmem>>, vector<8x18xf32>
      %c0_19 = arith.constant 0 : index
      %c0_20 = arith.constant 0 : index
      %19 = vector.load %arg8[%c0_19, %c0_20] : memref<8x18xf32, #tpu.memory_space<vmem>>, vector<8x18xf32>
      %c0_21 = arith.constant 0 : index
      %c0_22 = arith.constant 0 : index
      %20 = vector.load %arg3[%c0_21, %c0_22] : memref<8x18xf32, #tpu.memory_space<vmem>>, vector<8x18xf32>
      %c0_23 = arith.constant 0 : index
      %21 = memref.load %arg2[%c0_23] : memref<1xf32, #tpu.memory_space<smem>>
      %22 = vector.broadcast %21 : f32 to vector<8x18xf32>
      %23 = arith.mulf %22, %20 : vector<8x18xf32>
      %c8_i32 = arith.constant 8 : i32
      %24 = arith.muli %arg0, %c8_i32 : i32
      %c10_i32 = arith.constant 10 : i32
      %25 = arith.subi %c10_i32, %24 : i32
      %26 = tpu.iota {dimensions = array<i32: 0>} : vector<8x18xi32>
      %27 = vector.broadcast %25 : i32 to vector<8x18xi32>
      %28 = arith.cmpi slt, %26, %27 : vector<8x18xi32>
      %cst_24 = arith.constant 0.000000e+00 : f32
      %29 = vector.broadcast %cst_24 : f32 to vector<8x18xf32>
      %30 = arith.cmpf one, %20, %29 : vector<8x18xf32>
      %31 = arith.andi %30, %28 : vector<8x18xi1>
      %c8_i32_25 = arith.constant 8 : i32
      %32 = arith.minsi %c8_i32_25, %25 : i32
      %c6_i32 = arith.constant 6 : i32
      %33 = arith.muli %c6_i32, %32 : i32
      %34 = arith.cmpf oge, %19, %23 : vector<8x18xf32>
      %35 = arith.andi %34, %31 : vector<8x18xi1>
      %36 = arith.cmpf oge, %18, %23 : vector<8x18xf32>
      %37 = arith.andi %36, %31 : vector<8x18xi1>
      %38 = arith.andi %35, %37 : vector<8x18xi1>
      %39 = arith.extui %38 : vector<8x18xi1> to vector<8x18xi32>
      %40 = vector.shape_cast %39 : vector<8x18xi32> to vector<1x8x18xi32>
      %cst_26 = arith.constant dense<0> : vector<1xi32>
      %41 = vector.multi_reduction <add>, %40, %cst_26 [1, 2] : vector<1x8x18xi32> to vector<1xi32>
      %42 = vector.shape_cast %41 : vector<1xi32> to vector<1x1x1xi32>
      %43 = vector.extract %42[0, 0, 0] : i32 from vector<1x1x1xi32>
      %44 = arith.extui %35 : vector<8x18xi1> to vector<8x18xi32>
      %45 = vector.shape_cast %44 : vector<8x18xi32> to vector<1x8x18xi32>
      %cst_27 = arith.constant dense<0> : vector<1xi32>
      %46 = vector.multi_reduction <add>, %45, %cst_27 [1, 2] : vector<1x8x18xi32> to vector<1xi32>
      %47 = vector.shape_cast %46 : vector<1xi32> to vector<1x1x1xi32>
      %48 = vector.extract %47[0, 0, 0] : i32 from vector<1x1x1xi32>
      %49 = arith.extui %37 : vector<8x18xi1> to vector<8x18xi32>
      %50 = vector.shape_cast %49 : vector<8x18xi32> to vector<1x8x18xi32>
      %cst_28 = arith.constant dense<0> : vector<1xi32>
      %51 = vector.multi_reduction <add>, %50, %cst_28 [1, 2] : vector<1x8x18xi32> to vector<1xi32>
      %52 = vector.shape_cast %51 : vector<1xi32> to vector<1x1x1xi32>
      %53 = vector.extract %52[0, 0, 0] : i32 from vector<1x1x1xi32>
      %54 = arith.subi %53, %43 : i32
      %55 = arith.subi %48, %43 : i32
      %56 = arith.subi %33, %48 : i32
      %57 = arith.subi %56, %53 : i32
      %58 = arith.addi %57, %43 : i32
      %59 = tpu.iota {dimensions = array<i32: 2>} : vector<1x8x128xi32>
      %60 = tpu.iota {dimensions = array<i32: 1>} : vector<1x8x128xi32>
      %c0_i32_29 = arith.constant 0 : i32
      %61 = vector.broadcast %c0_i32_29 : i32 to vector<1x8x128xi32>
      %62 = arith.cmpi eq, %60, %61 : vector<1x8x128xi32>
      %c0_i32_30 = arith.constant 0 : i32
      %63 = vector.broadcast %c0_i32_30 : i32 to vector<1x8x128xi32>
      %64 = arith.cmpi eq, %59, %63 : vector<1x8x128xi32>
      %65 = arith.andi %62, %64 : vector<1x8x128xi1>
      %c0_i32_31 = arith.constant 0 : i32
      %66 = vector.broadcast %43 : i32 to vector<1x8x128xi32>
      %67 = vector.broadcast %c0_i32_31 : i32 to vector<1x8x128xi32>
      %68 = arith.select %65, %66, %67 : vector<1x8x128xi1>, vector<1x8x128xi32>
      %c1_i32 = arith.constant 1 : i32
      %69 = vector.broadcast %c1_i32 : i32 to vector<1x8x128xi32>
      %70 = arith.cmpi eq, %59, %69 : vector<1x8x128xi32>
      %71 = arith.andi %62, %70 : vector<1x8x128xi1>
      %c0_i32_32 = arith.constant 0 : i32
      %72 = vector.broadcast %54 : i32 to vector<1x8x128xi32>
      %73 = vector.broadcast %c0_i32_32 : i32 to vector<1x8x128xi32>
      %74 = arith.select %71, %72, %73 : vector<1x8x128xi1>, vector<1x8x128xi32>
      %75 = arith.addi %68, %74 : vector<1x8x128xi32>
      %c2_i32 = arith.constant 2 : i32
      %76 = vector.broadcast %c2_i32 : i32 to vector<1x8x128xi32>
      %77 = arith.cmpi eq, %59, %76 : vector<1x8x128xi32>
      %78 = arith.andi %62, %77 : vector<1x8x128xi1>
      %c0_i32_33 = arith.constant 0 : i32
      %79 = vector.broadcast %55 : i32 to vector<1x8x128xi32>
      %80 = vector.broadcast %c0_i32_33 : i32 to vector<1x8x128xi32>
      %81 = arith.select %78, %79, %80 : vector<1x8x128xi1>, vector<1x8x128xi32>
      %82 = arith.addi %75, %81 : vector<1x8x128xi32>
      %c3_i32 = arith.constant 3 : i32
      %83 = vector.broadcast %c3_i32 : i32 to vector<1x8x128xi32>
      %84 = arith.cmpi eq, %59, %83 : vector<1x8x128xi32>
      %85 = arith.andi %62, %84 : vector<1x8x128xi1>
      %c0_i32_34 = arith.constant 0 : i32
      %86 = vector.broadcast %58 : i32 to vector<1x8x128xi32>
      %87 = vector.broadcast %c0_i32_34 : i32 to vector<1x8x128xi32>
      %88 = arith.select %85, %86, %87 : vector<1x8x128xi1>, vector<1x8x128xi32>
      %89 = arith.addi %82, %88 : vector<1x8x128xi32>
      %c0_35 = arith.constant 0 : index
      %c0_36 = arith.constant 0 : index
      %c0_37 = arith.constant 0 : index
      %90 = vector.load %arg6[%c0_35, %c0_36, %c0_37] : memref<1x8x128xi32, #tpu.memory_space<vmem>>, vector<1x8x128xi32>
      tpu.vector_store %arg6[%c0_35, %c0_36, %c0_37], %89 {strides = array<i32>} : memref<1x8x128xi32, #tpu.memory_space<vmem>>, vector<1x8x128xi32>,
    } else {
    }
    return
  }
  func.func @transform_0(%arg0: i32, %arg1: i32) -> i32 {
    %c0_i32 = arith.constant 0 : i32
    %c0_i32_0 = arith.constant 0 : i32
    return %c0_i32 : i32
  }
  func.func @transform_1(%arg0: i32, %arg1: i32) -> (i32, i32) {
    %c0_i32 = arith.constant 0 : i32
    %c0_i32_0 = arith.constant 0 : i32
    return %arg0, %c0_i32 : i32, i32
  }
  func.func @transform_2(%arg0: i32, %arg1: i32) -> (i32, i32, i32) {
    %c0_i32 = arith.constant 0 : i32
    %c0_i32_0 = arith.constant 0 : i32
    return %arg0, %arg1, %c0_i32 : i32, i32, i32
  }
  func.func @transform_3(%arg0: i32, %arg1: i32) -> (i32, i32, i32) {
    %c0_i32 = arith.constant 0 : i32
    %c0_i32_0 = arith.constant 0 : i32
    return %arg0, %arg1, %c0_i32 : i32, i32, i32
  }
  func.func @transform_4(%arg0: i32, %arg1: i32) -> (i32, i32, i32) {
    %c0_i32 = arith.constant 0 : i32
    %c0_i32_0 = arith.constant 0 : i32
    %c0_i32_1 = arith.constant 0 : i32
    return %arg0, %c0_i32, %c0_i32_0 : i32, i32, i32
  }
}

</mosaic_0001>

<llo_original>
// kernel: plastic_hinge_counts.1
$region0: #{plastic_hinge_counts.1}
  #allocation0 [shape = 'u32[]', space=smem, size = 0x4, offset = 0x4, fixed_abs, tag = 'smem constant byte address 0x4 - core index']
  #allocation1 [shape = 'u32[144,128]{1,0:T(1,128)}', space=vmem, size = 0x12000, scoped, tag = 'internal scratch']
  #allocation2 [shape = 'f32[8,18]{1,0:T(8,128)}', space=vmem, size = 0x1000, scoped, tag = 'scratch operand']
  #allocation3 [shape = 'f32[8,18]{1,0:T(8,128)}', space=vmem, size = 0x1000, scoped, tag = 'scratch operand']
  #allocation4 [shape = 'f32[1]{0:T(128)S(6)}', space=smem, size = 0x200, scoped, tag = 'scoped memory for plastic_hinge_counts.1']
  %s0 = inlined_call_operand.<no memory space> [shape: f32[1], index: 0, kind: input, shape index: {}]
  %s1 = inlined_call_operand.vmem [shape: f32[10,18], index: 1, kind: input, shape index: {}]
  %s2 = inlined_call_operand.vmem [shape: f32[10,300,18], index: 2, kind: input, shape index: {}]
  %s3 = inlined_call_operand.vmem [shape: f32[10,300,18], index: 3, kind: input, shape index: {}]
  %s4 = inlined_call_operand.vmem [shape: s32[2,8,128], index: 4, kind: output, shape index: {}]
  %s5 = sld [smem:[#allocation0]]
  $region57: #{plastic_hinge_counts.1} parent=0
    _
  %s7 = ssub.s32 1, %s5
  %s8 = scalar_select 0, %s7, %s5
  %9 = sst [smem:[#allocation4]] %s0
  loop: start=0, step=1, limit=4
  $region2: #{plastic_hinge_counts.1} parent=0 // loop_pre_header
    _
  $region3: #{plastic_hinge_counts.1} parent=0 // loop_header
    %s11 = sphi 0, %s15
    %p12 = scmp.ge.s32.totalorder %s11, 4
    %s18 = sphi 0, %s30
    %s19 = sphi 0, %s26
    %s20 = sphi 0, %s18
    %s21 = sphi 0, %s19
    %s22 = sphi 0, %s20
    %s23 = sphi 0, %s21
    %s31 = sphi 0, %s31
    %s33 = sphi 0, %s31
    %s34 = sphi 0, %s33
    %s48 = sphi 0, %s34
    %s54 = sphi 0, %s56
    %s57 = sphi 0, %s54
    %s58 = sphi 0, %s57
    %s74 = sphi 0, %s58
    %s82 = sphi 0, %s84
    %s85 = sphi 0, %s82
    %s86 = sphi 0, %s85
    %s102 = sphi 0, %s86
    %s110 = sphi 0, %s112
    %s113 = sphi 0, %s110
    %s114 = sphi 0, %s113
    %s130 = sphi 0, %s114
    %s136 = sphi 0, %s138
    %s139 = sphi 0, %s136
    %s140 = sphi 0, %s139
    %s156 = sphi 0, %s140
  $region4: #{plastic_hinge_counts.1} parent=0 // loop_header_branch
    %14 = sbr.rel (%p12) target = $region8
  $region5: #{plastic_hinge_counts.1} parent=0 // loop_body
    %s16 = ssub.s32 %s11, 1
    %s17 = ssub.s32 %s11, 2
    %s24 = sadd.s32 1, %s19
    %p25 = scmp.ge.s32.totalorder %s24, 1
    %s26 = scalar_select %p25, 0, %s24
    %s27 = sadd.s32 1, %s18
    %s28 = scalar_select %p25, %s27, %s18
    %p29 = scmp.ge.s32.totalorder %s28, 2
    %s30 = scalar_select %p29, 0, %s28
    %s32 = sadd.s32 %s31, 1
    %p35 = scmp.eq.s32.totalorder %s11, 1
    %p36 = scmp.ne.s32.totalorder %s31, %s33
    %p37 = scmp.eq.s32.totalorder %s11, 0
    %p38 = por %p36, %p37
    %p39 = scmp.ne.s32.totalorder %s31, %s33
    %p40 = scmp.eq.s32.totalorder %s16, 1
    %p41 = por %p39, %p40
    %p42 = scmp.ne.s32.totalorder %s33, %s34
    %p43 = scmp.eq.s32.totalorder %s16, 0
    %p44 = por %p42, %p43
    %p45 = scmp.ne.s32.totalorder %s33, %s34
    %p46 = scmp.eq.s32.totalorder %s17, 1
    %p47 = por %p45, %p46
    %p49 = scmp.ne.s32.totalorder %s34, %s48
    %p50 = scmp.eq.s32.totalorder %s17, 0
    %p51 = por %p49, %p50
    %s52 = ssub.s32 %s18, %s30
    %p53 = scmp.eq.s32.totalorder %s52, 0
    %s55 = sadd.s32 %s54, 1
    %s56 = scalar_select %p53, %s54, %s55
    %p59 = pneg %p53
    %p60 = scmp.eq.s32.totalorder %s11, 1
    %p61 = por %p59, %p60
    %p62 = scmp.ne.s32.totalorder %s54, %s57
    %p63 = scmp.eq.s32.totalorder %s11, 0
    %p64 = por %p62, %p63
    %p65 = scmp.ne.s32.totalorder %s54, %s57
    %p66 = scmp.eq.s32.totalorder %s16, 1
    %p67 = por %p65, %p66
    %p68 = scmp.ne.s32.totalorder %s57, %s58
    %p69 = scmp.eq.s32.totalorder %s16, 0
    %p70 = por %p68, %p69
    %p71 = scmp.ne.s32.totalorder %s57, %s58
    %p72 = scmp.eq.s32.totalorder %s17, 1
    %p73 = por %p71, %p72
    %p75 = scmp.ne.s32.totalorder %s58, %s74
    %p76 = scmp.eq.s32.totalorder %s17, 0
    %p77 = por %p75, %p76
    %s78 = ssub.s32 %s18, %s30
    %s79 = ssub.s32 %s19, %s26
    %s80 = sor.u32 %s78, %s79
    %p81 = scmp.eq.s32.totalorder %s80, 0
    %s83 = sadd.s32 %s82, 1
    %s84 = scalar_select %p81, %s82, %s83
    %p87 = pneg %p81
    %p88 = scmp.eq.s32.totalorder %s11, 1
    %p89 = por %p87, %p88
    %p90 = scmp.ne.s32.totalorder %s82, %s85
    %p91 = scmp.eq.s32.totalorder %s11, 0
    %p92 = por %p90, %p91
    %p93 = scmp.ne.s32.totalorder %s82, %s85
    %p94 = scmp.eq.s32.totalorder %s16, 1
    %p95 = por %p93, %p94
    %p96 = scmp.ne.s32.totalorder %s85, %s86
    %p97 = scmp.eq.s32.totalorder %s16, 0
    %p98 = por %p96, %p97
    %p99 = scmp.ne.s32.totalorder %s85, %s86
    %p100 = scmp.eq.s32.totalorder %s17, 1
    %p101 = por %p99, %p100
    %p103 = scmp.ne.s32.totalorder %s86, %s102
    %p104 = scmp.eq.s32.totalorder %s17, 0
    %p105 = por %p103, %p104
    %s106 = ssub.s32 %s18, %s30
    %s107 = ssub.s32 %s19, %s26
    %s108 = sor.u32 %s106, %s107
    %p109 = scmp.eq.s32.totalorder %s108, 0
    %s111 = sadd.s32 %s110, 1
    %s112 = scalar_select %p109, %s110, %s111
    %p115 = pneg %p109
    %p116 = scmp.eq.s32.totalorder %s11, 1
    %p117 = por %p115, %p116
    %p118 = scmp.ne.s32.totalorder %s110, %s113
    %p119 = scmp.eq.s32.totalorder %s11, 0
    %p120 = por %p118, %p119
    %p121 = scmp.ne.s32.totalorder %s110, %s113
    %p122 = scmp.eq.s32.totalorder %s16, 1
    %p123 = por %p121, %p122
    %p124 = scmp.ne.s32.totalorder %s113, %s114
    %p125 = scmp.eq.s32.totalorder %s16, 0
    %p126 = por %p124, %p125
    %p127 = scmp.ne.s32.totalorder %s113, %s114
    %p128 = scmp.eq.s32.totalorder %s17, 1
    %p129 = por %p127, %p128
    %p131 = scmp.ne.s32.totalorder %s114, %s130
    %p132 = scmp.eq.s32.totalorder %s17, 0
    %p133 = por %p131, %p132
    %s134 = ssub.s32 %s18, %s30
    %p135 = scmp.eq.s32.totalorder %s134, 0
    %s137 = sadd.s32 %s136, 1
    %s138 = scalar_select %p135, %s136, %s137
    %p141 = pneg %p135
    %p142 = scmp.eq.s32.totalorder %s11, 1
    %p143 = por %p141, %p142
    %p144 = scmp.ne.s32.totalorder %s136, %s139
    %p145 = scmp.eq.s32.totalorder %s11, 0
    %p146 = por %p144, %p145
    %p147 = scmp.ne.s32.totalorder %s136, %s139
    %p148 = scmp.eq.s32.totalorder %s16, 1
    %p149 = por %p147, %p148
    %p150 = scmp.ne.s32.totalorder %s139, %s140
    %p151 = scmp.eq.s32.totalorder %s16, 0
    %p152 = por %p150, %p151
    %p153 = scmp.ne.s32.totalorder %s139, %s140
    %p154 = scmp.eq.s32.totalorder %s17, 1
    %p155 = por %p153, %p154
    %p157 = scmp.ne.s32.totalorder %s140, %s156
    %p158 = scmp.eq.s32.totalorder %s17, 0
    %p159 = por %p157, %p158
    %p160 = scmp.le.s32.totalorder 1, %s11
    %p161 = scmp.lt.s32.totalorder %s11, 3
    %p162 = pnand %p160, %p161
    %p163 = pneg %p162
    // Predicated region
    $region9: #{plastic_hinge_counts.1} parent=5 // pred_check
      _
    $region10: #{plastic_hinge_counts.1} parent=5 // pred_check_branch
      %165 = sbr.rel (%p162) target = $region12
    $region11: #{plastic_hinge_counts.1} parent=5 // pred_region
      %s166 = ssub.s32 %s11, 1
      // Predicated region
      $region13: #{plastic_hinge_counts.1} parent=11 // pred_check
        %p167 = pneg %p44
      $region14: #{plastic_hinge_counts.1} parent=11 // pred_check_branch
        %169 = sbr.rel (%p167) target = $region16
      $region15: #{plastic_hinge_counts.1} parent=11 // pred_region
        _
      $region16: #{plastic_hinge_counts.1} parent=11 // pred_fallthru
        _
    $region12: #{plastic_hinge_counts.1} parent=5 // pred_fallthru
      _
    %p170 = scmp.lt.s32.totalorder %s11, 2
    // Predicated region
    $region17: #{plastic_hinge_counts.1} parent=5 // pred_check
      %p171 = pneg %p170
    $region18: #{plastic_hinge_counts.1} parent=5 // pred_check_branch
      %173 = sbr.rel (%p171) target = $region20
    $region19: #{plastic_hinge_counts.1} parent=5 // pred_region
      // Predicated region
      $region21: #{plastic_hinge_counts.1} parent=19 // pred_check
        %p174 = pneg %p64
      $region22: #{plastic_hinge_counts.1} parent=19 // pred_check_branch
        %176 = sbr.rel (%p174) target = $region24
      $region23: #{plastic_hinge_counts.1} parent=19 // pred_region
        %p177 = scmp.lt.s32.totalorder %s18, 1
        %s178 = scalar_select %p177, %s18, 1
        %s179 = smul.addr %s178, 8
        %s180 = scalar_lea.vmem %s1, %s179
      $region24: #{plastic_hinge_counts.1} parent=19 // pred_fallthru
        _
      // Predicated region
      $region25: #{plastic_hinge_counts.1} parent=19 // pred_check
        %p181 = pneg %p92
      $region26: #{plastic_hinge_counts.1} parent=19 // pred_check_branch
        %183 = sbr.rel (%p181) target = $region28
      $region27: #{plastic_hinge_counts.1} parent=19 // pred_region
        %s184 = smul.u32 8, %s18
        %s185 = smul.u32 38, %s19
        %s186 = ssub.s32 10, %s184
        %p187 = scmp.lt.s32.totalorder %s186, 8
        %s188 = scalar_select %p187, %s186, 8
        %s189 = smul.u32 128, %s188
        %s190 = smul.u32 %s189, 38
        %p191 = scmp.lt.s32.totalorder %s184, 9
        %s192 = scalar_select %p191, %s184, 9
        %p193 = scmp.lt.s32.totalorder %s185, 37
        %s194 = scalar_select %p193, %s185, 37
        %s195 = smul.addr %s192, 38
        %s196 = sadd.s32 %s194, %s195
        %s197 = smul.addr %s196, 8
        %s198 = scalar_lea.vmem %s2, %s197
        %s199 = smul.u32 8, %s18
        %s200 = smul.u32 38, %s19
        %s201 = ssub.s32 10, %s199
        %p202 = scmp.lt.s32.totalorder %s201, 8
        %s203 = scalar_select %p202, %s201, 8
        %s204 = smul.u32 128, %s203
        %s205 = smul.u32 %s204, 38
      $region28: #{plastic_hinge_counts.1} parent=19 // pred_fallthru
        _
      // Predicated region
      $region29: #{plastic_hinge_counts.1} parent=19 // pred_check
        %p206 = pneg %p120
      $region30: #{plastic_hinge_counts.1} parent=19 // pred_check_branch
        %208 = sbr.rel (%p206) target = $region32
      $region31: #{plastic_hinge_counts.1} parent=19 // pred_region
        %s209 = smul.u32 8, %s18
        %s210 = smul.u32 38, %s19
        %s211 = ssub.s32 10, %s209
        %p212 = scmp.lt.s32.totalorder %s211, 8
        %s213 = scalar_select %p212, %s211, 8
        %s214 = smul.u32 128, %s213
        %s215 = smul.u32 %s214, 38
        %p216 = scmp.lt.s32.totalorder %s209, 9
        %s217 = scalar_select %p216, %s209, 9
        %p218 = scmp.lt.s32.totalorder %s210, 37
        %s219 = scalar_select %p218, %s210, 37
        %s220 = smul.addr %s217, 38
        %s221 = sadd.s32 %s219, %s220
        %s222 = smul.addr %s221, 8
        %s223 = scalar_lea.vmem %s3, %s222
        %s224 = smul.u32 8, %s18
        %s225 = smul.u32 38, %s19
        %s226 = ssub.s32 10, %s224
        %p227 = scmp.lt.s32.totalorder %s226, 8
        %s228 = scalar_select %p227, %s226, 8
        %s229 = smul.u32 128, %s228
        %s230 = smul.u32 %s229, 38
      $region32: #{plastic_hinge_counts.1} parent=19 // pred_fallthru
        _
    $region20: #{plastic_hinge_counts.1} parent=5 // pred_fallthru
      _
    %p231 = scmp.le.s32.totalorder 1, %s11
    %p232 = scmp.lt.s32.totalorder %s11, 3
    %p233 = pnand %p231, %p232
    %p234 = pneg %p233
    // Predicated region
    $region33: #{plastic_hinge_counts.1} parent=5 // pred_check
      _
    $region34: #{plastic_hinge_counts.1} parent=5 // pred_check_branch
      %236 = sbr.rel (%p233) target = $region36
    $region35: #{plastic_hinge_counts.1} parent=5 // pred_region
      %s237 = ssub.s32 %s11, 1
      %p238 = pneg %p44
      %p239 = pneg %p41
      %p240 = scmp.lt.s32.totalorder %s20, 1
      %s241 = scalar_select %p240, %s20, 1
      %s242 = smul.addr %s241, 8
      %s243 = scalar_lea.vmem %s1, %s242
      %p244 = pneg %p70
      %p245 = pneg %p67
      %s246 = smul.u32 8, %s20
      %s247 = smul.u32 38, %s21
      %s248 = ssub.s32 10, %s246
      %p249 = scmp.lt.s32.totalorder %s248, 8
      %s250 = scalar_select %p249, %s248, 8
      %s251 = smul.u32 128, %s250
      %s252 = smul.u32 %s251, 38
      %p253 = scmp.lt.s32.totalorder %s246, 9
      %s254 = scalar_select %p253, %s246, 9
      %p255 = scmp.lt.s32.totalorder %s247, 37
      %s256 = scalar_select %p255, %s247, 37
      %s257 = smul.addr %s254, 38
      %s258 = sadd.s32 %s256, %s257
      %s259 = smul.addr %s258, 8
      %s260 = scalar_lea.vmem %s2, %s259
      %p261 = pneg %p98
      %p262 = pneg %p95
      %s263 = smul.u32 8, %s20
      %s264 = smul.u32 38, %s21
      %s265 = ssub.s32 10, %s263
      %p266 = scmp.lt.s32.totalorder %s265, 8
      %s267 = scalar_select %p266, %s265, 8
      %s268 = smul.u32 128, %s267
      %s269 = smul.u32 %s268, 38
      %p270 = scmp.lt.s32.totalorder %s263, 9
      %s271 = scalar_select %p270, %s263, 9
      %p272 = scmp.lt.s32.totalorder %s264, 37
      %s273 = scalar_select %p272, %s264, 37
      %s274 = smul.addr %s271, 38
      %s275 = sadd.s32 %s273, %s274
      %s276 = smul.addr %s275, 8
      %s277 = scalar_lea.vmem %s3, %s276
      %p278 = pneg %p126
      %p279 = pneg %p123
      %p280 = pneg %p152
      %p281 = pneg %p149
      %p282 = scmp.lt.s32.totalorder %s20, 1
      %s283 = scalar_select %p282, %s20, 1
      %s284 = smul.addr %s283, 8
      %s285 = scalar_lea.vmem %s4, %s284
      %p286 = scmp.lt.s32.totalorder %s20, 1
      %s287 = scalar_select %p286, %s20, 1
      %s288 = smul.addr %s287, 8
      %s289 = scalar_lea.vmem %s1, %s288
      %s290 = smul.u32 8, %s20
      %s291 = smul.u32 38, %s21
      %s292 = ssub.s32 10, %s290
      %p293 = scmp.lt.s32.totalorder %s292, 8
      %s294 = scalar_select %p293, %s292, 8
      %s295 = smul.u32 128, %s294
      %s296 = smul.u32 %s295, 38
      %p297 = scmp.lt.s32.totalorder %s290, 9
      %s298 = scalar_select %p297, %s290, 9
      %p299 = scmp.lt.s32.totalorder %s291, 37
      %s300 = scalar_select %p299, %s291, 37
      %s301 = smul.addr %s298, 38
      %s302 = sadd.s32 %s300, %s301
      %s303 = smul.addr %s302, 8
      %s304 = scalar_lea.vmem %s2, %s303
      %s305 = smul.u32 8, %s20
      %s306 = smul.u32 38, %s21
      %s307 = ssub.s32 10, %s305
      %p308 = scmp.lt.s32.totalorder %s307, 8
      %s309 = scalar_select %p308, %s307, 8
      %s310 = smul.u32 128, %s309
      %s311 = smul.u32 %s310, 38
      %s312 = smul.u32 8, %s20
      %s313 = smul.u32 38, %s21
      %s314 = ssub.s32 10, %s312
      %p315 = scmp.lt.s32.totalorder %s314, 8
      %s316 = scalar_select %p315, %s314, 8
      %s317 = smul.u32 128, %s316
      %s318 = smul.u32 %s317, 38
      %p319 = scmp.lt.s32.totalorder %s312, 9
      %s320 = scalar_select %p319, %s312, 9
      %p321 = scmp.lt.s32.totalorder %s313, 37
      %s322 = scalar_select %p321, %s313, 37
      %s323 = smul.addr %s320, 38
      %s324 = sadd.s32 %s322, %s323
      %s325 = smul.addr %s324, 8
      %s326 = scalar_lea.vmem %s3, %s325
      %s327 = smul.u32 8, %s20
      %s328 = smul.u32 38, %s21
      %s329 = ssub.s32 10, %s327
      %p330 = scmp.lt.s32.totalorder %s329, 8
      %s331 = scalar_select %p330, %s329, 8
      %s332 = smul.u32 128, %s331
      %s333 = smul.u32 %s332, 38
      %p334 = scmp.lt.s32.totalorder %s20, 1
      %s335 = scalar_select %p334, %s20, 1
      %s336 = smul.addr %s335, 8
      %s337 = scalar_lea.vmem %s4, %s336
      %p338 = scmp.eq.s32.totalorder %s21, 0
      // Predicated region
      $region37: #{plastic_hinge_counts.1} parent=35 // pred_check
        %p339 = pneg %p338
      $region38: #{plastic_hinge_counts.1} parent=35 // pred_check_branch
        %341 = sbr.rel (%p339) target = $region40
      $region39: #{plastic_hinge_counts.1} parent=35 // pred_region
        %vm342 = vcmask 146432
        %343 = vst.msk [vmem:[#allocation2] sm:$0xff] %vm342, 0.0
        %344 = vst.msk [vmem:[#allocation3] sm:$0xff] %vm342, 0.0
      $region40: #{plastic_hinge_counts.1} parent=35 // pred_fallthru
        _
      %v345 = vld [vmem:[%s304] sm:$0xff]
      %v346 = vld [vmem:[%s304 + $0x8] sm:$0xff]
      %v347 = vld [vmem:[%s304 + $0x10] sm:$0xff]
      %v348 = vld [vmem:[%s304 + $0x18] sm:$0xff]
      %v349 = vld [vmem:[%s304 + $0x20] sm:$0xff]
      %v350 = vld [vmem:[%s304 + $0x28] sm:$0xff]
      %v351 = vld [vmem:[%s304 + $0x30] sm:$0xff]
      %v352 = vld [vmem:[%s304 + $0x38] sm:$0xff]
      %v353 = vld [vmem:[%s304 + $0x40] sm:$0xff]
      %v354 = vld [vmem:[%s304 + $0x48] sm:$0xff]
      %v355 = vld [vmem:[%s304 + $0x50] sm:$0xff]
      %v356 = vld [vmem:[%s304 + $0x58] sm:$0xff]
      %v357 = vld [vmem:[%s304 + $0x60] sm:$0xff]
      %v358 = vld [vmem:[%s304 + $0x68] sm:$0xff]
      %v359 = vld [vmem:[%s304 + $0x70] sm:$0xff]
      %v360 = vld [vmem:[%s304 + $0x78] sm:$0xff]
      %v361 = vld [vmem:[%s304 + $0x80] sm:$0xff]
      %v362 = vld [vmem:[%s304 + $0x88] sm:$0xff]
      %v363 = vld [vmem:[%s304 + $0x90] sm:$0xff]
      %v364 = vld [vmem:[%s304 + $0x98] sm:$0xff]
      %v365 = vld [vmem:[%s304 + $0xa0] sm:$0xff]
      %v366 = vld [vmem:[%s304 + $0xa8] sm:$0xff]
      %v367 = vld [vmem:[%s304 + $0xb0] sm:$0xff]
      %v368 = vld [vmem:[%s304 + $0xb8] sm:$0xff]
      %v369 = vld [vmem:[%s304 + $0xc0] sm:$0xff]
      %v370 = vld [vmem:[%s304 + $0xc8] sm:$0xff]
      %v371 = vld [vmem:[%s304 + $0xd0] sm:$0xff]
      %v372 = vld [vmem:[%s304 + $0xd8] sm:$0xff]
      %v373 = vld [vmem:[%s304 + $0xe0] sm:$0xff]
      %v374 = vld [vmem:[%s304 + $0xe8] sm:$0xff]
      %v375 = vld [vmem:[%s304 + $0xf0] sm:$0xff]
      %v376 = vld [vmem:[%s304 + $0xf8] sm:$0xff]
      %v377 = vld [vmem:[%s304 + $0x100] sm:$0xff]
      %v378 = vld [vmem:[%s304 + $0x108] sm:$0xff]
      %v379 = vld [vmem:[%s304 + $0x110] sm:$0xff]
      %v380 = vld [vmem:[%s304 + $0x118] sm:$0xff]
      %v381 = vld [vmem:[%s304 + $0x120] sm:$0xff]
      %v382 = vld [vmem:[%s304 + $0x128] sm:$0xf]
      %v383 = vld [vmem:[%s304 + $0x130] sm:$0xff]
      %v384 = vld [vmem:[%s304 + $0x138] sm:$0xff]
      %v385 = vld [vmem:[%s304 + $0x140] sm:$0xff]
      %v386 = vld [vmem:[%s304 + $0x148] sm:$0xff]
      %v387 = vld [vmem:[%s304 + $0x150] sm:$0xff]
      %v388 = vld [vmem:[%s304 + $0x158] sm:$0xff]
      %v389 = vld [vmem:[%s304 + $0x160] sm:$0xff]
      %v390 = vld [vmem:[%s304 + $0x168] sm:$0xff]
      %v391 = vld [vmem:[%s304 + $0x170] sm:$0xff]
      %v392 = vld [vmem:[%s304 + $0x178] sm:$0xff]
      %v393 = vld [vmem:[%s304 + $0x180] sm:$0xff]
      %v394 = vld [vmem:[%s304 + $0x188] sm:$0xff]
      %v395 = vld [vmem:[%s304 + $0x190] sm:$0xff]
      %v396 = vld [vmem:[%s304 + $0x198] sm:$0xff]
      %v397 = vld [vmem:[%s304 + $0x1a0] sm:$0xff]
      %v398 = vld [vmem:[%s304 + $0x1a8] sm:$0xff]
      %v399 = vld [vmem:[%s304 + $0x1b0] sm:$0xff]
      %v400 = vld [vmem:[%s304 + $0x1b8] sm:$0xff]
      %v401 = vld [vmem:[%s304 + $0x1c0] sm:$0xff]
      %v402 = vld [vmem:[%s304 + $0x1c8] sm:$0xff]
      %v403 = vld [vmem:[%s304 + $0x1d0] sm:$0xff]
      %v404 = vld [vmem:[%s304 + $0x1d8] sm:$0xff]
      %v405 = vld [vmem:[%s304 + $0x1e0] sm:$0xff]
      %v406 = vld [vmem:[%s304 + $0x1e8] sm:$0xff]
      %v407 = vld [vmem:[%s304 + $0x1f0] sm:$0xff]
      %v408 = vld [vmem:[%s304 + $0x1f8] sm:$0xff]
      %v409 = vld [vmem:[%s304 + $0x200] sm:$0xff]
      %v410 = vld [vmem:[%s304 + $0x208] sm:$0xff]
      %v411 = vld [vmem:[%s304 + $0x210] sm:$0xff]
      %v412 = vld [vmem:[%s304 + $0x218] sm:$0xff]
      %v413 = vld [vmem:[%s304 + $0x220] sm:$0xff]
      %v414 = vld [vmem:[%s304 + $0x228] sm:$0xff]
      %v415 = vld [vmem:[%s304 + $0x230] sm:$0xff]
      %v416 = vld [vmem:[%s304 + $0x238] sm:$0xff]
      %v417 = vld [vmem:[%s304 + $0x240] sm:$0xff]
      %v418 = vld [vmem:[%s304 + $0x248] sm:$0xff]
      %v419 = vld [vmem:[%s304 + $0x250] sm:$0xff]
      %v420 = vld [vmem:[%s304 + $0x258] sm:$0xf]
      %v421 = vld [vmem:[%s304 + $0x260] sm:$0xff]
      %v422 = vld [vmem:[%s304 + $0x268] sm:$0xff]
      %v423 = vld [vmem:[%s304 + $0x270] sm:$0xff]
      %v424 = vld [vmem:[%s304 + $0x278] sm:$0xff]
      %v425 = vld [vmem:[%s304 + $0x280] sm:$0xff]
      %v426 = vld [vmem:[%s304 + $0x288] sm:$0xff]
      %v427 = vld [vmem:[%s304 + $0x290] sm:$0xff]
      %v428 = vld [vmem:[%s304 + $0x298] sm:$0xff]
      %v429 = vld [vmem:[%s304 + $0x2a0] sm:$0xff]
      %v430 = vld [vmem:[%s304 + $0x2a8] sm:$0xff]
      %v431 = vld [vmem:[%s304 + $0x2b0] sm:$0xff]
      %v432 = vld [vmem:[%s304 + $0x2b8] sm:$0xff]
      %v433 = vld [vmem:[%s304 + $0x2c0] sm:$0xff]
      %v434 = vld [vmem:[%s304 + $0x2c8] sm:$0xff]
      %v435 = vld [vmem:[%s304 + $0x2d0] sm:$0xff]
      %v436 = vld [vmem:[%s304 + $0x2d8] sm:$0xff]
      %v437 = vld [vmem:[%s304 + $0x2e0] sm:$0xff]
      %v438 = vld [vmem:[%s304 + $0x2e8] sm:$0xff]
      %v439 = vld [vmem:[%s304 + $0x2f0] sm:$0xff]
      %v440 = vld [vmem:[%s304 + $0x2f8] sm:$0xff]
      %v441 = vld [vmem:[%s304 + $0x300] sm:$0xff]
      %v442 = vld [vmem:[%s304 + $0x308] sm:$0xff]
      %v443 = vld [vmem:[%s304 + $0x310] sm:$0xff]
      %v444 = vld [vmem:[%s304 + $0x318] sm:$0xff]
      %v445 = vld [vmem:[%s304 + $0x320] sm:$0xff]
      %v446 = vld [vmem:[%s304 + $0x328] sm:$0xff]
      %v447 = vld [vmem:[%s304 + $0x330] sm:$0xff]
      %v448 = vld [vmem:[%s304 + $0x338] sm:$0xff]
      %v449 = vld [vmem:[%s304 + $0x340] sm:$0xff]
      %v450 = vld [vmem:[%s304 + $0x348] sm:$0xff]
      %v451 = vld [vmem:[%s304 + $0x350] sm:$0xff]
      %v452 = vld [vmem:[%s304 + $0x358] sm:$0xff]
      %v453 = vld [vmem:[%s304 + $0x360] sm:$0xff]
      %v454 = vld [vmem:[%s304 + $0x368] sm:$0xff]
      %v455 = vld [vmem:[%s304 + $0x370] sm:$0xff]
      %v456 = vld [vmem:[%s304 + $0x378] sm:$0xff]
      %v457 = vld [vmem:[%s304 + $0x380] sm:$0xff]
      %v458 = vld [vmem:[%s304 + $0x388] sm:$0xf]
      %v459 = vld [vmem:[%s304 + $0x390] sm:$0xff]
      %v460 = vld [vmem:[%s304 + $0x398] sm:$0xff]
      %v461 = vld [vmem:[%s304 + $0x3a0] sm:$0xff]
      %v462 = vld [vmem:[%s304 + $0x3a8] sm:$0xff]
      %v463 = vld [vmem:[%s304 + $0x3b0] sm:$0xff]
      %v464 = vld [vmem:[%s304 + $0x3b8] sm:$0xff]
      %v465 = vld [vmem:[%s304 + $0x3c0] sm:$0xff]
      %v466 = vld [vmem:[%s304 + $0x3c8] sm:$0xff]
      %v467 = vld [vmem:[%s304 + $0x3d0] sm:$0xff]
      %v468 = vld [vmem:[%s304 + $0x3d8] sm:$0xff]
      %v469 = vld [vmem:[%s304 + $0x3e0] sm:$0xff]
      %v470 = vld [vmem:[%s304 + $0x3e8] sm:$0xff]
      %v471 = vld [vmem:[%s304 + $0x3f0] sm:$0xff]
      %v472 = vld [vmem:[%s304 + $0x3f8] sm:$0xff]
      %v473 = vld [vmem:[%s304 + $0x400] sm:$0xff]
      %v474 = vld [vmem:[%s304 + $0x408] sm:$0xff]
      %v475 = vld [vmem:[%s304 + $0x410] sm:$0xff]
      %v476 = vld [vmem:[%s304 + $0x418] sm:$0xff]
      %v477 = vld [vmem:[%s304 + $0x420] sm:$0xff]
      %v478 = vld [vmem:[%s304 + $0x428] sm:$0xff]
      %v479 = vld [vmem:[%s304 + $0x430] sm:$0xff]
      %v480 = vld [vmem:[%s304 + $0x438] sm:$0xff]
      %v481 = vld [vmem:[%s304 + $0x440] sm:$0xff]
      %v482 = vld [vmem:[%s304 + $0x448] sm:$0xff]
      %v483 = vld [vmem:[%s304 + $0x450] sm:$0xff]
      %v484 = vld [vmem:[%s304 + $0x458] sm:$0xff]
      %v485 = vld [vmem:[%s304 + $0x460] sm:$0xff]
      %v486 = vld [vmem:[%s304 + $0x468] sm:$0xff]
      %v487 = vld [vmem:[%s304 + $0x470] sm:$0xff]
      %v488 = vld [vmem:[%s304 + $0x478] sm:$0xff]
      %v489 = vld [vmem:[%s304 + $0x480] sm:$0xff]
      %v490 = vld [vmem:[%s304 + $0x488] sm:$0xff]
      %v491 = vld [vmem:[%s304 + $0x490] sm:$0xff]
      %v492 = vld [vmem:[%s304 + $0x498] sm:$0xff]
      %v493 = vld [vmem:[%s304 + $0x4a0] sm:$0xff]
      %v494 = vld [vmem:[%s304 + $0x4a8] sm:$0xff]
      %v495 = vld [vmem:[%s304 + $0x4b0] sm:$0xff]
      %v496 = vld [vmem:[%s304 + $0x4b8] sm:$0xf]
      %v497 = vld [vmem:[%s304 + $0x4c0] sm:$0xff]
      %v498 = vld [vmem:[%s304 + $0x4c8] sm:$0xff]
      %v499 = vld [vmem:[%s304 + $0x4d0] sm:$0xff]
      %v500 = vld [vmem:[%s304 + $0x4d8] sm:$0xff]
      %v501 = vld [vmem:[%s304 + $0x4e0] sm:$0xff]
      %v502 = vld [vmem:[%s304 + $0x4e8] sm:$0xff]
      %v503 = vld [vmem:[%s304 + $0x4f0] sm:$0xff]
      %v504 = vld [vmem:[%s304 + $0x4f8] sm:$0xff]
      %v505 = vld [vmem:[%s304 + $0x500] sm:$0xff]
      %v506 = vld [vmem:[%s304 + $0x508] sm:$0xff]
      %v507 = vld [vmem:[%s304 + $0x510] sm:$0xff]
      %v508 = vld [vmem:[%s304 + $0x518] sm:$0xff]
      %v509 = vld [vmem:[%s304 + $0x520] sm:$0xff]
      %v510 = vld [vmem:[%s304 + $0x528] sm:$0xff]
      %v511 = vld [vmem:[%s304 + $0x530] sm:$0xff]
      %v512 = vld [vmem:[%s304 + $0x538] sm:$0xff]
      %v513 = vld [vmem:[%s304 + $0x540] sm:$0xff]
      %v514 = vld [vmem:[%s304 + $0x548] sm:$0xff]
      %v515 = vld [vmem:[%s304 + $0x550] sm:$0xff]
      %v516 = vld [vmem:[%s304 + $0x558] sm:$0xff]
      %v517 = vld [vmem:[%s304 + $0x560] sm:$0xff]
      %v518 = vld [vmem:[%s304 + $0x568] sm:$0xff]
      %v519 = vld [vmem:[%s304 + $0x570] sm:$0xff]
      %v520 = vld [vmem:[%s304 + $0x578] sm:$0xff]
      %v521 = vld [vmem:[%s304 + $0x580] sm:$0xff]
      %v522 = vld [vmem:[%s304 + $0x588] sm:$0xff]
      %v523 = vld [vmem:[%s304 + $0x590] sm:$0xff]
      %v524 = vld [vmem:[%s304 + $0x598] sm:$0xff]
      %v525 = vld [vmem:[%s304 + $0x5a0] sm:$0xff]
      %v526 = vld [vmem:[%s304 + $0x5a8] sm:$0xff]
      %v527 = vld [vmem:[%s304 + $0x5b0] sm:$0xff]
      %v528 = vld [vmem:[%s304 + $0x5b8] sm:$0xff]
      %v529 = vld [vmem:[%s304 + $0x5c0] sm:$0xff]
      %v530 = vld [vmem:[%s304 + $0x5c8] sm:$0xff]
      %v531 = vld [vmem:[%s304 + $0x5d0] sm:$0xff]
      %v532 = vld [vmem:[%s304 + $0x5d8] sm:$0xff]
      %v533 = vld [vmem:[%s304 + $0x5e0] sm:$0xff]
      %v534 = vld [vmem:[%s304 + $0x5e8] sm:$0xf]
      %v535 = vld [vmem:[%s304 + $0x5f0] sm:$0xff]
      %v536 = vld [vmem:[%s304 + $0x5f8] sm:$0xff]
      %v537 = vld [vmem:[%s304 + $0x600] sm:$0xff]
      %v538 = vld [vmem:[%s304 + $0x608] sm:$0xff]
      %v539 = vld [vmem:[%s304 + $0x610] sm:$0xff]
      %v540 = vld [vmem:[%s304 + $0x618] sm:$0xff]
      %v541 = vld [vmem:[%s304 + $0x620] sm:$0xff]
      %v542 = vld [vmem:[%s304 + $0x628] sm:$0xff]
      %v543 = vld [vmem:[%s304 + $0x630] sm:$0xff]
      %v544 = vld [vmem:[%s304 + $0x638] sm:$0xff]
      %v545 = vld [vmem:[%s304 + $0x640] sm:$0xff]
      %v546 = vld [vmem:[%s304 + $0x648] sm:$0xff]
      %v547 = vld [vmem:[%s304 + $0x650] sm:$0xff]
      %v548 = vld [vmem:[%s304 + $0x658] sm:$0xff]
      %v549 = vld [vmem:[%s304 + $0x660] sm:$0xff]
      %v550 = vld [vmem:[%s304 + $0x668] sm:$0xff]
      %v551 = vld [vmem:[%s304 + $0x670] sm:$0xff]
      %v552 = vld [vmem:[%s304 + $0x678] sm:$0xff]
      %v553 = vld [vmem:[%s304 + $0x680] sm:$0xff]
      %v554 = vld [vmem:[%s304 + $0x688] sm:$0xff]
      %v555 = vld [vmem:[%s304 + $0x690] sm:$0xff]
      %v556 = vld [vmem:[%s304 + $0x698] sm:$0xff]
      %v557 = vld [vmem:[%s304 + $0x6a0] sm:$0xff]
      %v558 = vld [vmem:[%s304 + $0x6a8] sm:$0xff]
      %v559 = vld [vmem:[%s304 + $0x6b0] sm:$0xff]
      %v560 = vld [vmem:[%s304 + $0x6b8] sm:$0xff]
      %v561 = vld [vmem:[%s304 + $0x6c0] sm:$0xff]
      %v562 = vld [vmem:[%s304 + $0x6c8] sm:$0xff]
      %v563 = vld [vmem:[%s304 + $0x6d0] sm:$0xff]
      %v564 = vld [vmem:[%s304 + $0x6d8] sm:$0xff]
      %v565 = vld [vmem:[%s304 + $0x6e0] sm:$0xff]
      %v566 = vld [vmem:[%s304 + $0x6e8] sm:$0xff]
      %v567 = vld [vmem:[%s304 + $0x6f0] sm:$0xff]
      %v568 = vld [vmem:[%s304 + $0x6f8] sm:$0xff]
      %v569 = vld [vmem:[%s304 + $0x700] sm:$0xff]
      %v570 = vld [vmem:[%s304 + $0x708] sm:$0xff]
      %v571 = vld [vmem:[%s304 + $0x710] sm:$0xff]
      %v572 = vld [vmem:[%s304 + $0x718] sm:$0xf]
      %v573 = vld [vmem:[%s304 + $0x720] sm:$0xff]
      %v574 = vld [vmem:[%s304 + $0x728] sm:$0xff]
      %v575 = vld [vmem:[%s304 + $0x730] sm:$0xff]
      %v576 = vld [vmem:[%s304 + $0x738] sm:$0xff]
      %v577 = vld [vmem:[%s304 + $0x740] sm:$0xff]
      %v578 = vld [vmem:[%s304 + $0x748] sm:$0xff]
      %v579 = vld [vmem:[%s304 + $0x750] sm:$0xff]
      %v580 = vld [vmem:[%s304 + $0x758] sm:$0xff]
      %v581 = vld [vmem:[%s304 + $0x760] sm:$0xff]
      %v582 = vld [vmem:[%s304 + $0x768] sm:$0xff]
      %v583 = vld [vmem:[%s304 + $0x770] sm:$0xff]
      %v584 = vld [vmem:[%s304 + $0x778] sm:$0xff]
      %v585 = vld [vmem:[%s304 + $0x780] sm:$0xff]
      %v586 = vld [vmem:[%s304 + $0x788] sm:$0xff]
      %v587 = vld [vmem:[%s304 + $0x790] sm:$0xff]
      %v588 = vld [vmem:[%s304 + $0x798] sm:$0xff]
      %v589 = vld [vmem:[%s304 + $0x7a0] sm:$0xff]
      %v590 = vld [vmem:[%s304 + $0x7a8] sm:$0xff]
      %v591 = vld [vmem:[%s304 + $0x7b0] sm:$0xff]
      %v592 = vld [vmem:[%s304 + $0x7b8] sm:$0xff]
      %v593 = vld [vmem:[%s304 + $0x7c0] sm:$0xff]
      %v594 = vld [vmem:[%s304 + $0x7c8] sm:$0xff]
      %v595 = vld [vmem:[%s304 + $0x7d0] sm:$0xff]
      %v596 = vld [vmem:[%s304 + $0x7d8] sm:$0xff]
      %v597 = vld [vmem:[%s304 + $0x7e0] sm:$0xff]
      %v598 = vld [vmem:[%s304 + $0x7e8] sm:$0xff]
      %v599 = vld [vmem:[%s304 + $0x7f0] sm:$0xff]
      %v600 = vld [vmem:[%s304 + $0x7f8] sm:$0xff]
      %v601 = vld [vmem:[%s304 + $0x800] sm:$0xff]
      %v602 = vld [vmem:[%s304 + $0x808] sm:$0xff]
      %v603 = vld [vmem:[%s304 + $0x810] sm:$0xff]
      %v604 = vld [vmem:[%s304 + $0x818] sm:$0xff]
      %v605 = vld [vmem:[%s304 + $0x820] sm:$0xff]
      %v606 = vld [vmem:[%s304 + $0x828] sm:$0xff]
      %v607 = vld [vmem:[%s304 + $0x830] sm:$0xff]
      %v608 = vld [vmem:[%s304 + $0x838] sm:$0xff]
      %v609 = vld [vmem:[%s304 + $0x840] sm:$0xff]
      %v610 = vld [vmem:[%s304 + $0x848] sm:$0xf]
      %v611 = vld [vmem:[%s304 + $0x850] sm:$0xff]
      %v612 = vld [vmem:[%s304 + $0x858] sm:$0xff]
      %v613 = vld [vmem:[%s304 + $0x860] sm:$0xff]
      %v614 = vld [vmem:[%s304 + $0x868] sm:$0xff]
      %v615 = vld [vmem:[%s304 + $0x870] sm:$0xff]
      %v616 = vld [vmem:[%s304 + $0x878] sm:$0xff]
      %v617 = vld [vmem:[%s304 + $0x880] sm:$0xff]
      %v618 = vld [vmem:[%s304 + $0x888] sm:$0xff]
      %v619 = vld [vmem:[%s304 + $0x890] sm:$0xff]
      %v620 = vld [vmem:[%s304 + $0x898] sm:$0xff]
      %v621 = vld [vmem:[%s304 + $0x8a0] sm:$0xff]
      %v622 = vld [vmem:[%s304 + $0x8a8] sm:$0xff]
      %v623 = vld [vmem:[%s304 + $0x8b0] sm:$0xff]
      %v624 = vld [vmem:[%s304 + $0x8b8] sm:$0xff]
      %v625 = vld [vmem:[%s304 + $0x8c0] sm:$0xff]
      %v626 = vld [vmem:[%s304 + $0x8c8] sm:$0xff]
      %v627 = vld [vmem:[%s304 + $0x8d0] sm:$0xff]
      %v628 = vld [vmem:[%s304 + $0x8d8] sm:$0xff]
      %v629 = vld [vmem:[%s304 + $0x8e0] sm:$0xff]
      %v630 = vld [vmem:[%s304 + $0x8e8] sm:$0xff]
      %v631 = vld [vmem:[%s304 + $0x8f0] sm:$0xff]
      %v632 = vld [vmem:[%s304 + $0x8f8] sm:$0xff]
      %v633 = vld [vmem:[%s304 + $0x900] sm:$0xff]
      %v634 = vld [vmem:[%s304 + $0x908] sm:$0xff]
      %v635 = vld [vmem:[%s304 + $0x910] sm:$0xff]
      %v636 = vld [vmem:[%s304 + $0x918] sm:$0xff]
      %v637 = vld [vmem:[%s304 + $0x920] sm:$0xff]
      %v638 = vld [vmem:[%s304 + $0x928] sm:$0xff]
      %v639 = vld [vmem:[%s304 + $0x930] sm:$0xff]
      %v640 = vld [vmem:[%s304 + $0x938] sm:$0xff]
      %v641 = vld [vmem:[%s304 + $0x940] sm:$0xff]
      %v642 = vld [vmem:[%s304 + $0x948] sm:$0xff]
      %v643 = vld [vmem:[%s304 + $0x950] sm:$0xff]
      %v644 = vld [vmem:[%s304 + $0x958] sm:$0xff]
      %v645 = vld [vmem:[%s304 + $0x960] sm:$0xff]
      %v646 = vld [vmem:[%s304 + $0x968] sm:$0xff]
      %v647 = vld [vmem:[%s304 + $0x970] sm:$0xff]
      %v648 = vld [vmem:[%s304 + $0x978] sm:$0xf]
      %v649 = vand.u32 2147483647, %v345
      %v650 = vand.u32 2147483647, %v346
      %v651 = vand.u32 2147483647, %v347
      %v652 = vand.u32 2147483647, %v348
      %v653 = vand.u32 2147483647, %v349
      %v654 = vand.u32 2147483647, %v350
      %v655 = vand.u32 2147483647, %v351
      %v656 = vand.u32 2147483647, %v352
      %v657 = vand.u32 2147483647, %v353
      %v658 = vand.u32 2147483647, %v354
      %v659 = vand.u32 2147483647, %v355
      %v660 = vand.u32 2147483647, %v356
      %v661 = vand.u32 2147483647, %v357
      %v662 = vand.u32 2147483647, %v358
      %v663 = vand.u32 2147483647, %v359
      %v664 = vand.u32 2147483647, %v360
      %v665 = vand.u32 2147483647, %v361
      %v666 = vand.u32 2147483647, %v362
      %v667 = vand.u32 2147483647, %v363
      %v668 = vand.u32 2147483647, %v364
      %v669 = vand.u32 2147483647, %v365
      %v670 = vand.u32 2147483647, %v366
      %v671 = vand.u32 2147483647, %v367
      %v672 = vand.u32 2147483647, %v368
      %v673 = vand.u32 2147483647, %v369
      %v674 = vand.u32 2147483647, %v370
      %v675 = vand.u32 2147483647, %v371
      %v676 = vand.u32 2147483647, %v372
      %v677 = vand.u32 2147483647, %v373
      %v678 = vand.u32 2147483647, %v374
      %v679 = vand.u32 2147483647, %v375
      %v680 = vand.u32 2147483647, %v376
      %v681 = vand.u32 2147483647, %v377
      %v682 = vand.u32 2147483647, %v378
      %v683 = vand.u32 2147483647, %v379
      %v684 = vand.u32 2147483647, %v380
      %v685 = vand.u32 2147483647, %v381
      %v686 = vand.u32 2147483647, %v382
      %v687 = vand.u32 2147483647, %v383
      %v688 = vand.u32 2147483647, %v384
      %v689 = vand.u32 2147483647, %v385
      %v690 = vand.u32 2147483647, %v386
      %v691 = vand.u32 2147483647, %v387
      %v692 = vand.u32 2147483647, %v388
      %v693 = vand.u32 2147483647, %v389
      %v694 = vand.u32 2147483647, %v390
      %v695 = vand.u32 2147483647, %v391
      %v696 = vand.u32 2147483647, %v392
      %v697 = vand.u32 2147483647, %v393
      %v698 = vand.u32 2147483647, %v394
      %v699 = vand.u32 2147483647, %v395
      %v700 = vand.u32 2147483647, %v396
      %v701 = vand.u32 2147483647, %v397
      %v702 = vand.u32 2147483647, %v398
      %v703 = vand.u32 2147483647, %v399
      %v704 = vand.u32 2147483647, %v400
      %v705 = vand.u32 2147483647, %v401
      %v706 = vand.u32 2147483647, %v402
      %v707 = vand.u32 2147483647, %v403
      %v708 = vand.u32 2147483647, %v404
      %v709 = vand.u32 2147483647, %v405
      %v710 = vand.u32 2147483647, %v406
      %v711 = vand.u32 2147483647, %v407
      %v712 = vand.u32 2147483647, %v408
      %v713 = vand.u32 2147483647, %v409
      %v714 = vand.u32 2147483647, %v410
      %v715 = vand.u32 2147483647, %v411
      %v716 = vand.u32 2147483647, %v412
      %v717 = vand.u32 2147483647, %v413
      %v718 = vand.u32 2147483647, %v414
      %v719 = vand.u32 2147483647, %v415
      %v720 = vand.u32 2147483647, %v416
      %v721 = vand.u32 2147483647, %v417
      %v722 = vand.u32 2147483647, %v418
      %v723 = vand.u32 2147483647, %v419
      %v724 = vand.u32 2147483647, %v420
      %v725 = vand.u32 2147483647, %v421
      %v726 = vand.u32 2147483647, %v422
      %v727 = vand.u32 2147483647, %v423
      %v728 = vand.u32 2147483647, %v424
      %v729 = vand.u32 2147483647, %v425
      %v730 = vand.u32 2147483647, %v426
      %v731 = vand.u32 2147483647, %v427
      %v732 = vand.u32 2147483647, %v428
      %v733 = vand.u32 2147483647, %v429
      %v734 = vand.u32 2147483647, %v430
      %v735 = vand.u32 2147483647, %v431
      %v736 = vand.u32 2147483647, %v432
      %v737 = vand.u32 2147483647, %v433
      %v738 = vand.u32 2147483647, %v434
      %v739 = vand.u32 2147483647, %v435
      %v740 = vand.u32 2147483647, %v436
      %v741 = vand.u32 2147483647, %v437
      %v742 = vand.u32 2147483647, %v438
      %v743 = vand.u32 2147483647, %v439
      %v744 = vand.u32 2147483647, %v440
      %v745 = vand.u32 2147483647, %v441
      %v746 = vand.u32 2147483647, %v442
      %v747 = vand.u32 2147483647, %v443
      %v748 = vand.u32 2147483647, %v444
      %v749 = vand.u32 2147483647, %v445
      %v750 = vand.u32 2147483647, %v446
      %v751 = vand.u32 2147483647, %v447
      %v752 = vand.u32 2147483647, %v448
      %v753 = vand.u32 2147483647, %v449
      %v754 = vand.u32 2147483647, %v450
      %v755 = vand.u32 2147483647, %v451
      %v756 = vand.u32 2147483647, %v452
      %v757 = vand.u32 2147483647, %v453
      %v758 = vand.u32 2147483647, %v454
      %v759 = vand.u32 2147483647, %v455
      %v760 = vand.u32 2147483647, %v456
      %v761 = vand.u32 2147483647, %v457
      %v762 = vand.u32 2147483647, %v458
      %v763 = vand.u32 2147483647, %v459
      %v764 = vand.u32 2147483647, %v460
      %v765 = vand.u32 2147483647, %v461
      %v766 = vand.u32 2147483647, %v462
      %v767 = vand.u32 2147483647, %v463
      %v768 = vand.u32 2147483647, %v464
      %v769 = vand.u32 2147483647, %v465
      %v770 = vand.u32 2147483647, %v466
      %v771 = vand.u32 2147483647, %v467
      %v772 = vand.u32 2147483647, %v468
      %v773 = vand.u32 2147483647, %v469
      %v774 = vand.u32 2147483647, %v470
      %v775 = vand.u32 2147483647, %v471
      %v776 = vand.u32 2147483647, %v472
      %v777 = vand.u32 2147483647, %v473
      %v778 = vand.u32 2147483647, %v474
      %v779 = vand.u32 2147483647, %v475
      %v780 = vand.u32 2147483647, %v476
      %v781 = vand.u32 2147483647, %v477
      %v782 = vand.u32 2147483647, %v478
      %v783 = vand.u32 2147483647, %v479
      %v784 = vand.u32 2147483647, %v480
      %v785 = vand.u32 2147483647, %v481
      %v786 = vand.u32 2147483647, %v482
      %v787 = vand.u32 2147483647, %v483
      %v788 = vand.u32 2147483647, %v484
      %v789 = vand.u32 2147483647, %v485
      %v790 = vand.u32 2147483647, %v486
      %v791 = vand.u32 2147483647, %v487
      %v792 = vand.u32 2147483647, %v488
      %v793 = vand.u32 2147483647, %v489
      %v794 = vand.u32 2147483647, %v490
      %v795 = vand.u32 2147483647, %v491
      %v796 = vand.u32 2147483647, %v492
      %v797 = vand.u32 2147483647, %v493
      %v798 = vand.u32 2147483647, %v494
      %v799 = vand.u32 2147483647, %v495
      %v800 = vand.u32 2147483647, %v496
      %v801 = vand.u32 2147483647, %v497
      %v802 = vand.u32 2147483647, %v498
      %v803 = vand.u32 2147483647, %v499
      %v804 = vand.u32 2147483647, %v500
      %v805 = vand.u32 2147483647, %v501
      %v806 = vand.u32 2147483647, %v502
      %v807 = vand.u32 2147483647, %v503
      %v808 = vand.u32 2147483647, %v504
      %v809 = vand.u32 2147483647, %v505
      %v810 = vand.u32 2147483647, %v506
      %v811 = vand.u32 2147483647, %v507
      %v812 = vand.u32 2147483647, %v508
      %v813 = vand.u32 2147483647, %v509
      %v814 = vand.u32 2147483647, %v510
      %v815 = vand.u32 2147483647, %v511
      %v816 = vand.u32 2147483647, %v512
      %v817 = vand.u32 2147483647, %v513
      %v818 = vand.u32 2147483647, %v514
      %v819 = vand.u32 2147483647, %v515
      %v820 = vand.u32 2147483647, %v516
      %v821 = vand.u32 2147483647, %v517
      %v822 = vand.u32 2147483647, %v518
      %v823 = vand.u32 2147483647, %v519
      %v824 = vand.u32 2147483647, %v520
      %v825 = vand.u32 2147483647, %v521
      %v826 = vand.u32 2147483647, %v522
      %v827 = vand.u32 2147483647, %v523
      %v828 = vand.u32 2147483647, %v524
      %v829 = vand.u32 2147483647, %v525
      %v830 = vand.u32 2147483647, %v526
      %v831 = vand.u32 2147483647, %v527
      %v832 = vand.u32 2147483647, %v528
      %v833 = vand.u32 2147483647, %v529
      %v834 = vand.u32 2147483647, %v530
      %v835 = vand.u32 2147483647, %v531
      %v836 = vand.u32 2147483647, %v532
      %v837 = vand.u32 2147483647, %v533
      %v838 = vand.u32 2147483647, %v534
      %v839 = vand.u32 2147483647, %v535
      %v840 = vand.u32 2147483647, %v536
      %v841 = vand.u32 2147483647, %v537
      %v842 = vand.u32 2147483647, %v538
      %v843 = vand.u32 2147483647, %v539
      %v844 = vand.u32 2147483647, %v540
      %v845 = vand.u32 2147483647, %v541
      %v846 = vand.u32 2147483647, %v542
      %v847 = vand.u32 2147483647, %v543
      %v848 = vand.u32 2147483647, %v544
      %v849 = vand.u32 2147483647, %v545
      %v850 = vand.u32 2147483647, %v546
      %v851 = vand.u32 2147483647, %v547
      %v852 = vand.u32 2147483647, %v548
      %v853 = vand.u32 2147483647, %v549
      %v854 = vand.u32 2147483647, %v550
      %v855 = vand.u32 2147483647, %v551
      %v856 = vand.u32 2147483647, %v552
      %v857 = vand.u32 2147483647, %v553
      %v858 = vand.u32 2147483647, %v554
      %v859 = vand.u32 2147483647, %v555
      %v860 = vand.u32 2147483647, %v556
      %v861 = vand.u32 2147483647, %v557
      %v862 = vand.u32 2147483647, %v558
      %v863 = vand.u32 2147483647, %v559
      %v864 = vand.u32 2147483647, %v560
      %v865 = vand.u32 2147483647, %v561
      %v866 = vand.u32 2147483647, %v562
      %v867 = vand.u32 2147483647, %v563
      %v868 = vand.u32 2147483647, %v564
      %v869 = vand.u32 2147483647, %v565
      %v870 = vand.u32 2147483647, %v566
      %v871 = vand.u32 2147483647, %v567
      %v872 = vand.u32 2147483647, %v568
      %v873 = vand.u32 2147483647, %v569
      %v874 = vand.u32 2147483647, %v570
      %v875 = vand.u32 2147483647, %v571
      %v876 = vand.u32 2147483647, %v572
      %v877 = vand.u32 2147483647, %v573
      %v878 = vand.u32 2147483647, %v574
      %v879 = vand.u32 2147483647, %v575
      %v880 = vand.u32 2147483647, %v576
      %v881 = vand.u32 2147483647, %v577
      %v882 = vand.u32 2147483647, %v578
      %v883 = vand.u32 2147483647, %v579
      %v884 = vand.u32 2147483647, %v580
      %v885 = vand.u32 2147483647, %v581
      %v886 = vand.u32 2147483647, %v582
      %v887 = vand.u32 2147483647, %v583
      %v888 = vand.u32 2147483647, %v584
      %v889 = vand.u32 2147483647, %v585
      %v890 = vand.u32 2147483647, %v586
      %v891 = vand.u32 2147483647, %v587
      %v892 = vand.u32 2147483647, %v588
      %v893 = vand.u32 2147483647, %v589
      %v894 = vand.u32 2147483647, %v590
      %v895 = vand.u32 2147483647, %v591
      %v896 = vand.u32 2147483647, %v592
      %v897 = vand.u32 2147483647, %v593
      %v898 = vand.u32 2147483647, %v594
      %v899 = vand.u32 2147483647, %v595
      %v900 = vand.u32 2147483647, %v596
      %v901 = vand.u32 2147483647, %v597
      %v902 = vand.u32 2147483647, %v598
      %v903 = vand.u32 2147483647, %v599
      %v904 = vand.u32 2147483647, %v600
      %v905 = vand.u32 2147483647, %v601
      %v906 = vand.u32 2147483647, %v602
      %v907 = vand.u32 2147483647, %v603
      %v908 = vand.u32 2147483647, %v604
      %v909 = vand.u32 2147483647, %v605
      %v910 = vand.u32 2147483647, %v606
      %v911 = vand.u32 2147483647, %v607
      %v912 = vand.u32 2147483647, %v608
      %v913 = vand.u32 2147483647, %v609
      %v914 = vand.u32 2147483647, %v610
      %v915 = vand.u32 2147483647, %v611
      %v916 = vand.u32 2147483647, %v612
      %v917 = vand.u32 2147483647, %v613
      %v918 = vand.u32 2147483647, %v614
      %v919 = vand.u32 2147483647, %v615
      %v920 = vand.u32 2147483647, %v616
      %v921 = vand.u32 2147483647, %v617
      %v922 = vand.u32 2147483647, %v618
      %v923 = vand.u32 2147483647, %v619
      %v924 = vand.u32 2147483647, %v620
      %v925 = vand.u32 2147483647, %v621
      %v926 = vand.u32 2147483647, %v622
      %v927 = vand.u32 2147483647, %v623
      %v928 = vand.u32 2147483647, %v624
      %v929 = vand.u32 2147483647, %v625
      %v930 = vand.u32 2147483647, %v626
      %v931 = vand.u32 2147483647, %v627
      %v932 = vand.u32 2147483647, %v628
      %v933 = vand.u32 2147483647, %v629
      %v934 = vand.u32 2147483647, %v630
      %v935 = vand.u32 2147483647, %v631
      %v936 = vand.u32 2147483647, %v632
      %v937 = vand.u32 2147483647, %v633
      %v938 = vand.u32 2147483647, %v634
      %v939 = vand.u32 2147483647, %v635
      %v940 = vand.u32 2147483647, %v636
      %v941 = vand.u32 2147483647, %v637
      %v942 = vand.u32 2147483647, %v638
      %v943 = vand.u32 2147483647, %v639
      %v944 = vand.u32 2147483647, %v640
      %v945 = vand.u32 2147483647, %v641
      %v946 = vand.u32 2147483647, %v642
      %v947 = vand.u32 2147483647, %v643
      %v948 = vand.u32 2147483647, %v644
      %v949 = vand.u32 2147483647, %v645
      %v950 = vand.u32 2147483647, %v646
      %v951 = vand.u32 2147483647, %v647
      %v952 = vand.u32 2147483647, %v648
      %v953 = vld [vmem:[%s326] sm:$0xff]
      %v954 = vld [vmem:[%s326 + $0x8] sm:$0xff]
      %v955 = vld [vmem:[%s326 + $0x10] sm:$0xff]
      %v956 = vld [vmem:[%s326 + $0x18] sm:$0xff]
      %v957 = vld [vmem:[%s326 + $0x20] sm:$0xff]
      %v958 = vld [vmem:[%s326 + $0x28] sm:$0xff]
      %v959 = vld [vmem:[%s326 + $0x30] sm:$0xff]
      %v960 = vld [vmem:[%s326 + $0x38] sm:$0xff]
      %v961 = vld [vmem:[%s326 + $0x40] sm:$0xff]
      %v962 = vld [vmem:[%s326 + $0x48] sm:$0xff]
      %v963 = vld [vmem:[%s326 + $0x50] sm:$0xff]
      %v964 = vld [vmem:[%s326 + $0x58] sm:$0xff]
      %v965 = vld [vmem:[%s326 + $0x60] sm:$0xff]
      %v966 = vld [vmem:[%s326 + $0x68] sm:$0xff]
      %v967 = vld [vmem:[%s326 + $0x70] sm:$0xff]
      %v968 = vld [vmem:[%s326 + $0x78] sm:$0xff]
      %v969 = vld [vmem:[%s326 + $0x80] sm:$0xff]
      %v970 = vld [vmem:[%s326 + $0x88] sm:$0xff]
      %v971 = vld [vmem:[%s326 + $0x90] sm:$0xff]
      %v972 = vld [vmem:[%s326 + $0x98] sm:$0xff]
      %v973 = vld [vmem:[%s326 + $0xa0] sm:$0xff]
      %v974 = vld [vmem:[%s326 + $0xa8] sm:$0xff]
      %v975 = vld [vmem:[%s326 + $0xb0] sm:$0xff]
      %v976 = vld [vmem:[%s326 + $0xb8] sm:$0xff]
      %v977 = vld [vmem:[%s326 + $0xc0] sm:$0xff]
      %v978 = vld [vmem:[%s326 + $0xc8] sm:$0xff]
      %v979 = vld [vmem:[%s326 + $0xd0] sm:$0xff]
      %v980 = vld [vmem:[%s326 + $0xd8] sm:$0xff]
      %v981 = vld [vmem:[%s326 + $0xe0] sm:$0xff]
      %v982 = vld [vmem:[%s326 + $0xe8] sm:$0xff]
      %v983 = vld [vmem:[%s326 + $0xf0] sm:$0xff]
      %v984 = vld [vmem:[%s326 + $0xf8] sm:$0xff]
      %v985 = vld [vmem:[%s326 + $0x100] sm:$0xff]
      %v986 = vld [vmem:[%s326 + $0x108] sm:$0xff]
      %v987 = vld [vmem:[%s326 + $0x110] sm:$0xff]
      %v988 = vld [vmem:[%s326 + $0x118] sm:$0xff]
      %v989 = vld [vmem:[%s326 + $0x120] sm:$0xff]
      %v990 = vld [vmem:[%s326 + $0x128] sm:$0xf]
      %v991 = vld [vmem:[%s326 + $0x130] sm:$0xff]
      %v992 = vld [vmem:[%s326 + $0x138] sm:$0xff]
      %v993 = vld [vmem:[%s326 + $0x140] sm:$0xff]
      %v994 = vld [vmem:[%s326 + $0x148] sm:$0xff]
      %v995 = vld [vmem:[%s326 + $0x150] sm:$0xff]
      %v996 = vld [vmem:[%s326 + $0x158] sm:$0xff]
      %v997 = vld [vmem:[%s326 + $0x160] sm:$0xff]
      %v998 = vld [vmem:[%s326 + $0x168] sm:$0xff]
      %v999 = vld [vmem:[%s326 + $0x170] sm:$0xff]
      %v1000 = vld [vmem:[%s326 + $0x178] sm:$0xff]
      %v1001 = vld [vmem:[%s326 + $0x180] sm:$0xff]
      %v1002 = vld [vmem:[%s326 + $0x188] sm:$0xff]
      %v1003 = vld [vmem:[%s326 + $0x190] sm:$0xff]
      %v1004 = vld [vmem:[%s326 + $0x198] sm:$0xff]
      %v1005 = vld [vmem:[%s326 + $0x1a0] sm:$0xff]
      %v1006 = vld [vmem:[%s326 + $0x1a8] sm:$0xff]
      %v1007 = vld [vmem:[%s326 + $0x1b0] sm:$0xff]
      %v1008 = vld [vmem:[%s326 + $0x1b8] sm:$0xff]
      %v1009 = vld [vmem:[%s326 + $0x1c0] sm:$0xff]
      %v1010 = vld [vmem:[%s326 + $0x1c8] sm:$0xff]
      %v1011 = vld [vmem:[%s326 + $0x1d0] sm:$0xff]
      %v1012 = vld [vmem:[%s326 + $0x1d8] sm:$0xff]
      %v1013 = vld [vmem:[%s326 + $0x1e0] sm:$0xff]
      %v1014 = vld [vmem:[%s326 + $0x1e8] sm:$0xff]
      %v1015 = vld [vmem:[%s326 + $0x1f0] sm:$0xff]
      %v1016 = vld [vmem:[%s326 + $0x1f8] sm:$0xff]
      %v1017 = vld [vmem:[%s326 + $0x200] sm:$0xff]
      %v1018 = vld [vmem:[%s326 + $0x208] sm:$0xff]
      %v1019 = vld [vmem:[%s326 + $0x210] sm:$0xff]
      %v1020 = vld [vmem:[%s326 + $0x218] sm:$0xff]
      %v1021 = vld [vmem:[%s326 + $0x220] sm:$0xff]
      %v1022 = vld [vmem:[%s326 + $0x228] sm:$0xff]
      %v1023 = vld [vmem:[%s326 + $0x230] sm:$0xff]
      %v1024 = vld [vmem:[%s326 + $0x238] sm:$0xff]
      %v1025 = vld [vmem:[%s326 + $0x240] sm:$0xff]
      %v1026 = vld [vmem:[%s326 + $0x248] sm:$0xff]
      %v1027 = vld [vmem:[%s326 + $0x250] sm:$0xff]
      %v1028 = vld [vmem:[%s326 + $0x258] sm:$0xf]
      %v1029 = vld [vmem:[%s326 + $0x260] sm:$0xff]
      %v1030 = vld [vmem:[%s326 + $0x268] sm:$0xff]
      %v1031 = vld [vmem:[%s326 + $0x270] sm:$0xff]
      %v1032 = vld [vmem:[%s326 + $0x278] sm:$0xff]
      %v1033 = vld [vmem:[%s326 + $0x280] sm:$0xff]
      %v1034 = vld [vmem:[%s326 + $0x288] sm:$0xff]
      %v1035 = vld [vmem:[%s326 + $0x290] sm:$0xff]
      %v1036 = vld [vmem:[%s326 + $0x298] sm:$0xff]
      %v1037 = vld [vmem:[%s326 + $0x2a0] sm:$0xff]
      %v1038 = vld [vmem:[%s326 + $0x2a8] sm:$0xff]
      %v1039 = vld [vmem:[%s326 + $0x2b0] sm:$0xff]
      %v1040 = vld [vmem:[%s326 + $0x2b8] sm:$0xff]
      %v1041 = vld [vmem:[%s326 + $0x2c0] sm:$0xff]
      %v1042 = vld [vmem:[%s326 + $0x2c8] sm:$0xff]
      %v1043 = vld [vmem:[%s326 + $0x2d0] sm:$0xff]
      %v1044 = vld [vmem:[%s326 + $0x2d8] sm:$0xff]
      %v1045 = vld [vmem:[%s326 + $0x2e0] sm:$0xff]
      %v1046 = vld [vmem:[%s326 + $0x2e8] sm:$0xff]
      %v1047 = vld [vmem:[%s326 + $0x2f0] sm:$0xff]
      %v1048 = vld [vmem:[%s326 + $0x2f8] sm:$0xff]
      %v1049 = vld [vmem:[%s326 + $0x300] sm:$0xff]
      %v1050 = vld [vmem:[%s326 + $0x308] sm:$0xff]
      %v1051 = vld [vmem:[%s326 + $0x310] sm:$0xff]
      %v1052 = vld [vmem:[%s326 + $0x318] sm:$0xff]
      %v1053 = vld [vmem:[%s326 + $0x320] sm:$0xff]
      %v1054 = vld [vmem:[%s326 + $0x328] sm:$0xff]
      %v1055 = vld [vmem:[%s326 + $0x330] sm:$0xff]
      %v1056 = vld [vmem:[%s326 + $0x338] sm:$0xff]
      %v1057 = vld [vmem:[%s326 + $0x340] sm:$0xff]
      %v1058 = vld [vmem:[%s326 + $0x348] sm:$0xff]
      %v1059 = vld [vmem:[%s326 + $0x350] sm:$0xff]
      %v1060 = vld [vmem:[%s326 + $0x358] sm:$0xff]
      %v1061 = vld [vmem:[%s326 + $0x360] sm:$0xff]
      %v1062 = vld [vmem:[%s326 + $0x368] sm:$0xff]
      %v1063 = vld [vmem:[%s326 + $0x370] sm:$0xff]
      %v1064 = vld [vmem:[%s326 + $0x378] sm:$0xff]
      %v1065 = vld [vmem:[%s326 + $0x380] sm:$0xff]
      %v1066 = vld [vmem:[%s326 + $0x388] sm:$0xf]
      %v1067 = vld [vmem:[%s326 + $0x390] sm:$0xff]
      %v1068 = vld [vmem:[%s326 + $0x398] sm:$0xff]
      %v1069 = vld [vmem:[%s326 + $0x3a0] sm:$0xff]
      %v1070 = vld [vmem:[%s326 + $0x3a8] sm:$0xff]
      %v1071 = vld [vmem:[%s326 + $0x3b0] sm:$0xff]
      %v1072 = vld [vmem:[%s326 + $0x3b8] sm:$0xff]
      %v1073 = vld [vmem:[%s326 + $0x3c0] sm:$0xff]
      %v1074 = vld [vmem:[%s326 + $0x3c8] sm:$0xff]
      %v1075 = vld [vmem:[%s326 + $0x3d0] sm:$0xff]
      %v1076 = vld [vmem:[%s326 + $0x3d8] sm:$0xff]
      %v1077 = vld [vmem:[%s326 + $0x3e0] sm:$0xff]
      %v1078 = vld [vmem:[%s326 + $0x3e8] sm:$0xff]
      %v1079 = vld [vmem:[%s326 + $0x3f0] sm:$0xff]
      %v1080 = vld [vmem:[%s326 + $0x3f8] sm:$0xff]
      %v1081 = vld [vmem:[%s326 + $0x400] sm:$0xff]
      %v1082 = vld [vmem:[%s326 + $0x408] sm:$0xff]
      %v1083 = vld [vmem:[%s326 + $0x410] sm:$0xff]
      %v1084 = vld [vmem:[%s326 + $0x418] sm:$0xff]
      %v1085 = vld [vmem:[%s326 + $0x420] sm:$0xff]
      %v1086 = vld [vmem:[%s326 + $0x428] sm:$0xff]
      %v1087 = vld [vmem:[%s326 + $0x430] sm:$0xff]
      %v1088 = vld [vmem:[%s326 + $0x438] sm:$0xff]
      %v1089 = vld [vmem:[%s326 + $0x440] sm:$0xff]
      %v1090 = vld [vmem:[%s326 + $0x448] sm:$0xff]
      %v1091 = vld [vmem:[%s326 + $0x450] sm:$0xff]
      %v1092 = vld [vmem:[%s326 + $0x458] sm:$0xff]
      %v1093 = vld [vmem:[%s326 + $0x460] sm:$0xff]
      %v1094 = vld [vmem:[%s326 + $0x468] sm:$0xff]
      %v1095 = vld [vmem:[%s326 + $0x470] sm:$0xff]
      %v1096 = vld [vmem:[%s326 + $0x478] sm:$0xff]
      %v1097 = vld [vmem:[%s326 + $0x480] sm:$0xff]
      %v1098 = vld [vmem:[%s326 + $0x488] sm:$0xff]
      %v1099 = vld [vmem:[%s326 + $0x490] sm:$0xff]
      %v1100 = vld [vmem:[%s326 + $0x498] sm:$0xff]
      %v1101 = vld [vmem:[%s326 + $0x4a0] sm:$0xff]
      %v1102 = vld [vmem:[%s326 + $0x4a8] sm:$0xff]
      %v1103 = vld [vmem:[%s326 + $0x4b0] sm:$0xff]
      %v1104 = vld [vmem:[%s326 + $0x4b8] sm:$0xf]
      %v1105 = vld [vmem:[%s326 + $0x4c0] sm:$0xff]
      %v1106 = vld [vmem:[%s326 + $0x4c8] sm:$0xff]
      %v1107 = vld [vmem:[%s326 + $0x4d0] sm:$0xff]
      %v1108 = vld [vmem:[%s326 + $0x4d8] sm:$0xff]
      %v1109 = vld [vmem:[%s326 + $0x4e0] sm:$0xff]
      %v1110 = vld [vmem:[%s326 + $0x4e8] sm:$0xff]
      %v1111 = vld [vmem:[%s326 + $0x4f0] sm:$0xff]
      %v1112 = vld [vmem:[%s326 + $0x4f8] sm:$0xff]
      %v1113 = vld [vmem:[%s326 + $0x500] sm:$0xff]
      %v1114 = vld [vmem:[%s326 + $0x508] sm:$0xff]
      %v1115 = vld [vmem:[%s326 + $0x510] sm:$0xff]
      %v1116 = vld [vmem:[%s326 + $0x518] sm:$0xff]
      %v1117 = vld [vmem:[%s326 + $0x520] sm:$0xff]
      %v1118 = vld [vmem:[%s326 + $0x528] sm:$0xff]
      %v1119 = vld [vmem:[%s326 + $0x530] sm:$0xff]
      %v1120 = vld [vmem:[%s326 + $0x538] sm:$0xff]
      %v1121 = vld [vmem:[%s326 + $0x540] sm:$0xff]
      %v1122 = vld [vmem:[%s326 + $0x548] sm:$0xff]
      %v1123 = vld [vmem:[%s326 + $0x550] sm:$0xff]
      %v1124 = vld [vmem:[%s326 + $0x558] sm:$0xff]
      %v1125 = vld [vmem:[%s326 + $0x560] sm:$0xff]
      %v1126 = vld [vmem:[%s326 + $0x568] sm:$0xff]
      %v1127 = vld [vmem:[%s326 + $0x570] sm:$0xff]
      %v1128 = vld [vmem:[%s326 + $0x578] sm:$0xff]
      %v1129 = vld [vmem:[%s326 + $0x580] sm:$0xff]
      %v1130 = vld [vmem:[%s326 + $0x588] sm:$0xff]
      %v1131 = vld [vmem:[%s326 + $0x590] sm:$0xff]
      %v1132 = vld [vmem:[%s326 + $0x598] sm:$0xff]
      %v1133 = vld [vmem:[%s326 + $0x5a0] sm:$0xff]
      %v1134 = vld [vmem:[%s326 + $0x5a8] sm:$0xff]
      %v1135 = vld [vmem:[%s326 + $0x5b0] sm:$0xff]
      %v1136 = vld [vmem:[%s326 + $0x5b8] sm:$0xff]
      %v1137 = vld [vmem:[%s326 + $0x5c0] sm:$0xff]
      %v1138 = vld [vmem:[%s326 + $0x5c8] sm:$0xff]
      %v1139 = vld [vmem:[%s326 + $0x5d0] sm:$0xff]
      %v1140 = vld [vmem:[%s326 + $0x5d8] sm:$0xff]
      %v1141 = vld [vmem:[%s326 + $0x5e0] sm:$0xff]
      %v1142 = vld [vmem:[%s326 + $0x5e8] sm:$0xf]
      %v1143 = vld [vmem:[%s326 + $0x5f0] sm:$0xff]
      %v1144 = vld [vmem:[%s326 + $0x5f8] sm:$0xff]
      %v1145 = vld [vmem:[%s326 + $0x600] sm:$0xff]
      %v1146 = vld [vmem:[%s326 + $0x608] sm:$0xff]
      %v1147 = vld [vmem:[%s326 + $0x610] sm:$0xff]
      %v1148 = vld [vmem:[%s326 + $0x618] sm:$0xff]
      %v1149 = vld [vmem:[%s326 + $0x620] sm:$0xff]
      %v1150 = vld [vmem:[%s326 + $0x628] sm:$0xff]
      %v1151 = vld [vmem:[%s326 + $0x630] sm:$0xff]
      %v1152 = vld [vmem:[%s326 + $0x638] sm:$0xff]
      %v1153 = vld [vmem:[%s326 + $0x640] sm:$0xff]
      %v1154 = vld [vmem:[%s326 + $0x648] sm:$0xff]
      %v1155 = vld [vmem:[%s326 + $0x650] sm:$0xff]
      %v1156 = vld [vmem:[%s326 + $0x658] sm:$0xff]
      %v1157 = vld [vmem:[%s326 + $0x660] sm:$0xff]
      %v1158 = vld [vmem:[%s326 + $0x668] sm:$0xff]
      %v1159 = vld [vmem:[%s326 + $0x670] sm:$0xff]
      %v1160 = vld [vmem:[%s326 + $0x678] sm:$0xff]
      %v1161 = vld [vmem:[%s326 + $0x680] sm:$0xff]
      %v1162 = vld [vmem:[%s326 + $0x688] sm:$0xff]
      %v1163 = vld [vmem:[%s326 + $0x690] sm:$0xff]
      %v1164 = vld [vmem:[%s326 + $0x698] sm:$0xff]
      %v1165 = vld [vmem:[%s326 + $0x6a0] sm:$0xff]
      %v1166 = vld [vmem:[%s326 + $0x6a8] sm:$0xff]
      %v1167 = vld [vmem:[%s326 + $0x6b0] sm:$0xff]
      %v1168 = vld [vmem:[%s326 + $0x6b8] sm:$0xff]
      %v1169 = vld [vmem:[%s326 + $0x6c0] sm:$0xff]
      %v1170 = vld [vmem:[%s326 + $0x6c8] sm:$0xff]
      %v1171 = vld [vmem:[%s326 + $0x6d0] sm:$0xff]
      %v1172 = vld [vmem:[%s326 + $0x6d8] sm:$0xff]
      %v1173 = vld [vmem:[%s326 + $0x6e0] sm:$0xff]
      %v1174 = vld [vmem:[%s326 + $0x6e8] sm:$0xff]
      %v1175 = vld [vmem:[%s326 + $0x6f0] sm:$0xff]
      %v1176 = vld [vmem:[%s326 + $0x6f8] sm:$0xff]
      %v1177 = vld [vmem:[%s326 + $0x700] sm:$0xff]
      %v1178 = vld [vmem:[%s326 + $0x708] sm:$0xff]
      %v1179 = vld [vmem:[%s326 + $0x710] sm:$0xff]
      %v1180 = vld [vmem:[%s326 + $0x718] sm:$0xf]
      %v1181 = vld [vmem:[%s326 + $0x720] sm:$0xff]
      %v1182 = vld [vmem:[%s326 + $0x728] sm:$0xff]
      %v1183 = vld [vmem:[%s326 + $0x730] sm:$0xff]
      %v1184 = vld [vmem:[%s326 + $0x738] sm:$0xff]
      %v1185 = vld [vmem:[%s326 + $0x740] sm:$0xff]
      %v1186 = vld [vmem:[%s326 + $0x748] sm:$0xff]
      %v1187 = vld [vmem:[%s326 + $0x750] sm:$0xff]
      %v1188 = vld [vmem:[%s326 + $0x758] sm:$0xff]
      %v1189 = vld [vmem:[%s326 + $0x760] sm:$0xff]
      %v1190 = vld [vmem:[%s326 + $0x768] sm:$0xff]
      %v1191 = vld [vmem:[%s326 + $0x770] sm:$0xff]
      %v1192 = vld [vmem:[%s326 + $0x778] sm:$0xff]
      %v1193 = vld [vmem:[%s326 + $0x780] sm:$0xff]
      %v1194 = vld [vmem:[%s326 + $0x788] sm:$0xff]
      %v1195 = vld [vmem:[%s326 + $0x790] sm:$0xff]
      %v1196 = vld [vmem:[%s326 + $0x798] sm:$0xff]
      %v1197 = vld [vmem:[%s326 + $0x7a0] sm:$0xff]
      %v1198 = vld [vmem:[%s326 + $0x7a8] sm:$0xff]
      %v1199 = vld [vmem:[%s326 + $0x7b0] sm:$0xff]
      %v1200 = vld [vmem:[%s326 + $0x7b8] sm:$0xff]
      %v1201 = vld [vmem:[%s326 + $0x7c0] sm:$0xff]
      %v1202 = vld [vmem:[%s326 + $0x7c8] sm:$0xff]
      %v1203 = vld [vmem:[%s326 + $0x7d0] sm:$0xff]
      %v1204 = vld [vmem:[%s326 + $0x7d8] sm:$0xff]
      %v1205 = vld [vmem:[%s326 + $0x7e0] sm:$0xff]
      %v1206 = vld [vmem:[%s326 + $0x7e8] sm:$0xff]
      %v1207 = vld [vmem:[%s326 + $0x7f0] sm:$0xff]
      %v1208 = vld [vmem:[%s326 + $0x7f8] sm:$0xff]
      %v1209 = vld [vmem:[%s326 + $0x800] sm:$0xff]
      %v1210 = vld [vmem:[%s326 + $0x808] sm:$0xff]
      %v1211 = vld [vmem:[%s326 + $0x810] sm:$0xff]
      %v1212 = vld [vmem:[%s326 + $0x818] sm:$0xff]
      %v1213 = vld [vmem:[%s326 + $0x820] sm:$0xff]
      %v1214 = vld [vmem:[%s326 + $0x828] sm:$0xff]
      %v1215 = vld [vmem:[%s326 + $0x830] sm:$0xff]
      %v1216 = vld [vmem:[%s326 + $0x838] sm:$0xff]
      %v1217 = vld [vmem:[%s326 + $0x840] sm:$0xff]
      %v1218 = vld [vmem:[%s326 + $0x848] sm:$0xf]
      %v1219 = vld [vmem:[%s326 + $0x850] sm:$0xff]
      %v1220 = vld [vmem:[%s326 + $0x858] sm:$0xff]
      %v1221 = vld [vmem:[%s326 + $0x860] sm:$0xff]
      %v1222 = vld [vmem:[%s326 + $0x868] sm:$0xff]
      %v1223 = vld [vmem:[%s326 + $0x870] sm:$0xff]
      %v1224 = vld [vmem:[%s326 + $0x878] sm:$0xff]
      %v1225 = vld [vmem:[%s326 + $0x880] sm:$0xff]
      %v1226 = vld [vmem:[%s326 + $0x888] sm:$0xff]
      %v1227 = vld [vmem:[%s326 + $0x890] sm:$0xff]
      %v1228 = vld [vmem:[%s326 + $0x898] sm:$0xff]
      %v1229 = vld [vmem:[%s326 + $0x8a0] sm:$0xff]
      %v1230 = vld [vmem:[%s326 + $0x8a8] sm:$0xff]
      %v1231 = vld [vmem:[%s326 + $0x8b0] sm:$0xff]
      %v1232 = vld [vmem:[%s326 + $0x8b8] sm:$0xff]
      %v1233 = vld [vmem:[%s326 + $0x8c0] sm:$0xff]
      %v1234 = vld [vmem:[%s326 + $0x8c8] sm:$0xff]
      %v1235 = vld [vmem:[%s326 + $0x8d0] sm:$0xff]
      %v1236 = vld [vmem:[%s326 + $0x8d8] sm:$0xff]
      %v1237 = vld [vmem:[%s326 + $0x8e0] sm:$0xff]
      %v1238 = vld [vmem:[%s326 + $0x8e8] sm:$0xff]
      %v1239 = vld [vmem:[%s326 + $0x8f0] sm:$0xff]
      %v1240 = vld [vmem:[%s326 + $0x8f8] sm:$0xff]
      %v1241 = vld [vmem:[%s326 + $0x900] sm:$0xff]
      %v1242 = vld [vmem:[%s326 + $0x908] sm:$0xff]
      %v1243 = vld [vmem:[%s326 + $0x910] sm:$0xff]
      %v1244 = vld [vmem:[%s326 + $0x918] sm:$0xff]
      %v1245 = vld [vmem:[%s326 + $0x920] sm:$0xff]
      %v1246 = vld [vmem:[%s326 + $0x928] sm:$0xff]
      %v1247 = vld [vmem:[%s326 + $0x930] sm:$0xff]
      %v1248 = vld [vmem:[%s326 + $0x938] sm:$0xff]
      %v1249 = vld [vmem:[%s326 + $0x940] sm:$0xff]
      %v1250 = vld [vmem:[%s326 + $0x948] sm:$0xff]
      %v1251 = vld [vmem:[%s326 + $0x950] sm:$0xff]
      %v1252 = vld [vmem:[%s326 + $0x958] sm:$0xff]
      %v1253 = vld [vmem:[%s326 + $0x960] sm:$0xff]
      %v1254 = vld [vmem:[%s326 + $0x968] sm:$0xff]
      %v1255 = vld [vmem:[%s326 + $0x970] sm:$0xff]
      %v1256 = vld [vmem:[%s326 + $0x978] sm:$0xf]
      %v1257 = vand.u32 2147483647, %v953
      %v1258 = vand.u32 2147483647, %v954
      %v1259 = vand.u32 2147483647, %v955
      %v1260 = vand.u32 2147483647, %v956
      %v1261 = vand.u32 2147483647, %v957
      %v1262 = vand.u32 2147483647, %v958
      %v1263 = vand.u32 2147483647, %v959
      %v1264 = vand.u32 2147483647, %v960
      %v1265 = vand.u32 2147483647, %v961
      %v1266 = vand.u32 2147483647, %v962
      %v1267 = vand.u32 2147483647, %v963
      %v1268 = vand.u32 2147483647, %v964
      %v1269 = vand.u32 2147483647, %v965
      %v1270 = vand.u32 2147483647, %v966
      %v1271 = vand.u32 2147483647, %v967
      %v1272 = vand.u32 2147483647, %v968
      %v1273 = vand.u32 2147483647, %v969
      %v1274 = vand.u32 2147483647, %v970
      %v1275 = vand.u32 2147483647, %v971
      %v1276 = vand.u32 2147483647, %v972
      %v1277 = vand.u32 2147483647, %v973
      %v1278 = vand.u32 2147483647, %v974
      %v1279 = vand.u32 2147483647, %v975
      %v1280 = vand.u32 2147483647, %v976
      %v1281 = vand.u32 2147483647, %v977
      %v1282 = vand.u32 2147483647, %v978
      %v1283 = vand.u32 2147483647, %v979
      %v1284 = vand.u32 2147483647, %v980
      %v1285 = vand.u32 2147483647, %v981
      %v1286 = vand.u32 2147483647, %v982
      %v1287 = vand.u32 2147483647, %v983
      %v1288 = vand.u32 2147483647, %v984
      %v1289 = vand.u32 2147483647, %v985
      %v1290 = vand.u32 2147483647, %v986
      %v1291 = vand.u32 2147483647, %v987
      %v1292 = vand.u32 2147483647, %v988
      %v1293 = vand.u32 2147483647, %v989
      %v1294 = vand.u32 2147483647, %v990
      %v1295 = vand.u32 2147483647, %v991
      %v1296 = vand.u32 2147483647, %v992
      %v1297 = vand.u32 2147483647, %v993
      %v1298 = vand.u32 2147483647, %v994
      %v1299 = vand.u32 2147483647, %v995
      %v1300 = vand.u32 2147483647, %v996
      %v1301 = vand.u32 2147483647, %v997
      %v1302 = vand.u32 2147483647, %v998
      %v1303 = vand.u32 2147483647, %v999
      %v1304 = vand.u32 2147483647, %v1000
      %v1305 = vand.u32 2147483647, %v1001
      %v1306 = vand.u32 2147483647, %v1002
      %v1307 = vand.u32 2147483647, %v1003
      %v1308 = vand.u32 2147483647, %v1004
      %v1309 = vand.u32 2147483647, %v1005
      %v1310 = vand.u32 2147483647, %v1006
      %v1311 = vand.u32 2147483647, %v1007
      %v1312 = vand.u32 2147483647, %v1008
      %v1313 = vand.u32 2147483647, %v1009
      %v1314 = vand.u32 2147483647, %v1010
      %v1315 = vand.u32 2147483647, %v1011
      %v1316 = vand.u32 2147483647, %v1012
      %v1317 = vand.u32 2147483647, %v1013
      %v1318 = vand.u32 2147483647, %v1014
      %v1319 = vand.u32 2147483647, %v1015
      %v1320 = vand.u32 2147483647, %v1016
      %v1321 = vand.u32 2147483647, %v1017
      %v1322 = vand.u32 2147483647, %v1018
      %v1323 = vand.u32 2147483647, %v1019
      %v1324 = vand.u32 2147483647, %v1020
      %v1325 = vand.u32 2147483647, %v1021
      %v1326 = vand.u32 2147483647, %v1022
      %v1327 = vand.u32 2147483647, %v1023
      %v1328 = vand.u32 2147483647, %v1024
      %v1329 = vand.u32 2147483647, %v1025
      %v1330 = vand.u32 2147483647, %v1026
      %v1331 = vand.u32 2147483647, %v1027
      %v1332 = vand.u32 2147483647, %v1028
      %v1333 = vand.u32 2147483647, %v1029
      %v1334 = vand.u32 2147483647, %v1030
      %v1335 = vand.u32 2147483647, %v1031
      %v1336 = vand.u32 2147483647, %v1032
      %v1337 = vand.u32 2147483647, %v1033
      %v1338 = vand.u32 2147483647, %v1034
      %v1339 = vand.u32 2147483647, %v1035
      %v1340 = vand.u32 2147483647, %v1036
      %v1341 = vand.u32 2147483647, %v1037
      %v1342 = vand.u32 2147483647, %v1038
      %v1343 = vand.u32 2147483647, %v1039
      %v1344 = vand.u32 2147483647, %v1040
      %v1345 = vand.u32 2147483647, %v1041
      %v1346 = vand.u32 2147483647, %v1042
      %v1347 = vand.u32 2147483647, %v1043
      %v1348 = vand.u32 2147483647, %v1044
      %v1349 = vand.u32 2147483647, %v1045
      %v1350 = vand.u32 2147483647, %v1046
      %v1351 = vand.u32 2147483647, %v1047
      %v1352 = vand.u32 2147483647, %v1048
      %v1353 = vand.u32 2147483647, %v1049
      %v1354 = vand.u32 2147483647, %v1050
      %v1355 = vand.u32 2147483647, %v1051
      %v1356 = vand.u32 2147483647, %v1052
      %v1357 = vand.u32 2147483647, %v1053
      %v1358 = vand.u32 2147483647, %v1054
      %v1359 = vand.u32 2147483647, %v1055
      %v1360 = vand.u32 2147483647, %v1056
      %v1361 = vand.u32 2147483647, %v1057
      %v1362 = vand.u32 2147483647, %v1058
      %v1363 = vand.u32 2147483647, %v1059
      %v1364 = vand.u32 2147483647, %v1060
      %v1365 = vand.u32 2147483647, %v1061
      %v1366 = vand.u32 2147483647, %v1062
      %v1367 = vand.u32 2147483647, %v1063
      %v1368 = vand.u32 2147483647, %v1064
      %v1369 = vand.u32 2147483647, %v1065
      %v1370 = vand.u32 2147483647, %v1066
      %v1371 = vand.u32 2147483647, %v1067
      %v1372 = vand.u32 2147483647, %v1068
      %v1373 = vand.u32 2147483647, %v1069
      %v1374 = vand.u32 2147483647, %v1070
      %v1375 = vand.u32 2147483647, %v1071
      %v1376 = vand.u32 2147483647, %v1072
      %v1377 = vand.u32 2147483647, %v1073
      %v1378 = vand.u32 2147483647, %v1074
      %v1379 = vand.u32 2147483647, %v1075
      %v1380 = vand.u32 2147483647, %v1076
      %v1381 = vand.u32 2147483647, %v1077
      %v1382 = vand.u32 2147483647, %v1078
      %v1383 = vand.u32 2147483647, %v1079
      %v1384 = vand.u32 2147483647, %v1080
      %v1385 = vand.u32 2147483647, %v1081
      %v1386 = vand.u32 2147483647, %v1082
      %v1387 = vand.u32 2147483647, %v1083
      %v1388 = vand.u32 2147483647, %v1084
      %v1389 = vand.u32 2147483647, %v1085
      %v1390 = vand.u32 2147483647, %v1086
      %v1391 = vand.u32 2147483647, %v1087
      %v1392 = vand.u32 2147483647, %v1088
      %v1393 = vand.u32 2147483647, %v1089
      %v1394 = vand.u32 2147483647, %v1090
      %v1395 = vand.u32 2147483647, %v1091
      %v1396 = vand.u32 2147483647, %v1092
      %v1397 = vand.u32 2147483647, %v1093
      %v1398 = vand.u32 2147483647, %v1094
      %v1399 = vand.u32 2147483647, %v1095
      %v1400 = vand.u32 2147483647, %v1096
      %v1401 = vand.u32 2147483647, %v1097
      %v1402 = vand.u32 2147483647, %v1098
      %v1403 = vand.u32 2147483647, %v1099
      %v1404 = vand.u32 2147483647, %v1100
      %v1405 = vand.u32 2147483647, %v1101
      %v1406 = vand.u32 2147483647, %v1102
      %v1407 = vand.u32 2147483647, %v1103
      %v1408 = vand.u32 2147483647, %v1104
      %v1409 = vand.u32 2147483647, %v1105
      %v1410 = vand.u32 2147483647, %v1106
      %v1411 = vand.u32 2147483647, %v1107
      %v1412 = vand.u32 2147483647, %v1108
      %v1413 = vand.u32 2147483647, %v1109
      %v1414 = vand.u32 2147483647, %v1110
      %v1415 = vand.u32 2147483647, %v1111
      %v1416 = vand.u32 2147483647, %v1112
      %v1417 = vand.u32 2147483647, %v1113
      %v1418 = vand.u32 2147483647, %v1114
      %v1419 = vand.u32 2147483647, %v1115
      %v1420 = vand.u32 2147483647, %v1116
      %v1421 = vand.u32 2147483647, %v1117
      %v1422 = vand.u32 2147483647, %v1118
      %v1423 = vand.u32 2147483647, %v1119
      %v1424 = vand.u32 2147483647, %v1120
      %v1425 = vand.u32 2147483647, %v1121
      %v1426 = vand.u32 2147483647, %v1122
      %v1427 = vand.u32 2147483647, %v1123
      %v1428 = vand.u32 2147483647, %v1124
      %v1429 = vand.u32 2147483647, %v1125
      %v1430 = vand.u32 2147483647, %v1126
      %v1431 = vand.u32 2147483647, %v1127
      %v1432 = vand.u32 2147483647, %v1128
      %v1433 = vand.u32 2147483647, %v1129
      %v1434 = vand.u32 2147483647, %v1130
      %v1435 = vand.u32 2147483647, %v1131
      %v1436 = vand.u32 2147483647, %v1132
      %v1437 = vand.u32 2147483647, %v1133
      %v1438 = vand.u32 2147483647, %v1134
      %v1439 = vand.u32 2147483647, %v1135
      %v1440 = vand.u32 2147483647, %v1136
      %v1441 = vand.u32 2147483647, %v1137
      %v1442 = vand.u32 2147483647, %v1138
      %v1443 = vand.u32 2147483647, %v1139
      %v1444 = vand.u32 2147483647, %v1140
      %v1445 = vand.u32 2147483647, %v1141
      %v1446 = vand.u32 2147483647, %v1142
      %v1447 = vand.u32 2147483647, %v1143
      %v1448 = vand.u32 2147483647, %v1144
      %v1449 = vand.u32 2147483647, %v1145
      %v1450 = vand.u32 2147483647, %v1146
      %v1451 = vand.u32 2147483647, %v1147
      %v1452 = vand.u32 2147483647, %v1148
      %v1453 = vand.u32 2147483647, %v1149
      %v1454 = vand.u32 2147483647, %v1150
      %v1455 = vand.u32 2147483647, %v1151
      %v1456 = vand.u32 2147483647, %v1152
      %v1457 = vand.u32 2147483647, %v1153
      %v1458 = vand.u32 2147483647, %v1154
      %v1459 = vand.u32 2147483647, %v1155
      %v1460 = vand.u32 2147483647, %v1156
      %v1461 = vand.u32 2147483647, %v1157
      %v1462 = vand.u32 2147483647, %v1158
      %v1463 = vand.u32 2147483647, %v1159
      %v1464 = vand.u32 2147483647, %v1160
      %v1465 = vand.u32 2147483647, %v1161
      %v1466 = vand.u32 2147483647, %v1162
      %v1467 = vand.u32 2147483647, %v1163
      %v1468 = vand.u32 2147483647, %v1164
      %v1469 = vand.u32 2147483647, %v1165
      %v1470 = vand.u32 2147483647, %v1166
      %v1471 = vand.u32 2147483647, %v1167
      %v1472 = vand.u32 2147483647, %v1168
      %v1473 = vand.u32 2147483647, %v1169
      %v1474 = vand.u32 2147483647, %v1170
      %v1475 = vand.u32 2147483647, %v1171
      %v1476 = vand.u32 2147483647, %v1172
      %v1477 = vand.u32 2147483647, %v1173
      %v1478 = vand.u32 2147483647, %v1174
      %v1479 = vand.u32 2147483647, %v1175
      %v1480 = vand.u32 2147483647, %v1176
      %v1481 = vand.u32 2147483647, %v1177
      %v1482 = vand.u32 2147483647, %v1178
      %v1483 = vand.u32 2147483647, %v1179
      %v1484 = vand.u32 2147483647, %v1180
      %v1485 = vand.u32 2147483647, %v1181
      %v1486 = vand.u32 2147483647, %v1182
      %v1487 = vand.u32 2147483647, %v1183
      %v1488 = vand.u32 2147483647, %v1184
      %v1489 = vand.u32 2147483647, %v1185
      %v1490 = vand.u32 2147483647, %v1186
      %v1491 = vand.u32 2147483647, %v1187
      %v1492 = vand.u32 2147483647, %v1188
      %v1493 = vand.u32 2147483647, %v1189
      %v1494 = vand.u32 2147483647, %v1190
      %v1495 = vand.u32 2147483647, %v1191
      %v1496 = vand.u32 2147483647, %v1192
      %v1497 = vand.u32 2147483647, %v1193
      %v1498 = vand.u32 2147483647, %v1194
      %v1499 = vand.u32 2147483647, %v1195
      %v1500 = vand.u32 2147483647, %v1196
      %v1501 = vand.u32 2147483647, %v1197
      %v1502 = vand.u32 2147483647, %v1198
      %v1503 = vand.u32 2147483647, %v1199
      %v1504 = vand.u32 2147483647, %v1200
      %v1505 = vand.u32 2147483647, %v1201
      %v1506 = vand.u32 2147483647, %v1202
      %v1507 = vand.u32 2147483647, %v1203
      %v1508 = vand.u32 2147483647, %v1204
      %v1509 = vand.u32 2147483647, %v1205
      %v1510 = vand.u32 2147483647, %v1206
      %v1511 = vand.u32 2147483647, %v1207
      %v1512 = vand.u32 2147483647, %v1208
      %v1513 = vand.u32 2147483647, %v1209
      %v1514 = vand.u32 2147483647, %v1210
      %v1515 = vand.u32 2147483647, %v1211
      %v1516 = vand.u32 2147483647, %v1212
      %v1517 = vand.u32 2147483647, %v1213
      %v1518 = vand.u32 2147483647, %v1214
      %v1519 = vand.u32 2147483647, %v1215
      %v1520 = vand.u32 2147483647, %v1216
      %v1521 = vand.u32 2147483647, %v1217
      %v1522 = vand.u32 2147483647, %v1218
      %v1523 = vand.u32 2147483647, %v1219
      %v1524 = vand.u32 2147483647, %v1220
      %v1525 = vand.u32 2147483647, %v1221
      %v1526 = vand.u32 2147483647, %v1222
      %v1527 = vand.u32 2147483647, %v1223
      %v1528 = vand.u32 2147483647, %v1224
      %v1529 = vand.u32 2147483647, %v1225
      %v1530 = vand.u32 2147483647, %v1226
      %v1531 = vand.u32 2147483647, %v1227
      %v1532 = vand.u32 2147483647, %v1228
      %v1533 = vand.u32 2147483647, %v1229
      %v1534 = vand.u32 2147483647, %v1230
      %v1535 = vand.u32 2147483647, %v1231
      %v1536 = vand.u32 2147483647, %v1232
      %v1537 = vand.u32 2147483647, %v1233
      %v1538 = vand.u32 2147483647, %v1234
      %v1539 = vand.u32 2147483647, %v1235
      %v1540 = vand.u32 2147483647, %v1236
      %v1541 = vand.u32 2147483647, %v1237
      %v1542 = vand.u32 2147483647, %v1238
      %v1543 = vand.u32 2147483647, %v1239
      %v1544 = vand.u32 2147483647, %v1240
      %v1545 = vand.u32 2147483647, %v1241
      %v1546 = vand.u32 2147483647, %v1242
      %v1547 = vand.u32 2147483647, %v1243
      %v1548 = vand.u32 2147483647, %v1244
      %v1549 = vand.u32 2147483647, %v1245
      %v1550 = vand.u32 2147483647, %v1246
      %v1551 = vand.u32 2147483647, %v1247
      %v1552 = vand.u32 2147483647, %v1248
      %v1553 = vand.u32 2147483647, %v1249
      %v1554 = vand.u32 2147483647, %v1250
      %v1555 = vand.u32 2147483647, %v1251
      %v1556 = vand.u32 2147483647, %v1252
      %v1557 = vand.u32 2147483647, %v1253
      %v1558 = vand.u32 2147483647, %v1254
      %v1559 = vand.u32 2147483647, %v1255
      %v1560 = vand.u32 2147483647, %v1256
      %v1561 = vld [vmem:[#allocation2] sm:$0xff]
      %vm1562 = vcmask 146432
      %v1563 = vsel %vm1562, %v649, -inf
      %v1564 = vsel %vm1562, %v650, -inf
      %v1565 = vmax.f32 %v1563, %v1564
      %v1566 = vsel %vm1562, %v651, -inf
      %v1567 = vmax.f32 %v1565, %v1566
      %v1568 = vsel %vm1562, %v652, -inf
      %v1569 = vmax.f32 %v1567, %v1568
      %v1570 = vsel %vm1562, %v653, -inf
      %v1571 = vmax.f32 %v1569, %v1570
      %v1572 = vsel %vm1562, %v654, -inf
      %v1573 = vmax.f32 %v1571, %v1572
      %v1574 = vsel %vm1562, %v655, -inf
      %v1575 = vmax.f32 %v1573, %v1574
      %v1576 = vsel %vm1562, %v656, -inf
      %v1577 = vmax.f32 %v1575, %v1576
      %v1578 = vsel %vm1562, %v657, -inf
      %v1579 = vmax.f32 %v1577, %v1578
      %v1580 = vsel %vm1562, %v658, -inf
      %v1581 = vmax.f32 %v1579, %v1580
      %v1582 = vsel %vm1562, %v659, -inf
      %v1583 = vmax.f32 %v1581, %v1582
      %v1584 = vsel %vm1562, %v660, -inf
      %v1585 = vmax.f32 %v1583, %v1584
      %v1586 = vsel %vm1562, %v661, -inf
      %v1587 = vmax.f32 %v1585, %v1586
      %v1588 = vsel %vm1562, %v662, -inf
      %v1589 = vmax.f32 %v1587, %v1588
      %v1590 = vsel %vm1562, %v663, -inf
      %v1591 = vmax.f32 %v1589, %v1590
      %v1592 = vsel %vm1562, %v664, -inf
      %v1593 = vmax.f32 %v1591, %v1592
      %v1594 = vsel %vm1562, %v665, -inf
      %v1595 = vmax.f32 %v1593, %v1594
      %v1596 = vsel %vm1562, %v666, -inf
      %v1597 = vmax.f32 %v1595, %v1596
      %v1598 = vsel %vm1562, %v667, -inf
      %v1599 = vmax.f32 %v1597, %v1598
      %v1600 = vsel %vm1562, %v668, -inf
      %v1601 = vmax.f32 %v1599, %v1600
      %v1602 = vsel %vm1562, %v669, -inf
      %v1603 = vmax.f32 %v1601, %v1602
      %v1604 = vsel %vm1562, %v670, -inf
      %v1605 = vmax.f32 %v1603, %v1604
      %v1606 = vsel %vm1562, %v671, -inf
      %v1607 = vmax.f32 %v1605, %v1606
      %v1608 = vsel %vm1562, %v672, -inf
      %v1609 = vmax.f32 %v1607, %v1608
      %v1610 = vsel %vm1562, %v673, -inf
      %v1611 = vmax.f32 %v1609, %v1610
      %v1612 = vsel %vm1562, %v674, -inf
      %v1613 = vmax.f32 %v1611, %v1612
      %v1614 = vsel %vm1562, %v675, -inf
      %v1615 = vmax.f32 %v1613, %v1614
      %v1616 = vsel %vm1562, %v676, -inf
      %v1617 = vmax.f32 %v1615, %v1616
      %v1618 = vsel %vm1562, %v677, -inf
      %v1619 = vmax.f32 %v1617, %v1618
      %v1620 = vsel %vm1562, %v678, -inf
      %v1621 = vmax.f32 %v1619, %v1620
      %v1622 = vsel %vm1562, %v679, -inf
      %v1623 = vmax.f32 %v1621, %v1622
      %v1624 = vsel %vm1562, %v680, -inf
      %v1625 = vmax.f32 %v1623, %v1624
      %v1626 = vsel %vm1562, %v681, -inf
      %v1627 = vmax.f32 %v1625, %v1626
      %v1628 = vsel %vm1562, %v682, -inf
      %v1629 = vmax.f32 %v1627, %v1628
      %v1630 = vsel %vm1562, %v683, -inf
      %v1631 = vmax.f32 %v1629, %v1630
      %v1632 = vsel %vm1562, %v684, -inf
      %v1633 = vmax.f32 %v1631, %v1632
      %v1634 = vsel %vm1562, %v685, -inf
      %v1635 = vmax.f32 %v1633, %v1634
      %vm1636 = vcmask 142336
      %v1637 = vsel %vm1636, %v686, -inf
      %v1638 = vmax.f32 %v1635, %v1637
      %v1639 = vrot.slane %v1638, 4
      %v1640 = vmax.f32 %v1638, %v1639
      %v1641 = vrot.slane %v1640, 2
      %v1642 = vmax.f32 %v1640, %v1641
      %v1643 = vrot.slane %v1642, 1
      %v1644 = vmax.f32 %v1642, %v1643
      %v1645 = vsel %vm1562, %v687, -inf
      %v1646 = vsel %vm1562, %v688, -inf
      %v1647 = vmax.f32 %v1645, %v1646
      %v1648 = vsel %vm1562, %v689, -inf
      %v1649 = vmax.f32 %v1647, %v1648
      %v1650 = vsel %vm1562, %v690, -inf
      %v1651 = vmax.f32 %v1649, %v1650
      %v1652 = vsel %vm1562, %v691, -inf
      %v1653 = vmax.f32 %v1651, %v1652
      %v1654 = vsel %vm1562, %v692, -inf
      %v1655 = vmax.f32 %v1653, %v1654
      %v1656 = vsel %vm1562, %v693, -inf
      %v1657 = vmax.f32 %v1655, %v1656
      %v1658 = vsel %vm1562, %v694, -inf
      %v1659 = vmax.f32 %v1657, %v1658
      %v1660 = vsel %vm1562, %v695, -inf
      %v1661 = vmax.f32 %v1659, %v1660
      %v1662 = vsel %vm1562, %v696, -inf
      %v1663 = vmax.f32 %v1661, %v1662
      %v1664 = vsel %vm1562, %v697, -inf
      %v1665 = vmax.f32 %v1663, %v1664
      %v1666 = vsel %vm1562, %v698, -inf
      %v1667 = vmax.f32 %v1665, %v1666
      %v1668 = vsel %vm1562, %v699, -inf
      %v1669 = vmax.f32 %v1667, %v1668
      %v1670 = vsel %vm1562, %v700, -inf
      %v1671 = vmax.f32 %v1669, %v1670
      %v1672 = vsel %vm1562, %v701, -inf
      %v1673 = vmax.f32 %v1671, %v1672
      %v1674 = vsel %vm1562, %v702, -inf
      %v1675 = vmax.f32 %v1673, %v1674
      %v1676 = vsel %vm1562, %v703, -inf
      %v1677 = vmax.f32 %v1675, %v1676
      %v1678 = vsel %vm1562, %v704, -inf
      %v1679 = vmax.f32 %v1677, %v1678
      %v1680 = vsel %vm1562, %v705, -inf
      %v1681 = vmax.f32 %v1679, %v1680
      %v1682 = vsel %vm1562, %v706, -inf
      %v1683 = vmax.f32 %v1681, %v1682
      %v1684 = vsel %vm1562, %v707, -inf
      %v1685 = vmax.f32 %v1683, %v1684
      %v1686 = vsel %vm1562, %v708, -inf
      %v1687 = vmax.f32 %v1685, %v1686
      %v1688 = vsel %vm1562, %v709, -inf
      %v1689 = vmax.f32 %v1687, %v1688
      %v1690 = vsel %vm1562, %v710, -inf
      %v1691 = vmax.f32 %v1689, %v1690
      %v1692 = vsel %vm1562, %v711, -inf
      %v1693 = vmax.f32 %v1691, %v1692
      %v1694 = vsel %vm1562, %v712, -inf
      %v1695 = vmax.f32 %v1693, %v1694
      %v1696 = vsel %vm1562, %v713, -inf
      %v1697 = vmax.f32 %v1695, %v1696
      %v1698 = vsel %vm1562, %v714, -inf
      %v1699 = vmax.f32 %v1697, %v1698
      %v1700 = vsel %vm1562, %v715, -inf
      %v1701 = vmax.f32 %v1699, %v1700
      %v1702 = vsel %vm1562, %v716, -inf
      %v1703 = vmax.f32 %v1701, %v1702
      %v1704 = vsel %vm1562, %v717, -inf
      %v1705 = vmax.f32 %v1703, %v1704
      %v1706 = vsel %vm1562, %v718, -inf
      %v1707 = vmax.f32 %v1705, %v1706
      %v1708 = vsel %vm1562, %v719, -inf
      %v1709 = vmax.f32 %v1707, %v1708
      %v1710 = vsel %vm1562, %v720, -inf
      %v1711 = vmax.f32 %v1709, %v1710
      %v1712 = vsel %vm1562, %v721, -inf
      %v1713 = vmax.f32 %v1711, %v1712
      %v1714 = vsel %vm1562, %v722, -inf
      %v1715 = vmax.f32 %v1713, %v1714
      %v1716 = vsel %vm1562, %v723, -inf
      %v1717 = vmax.f32 %v1715, %v1716
      %v1718 = vsel %vm1636, %v724, -inf
      %v1719 = vmax.f32 %v1717, %v1718
      %v1720 = vrot.slane %v1719, 4
      %v1721 = vmax.f32 %v1719, %v1720
      %v1722 = vrot.slane %v1721, 2
      %v1723 = vmax.f32 %v1721, %v1722
      %v1724 = vrot.slane %v1723, 1
      %v1725 = vmax.f32 %v1723, %v1724
      %v1726 = vsel %vm1562, %v725, -inf
      %v1727 = vsel %vm1562, %v726, -inf
      %v1728 = vmax.f32 %v1726, %v1727
      %v1729 = vsel %vm1562, %v727, -inf
      %v1730 = vmax.f32 %v1728, %v1729
      %v1731 = vsel %vm1562, %v728, -inf
      %v1732 = vmax.f32 %v1730, %v1731
      %v1733 = vsel %vm1562, %v729, -inf
      %v1734 = vmax.f32 %v1732, %v1733
      %v1735 = vsel %vm1562, %v730, -inf
      %v1736 = vmax.f32 %v1734, %v1735
      %v1737 = vsel %vm1562, %v731, -inf
      %v1738 = vmax.f32 %v1736, %v1737
      %v1739 = vsel %vm1562, %v732, -inf
      %v1740 = vmax.f32 %v1738, %v1739
      %v1741 = vsel %vm1562, %v733, -inf
      %v1742 = vmax.f32 %v1740, %v1741
      %v1743 = vsel %vm1562, %v734, -inf
      %v1744 = vmax.f32 %v1742, %v1743
      %v1745 = vsel %vm1562, %v735, -inf
      %v1746 = vmax.f32 %v1744, %v1745
      %v1747 = vsel %vm1562, %v736, -inf
      %v1748 = vmax.f32 %v1746, %v1747
      %v1749 = vsel %vm1562, %v737, -inf
      %v1750 = vmax.f32 %v1748, %v1749
      %v1751 = vsel %vm1562, %v738, -inf
      %v1752 = vmax.f32 %v1750, %v1751
      %v1753 = vsel %vm1562, %v739, -inf
      %v1754 = vmax.f32 %v1752, %v1753
      %v1755 = vsel %vm1562, %v740, -inf
      %v1756 = vmax.f32 %v1754, %v1755
      %v1757 = vsel %vm1562, %v741, -inf
      %v1758 = vmax.f32 %v1756, %v1757
      %v1759 = vsel %vm1562, %v742, -inf
      %v1760 = vmax.f32 %v1758, %v1759
      %v1761 = vsel %vm1562, %v743, -inf
      %v1762 = vmax.f32 %v1760, %v1761
      %v1763 = vsel %vm1562, %v744, -inf
      %v1764 = vmax.f32 %v1762, %v1763
      %v1765 = vsel %vm1562, %v745, -inf
      %v1766 = vmax.f32 %v1764, %v1765
      %v1767 = vsel %vm1562, %v746, -inf
      %v1768 = vmax.f32 %v1766, %v1767
      %v1769 = vsel %vm1562, %v747, -inf
      %v1770 = vmax.f32 %v1768, %v1769
      %v1771 = vsel %vm1562, %v748, -inf
      %v1772 = vmax.f32 %v1770, %v1771
      %v1773 = vsel %vm1562, %v749, -inf
      %v1774 = vmax.f32 %v1772, %v1773
      %v1775 = vsel %vm1562, %v750, -inf
      %v1776 = vmax.f32 %v1774, %v1775
      %v1777 = vsel %vm1562, %v751, -inf
      %v1778 = vmax.f32 %v1776, %v1777
      %v1779 = vsel %vm1562, %v752, -inf
      %v1780 = vmax.f32 %v1778, %v1779
      %v1781 = vsel %vm1562, %v753, -inf
      %v1782 = vmax.f32 %v1780, %v1781
      %v1783 = vsel %vm1562, %v754, -inf
      %v1784 = vmax.f32 %v1782, %v1783
      %v1785 = vsel %vm1562, %v755, -inf
      %v1786 = vmax.f32 %v1784, %v1785
      %v1787 = vsel %vm1562, %v756, -inf
      %v1788 = vmax.f32 %v1786, %v1787
      %v1789 = vsel %vm1562, %v757, -inf
      %v1790 = vmax.f32 %v1788, %v1789
      %v1791 = vsel %vm1562, %v758, -inf
      %v1792 = vmax.f32 %v1790, %v1791
      %v1793 = vsel %vm1562, %v759, -inf
      %v1794 = vmax.f32 %v1792, %v1793
      %v1795 = vsel %vm1562, %v760, -inf
      %v1796 = vmax.f32 %v1794, %v1795
      %v1797 = vsel %vm1562, %v761, -inf
      %v1798 = vmax.f32 %v1796, %v1797
      %v1799 = vsel %vm1636, %v762, -inf
      %v1800 = vmax.f32 %v1798, %v1799
      %v1801 = vrot.slane %v1800, 4
      %v1802 = vmax.f32 %v1800, %v1801
      %v1803 = vrot.slane %v1802, 2
      %v1804 = vmax.f32 %v1802, %v1803
      %v1805 = vrot.slane %v1804, 1
      %v1806 = vmax.f32 %v1804, %v1805
      %v1807 = vsel %vm1562, %v763, -inf
      %v1808 = vsel %vm1562, %v764, -inf
      %v1809 = vmax.f32 %v1807, %v1808
      %v1810 = vsel %vm1562, %v765, -inf
      %v1811 = vmax.f32 %v1809, %v1810
      %v1812 = vsel %vm1562, %v766, -inf
      %v1813 = vmax.f32 %v1811, %v1812
      %v1814 = vsel %vm1562, %v767, -inf
      %v1815 = vmax.f32 %v1813, %v1814
      %v1816 = vsel %vm1562, %v768, -inf
      %v1817 = vmax.f32 %v1815, %v1816
      %v1818 = vsel %vm1562, %v769, -inf
      %v1819 = vmax.f32 %v1817, %v1818
      %v1820 = vsel %vm1562, %v770, -inf
      %v1821 = vmax.f32 %v1819, %v1820
      %v1822 = vsel %vm1562, %v771, -inf
      %v1823 = vmax.f32 %v1821, %v1822
      %v1824 = vsel %vm1562, %v772, -inf
      %v1825 = vmax.f32 %v1823, %v1824
      %v1826 = vsel %vm1562, %v773, -inf
      %v1827 = vmax.f32 %v1825, %v1826
      %v1828 = vsel %vm1562, %v774, -inf
      %v1829 = vmax.f32 %v1827, %v1828
      %v1830 = vsel %vm1562, %v775, -inf
      %v1831 = vmax.f32 %v1829, %v1830
      %v1832 = vsel %vm1562, %v776, -inf
      %v1833 = vmax.f32 %v1831, %v1832
      %v1834 = vsel %vm1562, %v777, -inf
      %v1835 = vmax.f32 %v1833, %v1834
      %v1836 = vsel %vm1562, %v778, -inf
      %v1837 = vmax.f32 %v1835, %v1836
      %v1838 = vsel %vm1562, %v779, -inf
      %v1839 = vmax.f32 %v1837, %v1838
      %v1840 = vsel %vm1562, %v780, -inf
      %v1841 = vmax.f32 %v1839, %v1840
      %v1842 = vsel %vm1562, %v781, -inf
      %v1843 = vmax.f32 %v1841, %v1842
      %v1844 = vsel %vm1562, %v782, -inf
      %v1845 = vmax.f32 %v1843, %v1844
      %v1846 = vsel %vm1562, %v783, -inf
      %v1847 = vmax.f32 %v1845, %v1846
      %v1848 = vsel %vm1562, %v784, -inf
      %v1849 = vmax.f32 %v1847, %v1848
      %v1850 = vsel %vm1562, %v785, -inf
      %v1851 = vmax.f32 %v1849, %v1850
      %v1852 = vsel %vm1562, %v786, -inf
      %v1853 = vmax.f32 %v1851, %v1852
      %v1854 = vsel %vm1562, %v787, -inf
      %v1855 = vmax.f32 %v1853, %v1854
      %v1856 = vsel %vm1562, %v788, -inf
      %v1857 = vmax.f32 %v1855, %v1856
      %v1858 = vsel %vm1562, %v789, -inf
      %v1859 = vmax.f32 %v1857, %v1858
      %v1860 = vsel %vm1562, %v790, -inf
      %v1861 = vmax.f32 %v1859, %v1860
      %v1862 = vsel %vm1562, %v791, -inf
      %v1863 = vmax.f32 %v1861, %v1862
      %v1864 = vsel %vm1562, %v792, -inf
      %v1865 = vmax.f32 %v1863, %v1864
      %v1866 = vsel %vm1562, %v793, -inf
      %v1867 = vmax.f32 %v1865, %v1866
      %v1868 = vsel %vm1562, %v794, -inf
      %v1869 = vmax.f32 %v1867, %v1868
      %v1870 = vsel %vm1562, %v795, -inf
      %v1871 = vmax.f32 %v1869, %v1870
      %v1872 = vsel %vm1562, %v796, -inf
      %v1873 = vmax.f32 %v1871, %v1872
      %v1874 = vsel %vm1562, %v797, -inf
      %v1875 = vmax.f32 %v1873, %v1874
      %v1876 = vsel %vm1562, %v798, -inf
      %v1877 = vmax.f32 %v1875, %v1876
      %v1878 = vsel %vm1562, %v799, -inf
      %v1879 = vmax.f32 %v1877, %v1878
      %v1880 = vsel %vm1636, %v800, -inf
      %v1881 = vmax.f32 %v1879, %v1880
      %v1882 = vrot.slane %v1881, 4
      %v1883 = vmax.f32 %v1881, %v1882
      %v1884 = vrot.slane %v1883, 2
      %v1885 = vmax.f32 %v1883, %v1884
      %v1886 = vrot.slane %v1885, 1
      %v1887 = vmax.f32 %v1885, %v1886
      %v1888 = vsel %vm1562, %v801, -inf
      %v1889 = vsel %vm1562, %v802, -inf
      %v1890 = vmax.f32 %v1888, %v1889
      %v1891 = vsel %vm1562, %v803, -inf
      %v1892 = vmax.f32 %v1890, %v1891
      %v1893 = vsel %vm1562, %v804, -inf
      %v1894 = vmax.f32 %v1892, %v1893
      %v1895 = vsel %vm1562, %v805, -inf
      %v1896 = vmax.f32 %v1894, %v1895
      %v1897 = vsel %vm1562, %v806, -inf
      %v1898 = vmax.f32 %v1896, %v1897
      %v1899 = vsel %vm1562, %v807, -inf
      %v1900 = vmax.f32 %v1898, %v1899
      %v1901 = vsel %vm1562, %v808, -inf
      %v1902 = vmax.f32 %v1900, %v1901
      %v1903 = vsel %vm1562, %v809, -inf
      %v1904 = vmax.f32 %v1902, %v1903
      %v1905 = vsel %vm1562, %v810, -inf
      %v1906 = vmax.f32 %v1904, %v1905
      %v1907 = vsel %vm1562, %v811, -inf
      %v1908 = vmax.f32 %v1906, %v1907
      %v1909 = vsel %vm1562, %v812, -inf
      %v1910 = vmax.f32 %v1908, %v1909
      %v1911 = vsel %vm1562, %v813, -inf
      %v1912 = vmax.f32 %v1910, %v1911
      %v1913 = vsel %vm1562, %v814, -inf
      %v1914 = vmax.f32 %v1912, %v1913
      %v1915 = vsel %vm1562, %v815, -inf
      %v1916 = vmax.f32 %v1914, %v1915
      %v1917 = vsel %vm1562, %v816, -inf
      %v1918 = vmax.f32 %v1916, %v1917
      %v1919 = vsel %vm1562, %v817, -inf
      %v1920 = vmax.f32 %v1918, %v1919
      %v1921 = vsel %vm1562, %v818, -inf
      %v1922 = vmax.f32 %v1920, %v1921
      %v1923 = vsel %vm1562, %v819, -inf
      %v1924 = vmax.f32 %v1922, %v1923
      %v1925 = vsel %vm1562, %v820, -inf
      %v1926 = vmax.f32 %v1924, %v1925
      %v1927 = vsel %vm1562, %v821, -inf
      %v1928 = vmax.f32 %v1926, %v1927
      %v1929 = vsel %vm1562, %v822, -inf
      %v1930 = vmax.f32 %v1928, %v1929
      %v1931 = vsel %vm1562, %v823, -inf
      %v1932 = vmax.f32 %v1930, %v1931
      %v1933 = vsel %vm1562, %v824, -inf
      %v1934 = vmax.f32 %v1932, %v1933
      %v1935 = vsel %vm1562, %v825, -inf
      %v1936 = vmax.f32 %v1934, %v1935
      %v1937 = vsel %vm1562, %v826, -inf
      %v1938 = vmax.f32 %v1936, %v1937
      %v1939 = vsel %vm1562, %v827, -inf
      %v1940 = vmax.f32 %v1938, %v1939
      %v1941 = vsel %vm1562, %v828, -inf
      %v1942 = vmax.f32 %v1940, %v1941
      %v1943 = vsel %vm1562, %v829, -inf
      %v1944 = vmax.f32 %v1942, %v1943
      %v1945 = vsel %vm1562, %v830, -inf
      %v1946 = vmax.f32 %v1944, %v1945
      %v1947 = vsel %vm1562, %v831, -inf
      %v1948 = vmax.f32 %v1946, %v1947
      %v1949 = vsel %vm1562, %v832, -inf
      %v1950 = vmax.f32 %v1948, %v1949
      %v1951 = vsel %vm1562, %v833, -inf
      %v1952 = vmax.f32 %v1950, %v1951
      %v1953 = vsel %vm1562, %v834, -inf
      %v1954 = vmax.f32 %v1952, %v1953
      %v1955 = vsel %vm1562, %v835, -inf
      %v1956 = vmax.f32 %v1954, %v1955
      %v1957 = vsel %vm1562, %v836, -inf
      %v1958 = vmax.f32 %v1956, %v1957
      %v1959 = vsel %vm1562, %v837, -inf
      %v1960 = vmax.f32 %v1958, %v1959
      %v1961 = vsel %vm1636, %v838, -inf
      %v1962 = vmax.f32 %v1960, %v1961
      %v1963 = vrot.slane %v1962, 4
      %v1964 = vmax.f32 %v1962, %v1963
      %v1965 = vrot.slane %v1964, 2
      %v1966 = vmax.f32 %v1964, %v1965
      %v1967 = vrot.slane %v1966, 1
      %v1968 = vmax.f32 %v1966, %v1967
      %v1969 = vsel %vm1562, %v839, -inf
      %v1970 = vsel %vm1562, %v840, -inf
      %v1971 = vmax.f32 %v1969, %v1970
      %v1972 = vsel %vm1562, %v841, -inf
      %v1973 = vmax.f32 %v1971, %v1972
      %v1974 = vsel %vm1562, %v842, -inf
      %v1975 = vmax.f32 %v1973, %v1974
      %v1976 = vsel %vm1562, %v843, -inf
      %v1977 = vmax.f32 %v1975, %v1976
      %v1978 = vsel %vm1562, %v844, -inf
      %v1979 = vmax.f32 %v1977, %v1978
      %v1980 = vsel %vm1562, %v845, -inf
      %v1981 = vmax.f32 %v1979, %v1980
      %v1982 = vsel %vm1562, %v846, -inf
      %v1983 = vmax.f32 %v1981, %v1982
      %v1984 = vsel %vm1562, %v847, -inf
      %v1985 = vmax.f32 %v1983, %v1984
      %v1986 = vsel %vm1562, %v848, -inf
      %v1987 = vmax.f32 %v1985, %v1986
      %v1988 = vsel %vm1562, %v849, -inf
      %v1989 = vmax.f32 %v1987, %v1988
      %v1990 = vsel %vm1562, %v850, -inf
      %v1991 = vmax.f32 %v1989, %v1990
      %v1992 = vsel %vm1562, %v851, -inf
      %v1993 = vmax.f32 %v1991, %v1992
      %v1994 = vsel %vm1562, %v852, -inf
      %v1995 = vmax.f32 %v1993, %v1994
      %v1996 = vsel %vm1562, %v853, -inf
      %v1997 = vmax.f32 %v1995, %v1996
      %v1998 = vsel %vm1562, %v854, -inf
      %v1999 = vmax.f32 %v1997, %v1998
      %v2000 = vsel %vm1562, %v855, -inf
      %v2001 = vmax.f32 %v1999, %v2000
      %v2002 = vsel %vm1562, %v856, -inf
      %v2003 = vmax.f32 %v2001, %v2002
      %v2004 = vsel %vm1562, %v857, -inf
      %v2005 = vmax.f32 %v2003, %v2004
      %v2006 = vsel %vm1562, %v858, -inf
      %v2007 = vmax.f32 %v2005, %v2006
      %v2008 = vsel %vm1562, %v859, -inf
      %v2009 = vmax.f32 %v2007, %v2008
      %v2010 = vsel %vm1562, %v860, -inf
      %v2011 = vmax.f32 %v2009, %v2010
      %v2012 = vsel %vm1562, %v861, -inf
      %v2013 = vmax.f32 %v2011, %v2012
      %v2014 = vsel %vm1562, %v862, -inf
      %v2015 = vmax.f32 %v2013, %v2014
      %v2016 = vsel %vm1562, %v863, -inf
      %v2017 = vmax.f32 %v2015, %v2016
      %v2018 = vsel %vm1562, %v864, -inf
      %v2019 = vmax.f32 %v2017, %v2018
      %v2020 = vsel %vm1562, %v865, -inf
      %v2021 = vmax.f32 %v2019, %v2020
      %v2022 = vsel %vm1562, %v866, -inf
      %v2023 = vmax.f32 %v2021, %v2022
      %v2024 = vsel %vm1562, %v867, -inf
      %v2025 = vmax.f32 %v2023, %v2024
      %v2026 = vsel %vm1562, %v868, -inf
      %v2027 = vmax.f32 %v2025, %v2026
      %v2028 = vsel %vm1562, %v869, -inf
      %v2029 = vmax.f32 %v2027, %v2028
      %v2030 = vsel %vm1562, %v870, -inf
      %v2031 = vmax.f32 %v2029, %v2030
      %v2032 = vsel %vm1562, %v871, -inf
      %v2033 = vmax.f32 %v2031, %v2032
      %v2034 = vsel %vm1562, %v872, -inf
      %v2035 = vmax.f32 %v2033, %v2034
      %v2036 = vsel %vm1562, %v873, -inf
      %v2037 = vmax.f32 %v2035, %v2036
      %v2038 = vsel %vm1562, %v874, -inf
      %v2039 = vmax.f32 %v2037, %v2038
      %v2040 = vsel %vm1562, %v875, -inf
      %v2041 = vmax.f32 %v2039, %v2040
      %v2042 = vsel %vm1636, %v876, -inf
      %v2043 = vmax.f32 %v2041, %v2042
      %v2044 = vrot.slane %v2043, 4
      %v2045 = vmax.f32 %v2043, %v2044
      %v2046 = vrot.slane %v2045, 2
      %v2047 = vmax.f32 %v2045, %v2046
      %v2048 = vrot.slane %v2047, 1
      %v2049 = vmax.f32 %v2047, %v2048
      %v2050 = vsel %vm1562, %v877, -inf
      %v2051 = vsel %vm1562, %v878, -inf
      %v2052 = vmax.f32 %v2050, %v2051
      %v2053 = vsel %vm1562, %v879, -inf
      %v2054 = vmax.f32 %v2052, %v2053
      %v2055 = vsel %vm1562, %v880, -inf
      %v2056 = vmax.f32 %v2054, %v2055
      %v2057 = vsel %vm1562, %v881, -inf
      %v2058 = vmax.f32 %v2056, %v2057
      %v2059 = vsel %vm1562, %v882, -inf
      %v2060 = vmax.f32 %v2058, %v2059
      %v2061 = vsel %vm1562, %v883, -inf
      %v2062 = vmax.f32 %v2060, %v2061
      %v2063 = vsel %vm1562, %v884, -inf
      %v2064 = vmax.f32 %v2062, %v2063
      %v2065 = vsel %vm1562, %v885, -inf
      %v2066 = vmax.f32 %v2064, %v2065
      %v2067 = vsel %vm1562, %v886, -inf
      %v2068 = vmax.f32 %v2066, %v2067
      %v2069 = vsel %vm1562, %v887, -inf
      %v2070 = vmax.f32 %v2068, %v2069
      %v2071 = vsel %vm1562, %v888, -inf
      %v2072 = vmax.f32 %v2070, %v2071
      %v2073 = vsel %vm1562, %v889, -inf
      %v2074 = vmax.f32 %v2072, %v2073
      %v2075 = vsel %vm1562, %v890, -inf
      %v2076 = vmax.f32 %v2074, %v2075
      %v2077 = vsel %vm1562, %v891, -inf
      %v2078 = vmax.f32 %v2076, %v2077
      %v2079 = vsel %vm1562, %v892, -inf
      %v2080 = vmax.f32 %v2078, %v2079
      %v2081 = vsel %vm1562, %v893, -inf
      %v2082 = vmax.f32 %v2080, %v2081
      %v2083 = vsel %vm1562, %v894, -inf
      %v2084 = vmax.f32 %v2082, %v2083
      %v2085 = vsel %vm1562, %v895, -inf
      %v2086 = vmax.f32 %v2084, %v2085
      %v2087 = vsel %vm1562, %v896, -inf
      %v2088 = vmax.f32 %v2086, %v2087
      %v2089 = vsel %vm1562, %v897, -inf
      %v2090 = vmax.f32 %v2088, %v2089
      %v2091 = vsel %vm1562, %v898, -inf
      %v2092 = vmax.f32 %v2090, %v2091
      %v2093 = vsel %vm1562, %v899, -inf
      %v2094 = vmax.f32 %v2092, %v2093
      %v2095 = vsel %vm1562, %v900, -inf
      %v2096 = vmax.f32 %v2094, %v2095
      %v2097 = vsel %vm1562, %v901, -inf
      %v2098 = vmax.f32 %v2096, %v2097
      %v2099 = vsel %vm1562, %v902, -inf
      %v2100 = vmax.f32 %v2098, %v2099
      %v2101 = vsel %vm1562, %v903, -inf
      %v2102 = vmax.f32 %v2100, %v2101
      %v2103 = vsel %vm1562, %v904, -inf
      %v2104 = vmax.f32 %v2102, %v2103
      %v2105 = vsel %vm1562, %v905, -inf
      %v2106 = vmax.f32 %v2104, %v2105
      %v2107 = vsel %vm1562, %v906, -inf
      %v2108 = vmax.f32 %v2106, %v2107
      %v2109 = vsel %vm1562, %v907, -inf
      %v2110 = vmax.f32 %v2108, %v2109
      %v2111 = vsel %vm1562, %v908, -inf
      %v2112 = vmax.f32 %v2110, %v2111
      %v2113 = vsel %vm1562, %v909, -inf
      %v2114 = vmax.f32 %v2112, %v2113
      %v2115 = vsel %vm1562, %v910, -inf
      %v2116 = vmax.f32 %v2114, %v2115
      %v2117 = vsel %vm1562, %v911, -inf
      %v2118 = vmax.f32 %v2116, %v2117
      %v2119 = vsel %vm1562, %v912, -inf
      %v2120 = vmax.f32 %v2118, %v2119
      %v2121 = vsel %vm1562, %v913, -inf
      %v2122 = vmax.f32 %v2120, %v2121
      %v2123 = vsel %vm1636, %v914, -inf
      %v2124 = vmax.f32 %v2122, %v2123
      %v2125 = vrot.slane %v2124, 4
      %v2126 = vmax.f32 %v2124, %v2125
      %v2127 = vrot.slane %v2126, 2
      %v2128 = vmax.f32 %v2126, %v2127
      %v2129 = vrot.slane %v2128, 1
      %v2130 = vmax.f32 %v2128, %v2129
      %v2131 = vsel %vm1562, %v915, -inf
      %v2132 = vsel %vm1562, %v916, -inf
      %v2133 = vmax.f32 %v2131, %v2132
      %v2134 = vsel %vm1562, %v917, -inf
      %v2135 = vmax.f32 %v2133, %v2134
      %v2136 = vsel %vm1562, %v918, -inf
      %v2137 = vmax.f32 %v2135, %v2136
      %v2138 = vsel %vm1562, %v919, -inf
      %v2139 = vmax.f32 %v2137, %v2138
      %v2140 = vsel %vm1562, %v920, -inf
      %v2141 = vmax.f32 %v2139, %v2140
      %v2142 = vsel %vm1562, %v921, -inf
      %v2143 = vmax.f32 %v2141, %v2142
      %v2144 = vsel %vm1562, %v922, -inf
      %v2145 = vmax.f32 %v2143, %v2144
      %v2146 = vsel %vm1562, %v923, -inf
      %v2147 = vmax.f32 %v2145, %v2146
      %v2148 = vsel %vm1562, %v924, -inf
      %v2149 = vmax.f32 %v2147, %v2148
      %v2150 = vsel %vm1562, %v925, -inf
      %v2151 = vmax.f32 %v2149, %v2150
      %v2152 = vsel %vm1562, %v926, -inf
      %v2153 = vmax.f32 %v2151, %v2152
      %v2154 = vsel %vm1562, %v927, -inf
      %v2155 = vmax.f32 %v2153, %v2154
      %v2156 = vsel %vm1562, %v928, -inf
      %v2157 = vmax.f32 %v2155, %v2156
      %v2158 = vsel %vm1562, %v929, -inf
      %v2159 = vmax.f32 %v2157, %v2158
      %v2160 = vsel %vm1562, %v930, -inf
      %v2161 = vmax.f32 %v2159, %v2160
      %v2162 = vsel %vm1562, %v931, -inf
      %v2163 = vmax.f32 %v2161, %v2162
      %v2164 = vsel %vm1562, %v932, -inf
      %v2165 = vmax.f32 %v2163, %v2164
      %v2166 = vsel %vm1562, %v933, -inf
      %v2167 = vmax.f32 %v2165, %v2166
      %v2168 = vsel %vm1562, %v934, -inf
      %v2169 = vmax.f32 %v2167, %v2168
      %v2170 = vsel %vm1562, %v935, -inf
      %v2171 = vmax.f32 %v2169, %v2170
      %v2172 = vsel %vm1562, %v936, -inf
      %v2173 = vmax.f32 %v2171, %v2172
      %v2174 = vsel %vm1562, %v937, -inf
      %v2175 = vmax.f32 %v2173, %v2174
      %v2176 = vsel %vm1562, %v938, -inf
      %v2177 = vmax.f32 %v2175, %v2176
      %v2178 = vsel %vm1562, %v939, -inf
      %v2179 = vmax.f32 %v2177, %v2178
      %v2180 = vsel %vm1562, %v940, -inf
      %v2181 = vmax.f32 %v2179, %v2180
      %v2182 = vsel %vm1562, %v941, -inf
      %v2183 = vmax.f32 %v2181, %v2182
      %v2184 = vsel %vm1562, %v942, -inf
      %v2185 = vmax.f32 %v2183, %v2184
      %v2186 = vsel %vm1562, %v943, -inf
      %v2187 = vmax.f32 %v2185, %v2186
      %v2188 = vsel %vm1562, %v944, -inf
      %v2189 = vmax.f32 %v2187, %v2188
      %v2190 = vsel %vm1562, %v945, -inf
      %v2191 = vmax.f32 %v2189, %v2190
      %v2192 = vsel %vm1562, %v946, -inf
      %v2193 = vmax.f32 %v2191, %v2192
      %v2194 = vsel %vm1562, %v947, -inf
      %v2195 = vmax.f32 %v2193, %v2194
      %v2196 = vsel %vm1562, %v948, -inf
      %v2197 = vmax.f32 %v2195, %v2196
      %v2198 = vsel %vm1562, %v949, -inf
      %v2199 = vmax.f32 %v2197, %v2198
      %v2200 = vsel %vm1562, %v950, -inf
      %v2201 = vmax.f32 %v2199, %v2200
      %v2202 = vsel %vm1562, %v951, -inf
      %v2203 = vmax.f32 %v2201, %v2202
      %v2204 = vsel %vm1636, %v952, -inf
      %v2205 = vmax.f32 %v2203, %v2204
      %v2206 = vrot.slane %v2205, 4
      %v2207 = vmax.f32 %v2205, %v2206
      %v2208 = vrot.slane %v2207, 2
      %v2209 = vmax.f32 %v2207, %v2208
      %v2210 = vrot.slane %v2209, 1
      %v2211 = vmax.f32 %v2209, %v2210
      %vm2220 = vcmask 1041409
      %v2221 = vsel %vm2220, %v1725, %v1644
      %vm2222 = vcmask 1042434
      %v2223 = vsel %vm2222, %v1806, %v2221
      %vm2224 = vcmask 1043459
      %v2225 = vsel %vm2224, %v1887, %v2223
      %vm2226 = vcmask 1044484
      %v2227 = vsel %vm2226, %v1968, %v2225
      %vm2228 = vcmask 1045509
      %v2229 = vsel %vm2228, %v2049, %v2227
      %vm2230 = vcmask 1046534
      %v2231 = vsel %vm2230, %v2130, %v2229
      %vm2232 = vcmask 1047559
      %v2233 = vsel %vm2232, %v2211, %v2231
      %v2235 = vmax.f32 %v1561, %v2233
      %2236 = vst.msk [vmem:[#allocation2] sm:$0xff] %vm1562, %v2235
      %v2237 = vld [vmem:[#allocation3] sm:$0xff]
      %v2238 = vsel %vm1562, %v1257, -inf
      %v2239 = vsel %vm1562, %v1258, -inf
      %v2240 = vmax.f32 %v2238, %v2239
      %v2241 = vsel %vm1562, %v1259, -inf
      %v2242 = vmax.f32 %v2240, %v2241
      %v2243 = vsel %vm1562, %v1260, -inf
      %v2244 = vmax.f32 %v2242, %v2243
      %v2245 = vsel %vm1562, %v1261, -inf
      %v2246 = vmax.f32 %v2244, %v2245
      %v2247 = vsel %vm1562, %v1262, -inf
      %v2248 = vmax.f32 %v2246, %v2247
      %v2249 = vsel %vm1562, %v1263, -inf
      %v2250 = vmax.f32 %v2248, %v2249
      %v2251 = vsel %vm1562, %v1264, -inf
      %v2252 = vmax.f32 %v2250, %v2251
      %v2253 = vsel %vm1562, %v1265, -inf
      %v2254 = vmax.f32 %v2252, %v2253
      %v2255 = vsel %vm1562, %v1266, -inf
      %v2256 = vmax.f32 %v2254, %v2255
      %v2257 = vsel %vm1562, %v1267, -inf
      %v2258 = vmax.f32 %v2256, %v2257
      %v2259 = vsel %vm1562, %v1268, -inf
      %v2260 = vmax.f32 %v2258, %v2259
      %v2261 = vsel %vm1562, %v1269, -inf
      %v2262 = vmax.f32 %v2260, %v2261
      %v2263 = vsel %vm1562, %v1270, -inf
      %v2264 = vmax.f32 %v2262, %v2263
      %v2265 = vsel %vm1562, %v1271, -inf
      %v2266 = vmax.f32 %v2264, %v2265
      %v2267 = vsel %vm1562, %v1272, -inf
      %v2268 = vmax.f32 %v2266, %v2267
      %v2269 = vsel %vm1562, %v1273, -inf
      %v2270 = vmax.f32 %v2268, %v2269
      %v2271 = vsel %vm1562, %v1274, -inf
      %v2272 = vmax.f32 %v2270, %v2271
      %v2273 = vsel %vm1562, %v1275, -inf
      %v2274 = vmax.f32 %v2272, %v2273
      %v2275 = vsel %vm1562, %v1276, -inf
      %v2276 = vmax.f32 %v2274, %v2275
      %v2277 = vsel %vm1562, %v1277, -inf
      %v2278 = vmax.f32 %v2276, %v2277
      %v2279 = vsel %vm1562, %v1278, -inf
      %v2280 = vmax.f32 %v2278, %v2279
      %v2281 = vsel %vm1562, %v1279, -inf
      %v2282 = vmax.f32 %v2280, %v2281
      %v2283 = vsel %vm1562, %v1280, -inf
      %v2284 = vmax.f32 %v2282, %v2283
      %v2285 = vsel %vm1562, %v1281, -inf
      %v2286 = vmax.f32 %v2284, %v2285
      %v2287 = vsel %vm1562, %v1282, -inf
      %v2288 = vmax.f32 %v2286, %v2287
      %v2289 = vsel %vm1562, %v1283, -inf
      %v2290 = vmax.f32 %v2288, %v2289
      %v2291 = vsel %vm1562, %v1284, -inf
      %v2292 = vmax.f32 %v2290, %v2291
      %v2293 = vsel %vm1562, %v1285, -inf
      %v2294 = vmax.f32 %v2292, %v2293
      %v2295 = vsel %vm1562, %v1286, -inf
      %v2296 = vmax.f32 %v2294, %v2295
      %v2297 = vsel %vm1562, %v1287, -inf
      %v2298 = vmax.f32 %v2296, %v2297
      %v2299 = vsel %vm1562, %v1288, -inf
      %v2300 = vmax.f32 %v2298, %v2299
      %v2301 = vsel %vm1562, %v1289, -inf
      %v2302 = vmax.f32 %v2300, %v2301
      %v2303 = vsel %vm1562, %v1290, -inf
      %v2304 = vmax.f32 %v2302, %v2303
      %v2305 = vsel %vm1562, %v1291, -inf
      %v2306 = vmax.f32 %v2304, %v2305
      %v2307 = vsel %vm1562, %v1292, -inf
      %v2308 = vmax.f32 %v2306, %v2307
      %v2309 = vsel %vm1562, %v1293, -inf
      %v2310 = vmax.f32 %v2308, %v2309
      %v2311 = vsel %vm1636, %v1294, -inf
      %v2312 = vmax.f32 %v2310, %v2311
      %v2313 = vrot.slane %v2312, 4
      %v2314 = vmax.f32 %v2312, %v2313
      %v2315 = vrot.slane %v2314, 2
      %v2316 = vmax.f32 %v2314, %v2315
      %v2317 = vrot.slane %v2316, 1
      %v2318 = vmax.f32 %v2316, %v2317
      %v2319 = vsel %vm1562, %v1295, -inf
      %v2320 = vsel %vm1562, %v1296, -inf
      %v2321 = vmax.f32 %v2319, %v2320
      %v2322 = vsel %vm1562, %v1297, -inf
      %v2323 = vmax.f32 %v2321, %v2322
      %v2324 = vsel %vm1562, %v1298, -inf
      %v2325 = vmax.f32 %v2323, %v2324
      %v2326 = vsel %vm1562, %v1299, -inf
      %v2327 = vmax.f32 %v2325, %v2326
      %v2328 = vsel %vm1562, %v1300, -inf
      %v2329 = vmax.f32 %v2327, %v2328
      %v2330 = vsel %vm1562, %v1301, -inf
      %v2331 = vmax.f32 %v2329, %v2330
      %v2332 = vsel %vm1562, %v1302, -inf
      %v2333 = vmax.f32 %v2331, %v2332
      %v2334 = vsel %vm1562, %v1303, -inf
      %v2335 = vmax.f32 %v2333, %v2334
      %v2336 = vsel %vm1562, %v1304, -inf
      %v2337 = vmax.f32 %v2335, %v2336
      %v2338 = vsel %vm1562, %v1305, -inf
      %v2339 = vmax.f32 %v2337, %v2338
      %v2340 = vsel %vm1562, %v1306, -inf
      %v2341 = vmax.f32 %v2339, %v2340
      %v2342 = vsel %vm1562, %v1307, -inf
      %v2343 = vmax.f32 %v2341, %v2342
      %v2344 = vsel %vm1562, %v1308, -inf
      %v2345 = vmax.f32 %v2343, %v2344
      %v2346 = vsel %vm1562, %v1309, -inf
      %v2347 = vmax.f32 %v2345, %v2346
      %v2348 = vsel %vm1562, %v1310, -inf
      %v2349 = vmax.f32 %v2347, %v2348
      %v2350 = vsel %vm1562, %v1311, -inf
      %v2351 = vmax.f32 %v2349, %v2350
      %v2352 = vsel %vm1562, %v1312, -inf
      %v2353 = vmax.f32 %v2351, %v2352
      %v2354 = vsel %vm1562, %v1313, -inf
      %v2355 = vmax.f32 %v2353, %v2354
      %v2356 = vsel %vm1562, %v1314, -inf
      %v2357 = vmax.f32 %v2355, %v2356
      %v2358 = vsel %vm1562, %v1315, -inf
      %v2359 = vmax.f32 %v2357, %v2358
      %v2360 = vsel %vm1562, %v1316, -inf
      %v2361 = vmax.f32 %v2359, %v2360
      %v2362 = vsel %vm1562, %v1317, -inf
      %v2363 = vmax.f32 %v2361, %v2362
      %v2364 = vsel %vm1562, %v1318, -inf
      %v2365 = vmax.f32 %v2363, %v2364
      %v2366 = vsel %vm1562, %v1319, -inf
      %v2367 = vmax.f32 %v2365, %v2366
      %v2368 = vsel %vm1562, %v1320, -inf
      %v2369 = vmax.f32 %v2367, %v2368
      %v2370 = vsel %vm1562, %v1321, -inf
      %v2371 = vmax.f32 %v2369, %v2370
      %v2372 = vsel %vm1562, %v1322, -inf
      %v2373 = vmax.f32 %v2371, %v2372
      %v2374 = vsel %vm1562, %v1323, -inf
      %v2375 = vmax.f32 %v2373, %v2374
      %v2376 = vsel %vm1562, %v1324, -inf
      %v2377 = vmax.f32 %v2375, %v2376
      %v2378 = vsel %vm1562, %v1325, -inf
      %v2379 = vmax.f32 %v2377, %v2378
      %v2380 = vsel %vm1562, %v1326, -inf
      %v2381 = vmax.f32 %v2379, %v2380
      %v2382 = vsel %vm1562, %v1327, -inf
      %v2383 = vmax.f32 %v2381, %v2382
      %v2384 = vsel %vm1562, %v1328, -inf
      %v2385 = vmax.f32 %v2383, %v2384
      %v2386 = vsel %vm1562, %v1329, -inf
      %v2387 = vmax.f32 %v2385, %v2386
      %v2388 = vsel %vm1562, %v1330, -inf
      %v2389 = vmax.f32 %v2387, %v2388
      %v2390 = vsel %vm1562, %v1331, -inf
      %v2391 = vmax.f32 %v2389, %v2390
      %v2392 = vsel %vm1636, %v1332, -inf
      %v2393 = vmax.f32 %v2391, %v2392
      %v2394 = vrot.slane %v2393, 4
      %v2395 = vmax.f32 %v2393, %v2394
      %v2396 = vrot.slane %v2395, 2
      %v2397 = vmax.f32 %v2395, %v2396
      %v2398 = vrot.slane %v2397, 1
      %v2399 = vmax.f32 %v2397, %v2398
      %v2400 = vsel %vm1562, %v1333, -inf
      %v2401 = vsel %vm1562, %v1334, -inf
      %v2402 = vmax.f32 %v2400, %v2401
      %v2403 = vsel %vm1562, %v1335, -inf
      %v2404 = vmax.f32 %v2402, %v2403
      %v2405 = vsel %vm1562, %v1336, -inf
      %v2406 = vmax.f32 %v2404, %v2405
      %v2407 = vsel %vm1562, %v1337, -inf
      %v2408 = vmax.f32 %v2406, %v2407
      %v2409 = vsel %vm1562, %v1338, -inf
      %v2410 = vmax.f32 %v2408, %v2409
      %v2411 = vsel %vm1562, %v1339, -inf
      %v2412 = vmax.f32 %v2410, %v2411
      %v2413 = vsel %vm1562, %v1340, -inf
      %v2414 = vmax.f32 %v2412, %v2413
      %v2415 = vsel %vm1562, %v1341, -inf
      %v2416 = vmax.f32 %v2414, %v2415
      %v2417 = vsel %vm1562, %v1342, -inf
      %v2418 = vmax.f32 %v2416, %v2417
      %v2419 = vsel %vm1562, %v1343, -inf
      %v2420 = vmax.f32 %v2418, %v2419
      %v2421 = vsel %vm1562, %v1344, -inf
      %v2422 = vmax.f32 %v2420, %v2421
      %v2423 = vsel %vm1562, %v1345, -inf
      %v2424 = vmax.f32 %v2422, %v2423
      %v2425 = vsel %vm1562, %v1346, -inf
      %v2426 = vmax.f32 %v2424, %v2425
      %v2427 = vsel %vm1562, %v1347, -inf
      %v2428 = vmax.f32 %v2426, %v2427
      %v2429 = vsel %vm1562, %v1348, -inf
      %v2430 = vmax.f32 %v2428, %v2429
      %v2431 = vsel %vm1562, %v1349, -inf
      %v2432 = vmax.f32 %v2430, %v2431
      %v2433 = vsel %vm1562, %v1350, -inf
      %v2434 = vmax.f32 %v2432, %v2433
      %v2435 = vsel %vm1562, %v1351, -inf
      %v2436 = vmax.f32 %v2434, %v2435
      %v2437 = vsel %vm1562, %v1352, -inf
      %v2438 = vmax.f32 %v2436, %v2437
      %v2439 = vsel %vm1562, %v1353, -inf
      %v2440 = vmax.f32 %v2438, %v2439
      %v2441 = vsel %vm1562, %v1354, -inf
      %v2442 = vmax.f32 %v2440, %v2441
      %v2443 = vsel %vm1562, %v1355, -inf
      %v2444 = vmax.f32 %v2442, %v2443
      %v2445 = vsel %vm1562, %v1356, -inf
      %v2446 = vmax.f32 %v2444, %v2445
      %v2447 = vsel %vm1562, %v1357, -inf
      %v2448 = vmax.f32 %v2446, %v2447
      %v2449 = vsel %vm1562, %v1358, -inf
      %v2450 = vmax.f32 %v2448, %v2449
      %v2451 = vsel %vm1562, %v1359, -inf
      %v2452 = vmax.f32 %v2450, %v2451
      %v2453 = vsel %vm1562, %v1360, -inf
      %v2454 = vmax.f32 %v2452, %v2453
      %v2455 = vsel %vm1562, %v1361, -inf
      %v2456 = vmax.f32 %v2454, %v2455
      %v2457 = vsel %vm1562, %v1362, -inf
      %v2458 = vmax.f32 %v2456, %v2457
      %v2459 = vsel %vm1562, %v1363, -inf
      %v2460 = vmax.f32 %v2458, %v2459
      %v2461 = vsel %vm1562, %v1364, -inf
      %v2462 = vmax.f32 %v2460, %v2461
      %v2463 = vsel %vm1562, %v1365, -inf
      %v2464 = vmax.f32 %v2462, %v2463
      %v2465 = vsel %vm1562, %v1366, -inf
      %v2466 = vmax.f32 %v2464, %v2465
      %v2467 = vsel %vm1562, %v1367, -inf
      %v2468 = vmax.f32 %v2466, %v2467
      %v2469 = vsel %vm1562, %v1368, -inf
      %v2470 = vmax.f32 %v2468, %v2469
      %v2471 = vsel %vm1562, %v1369, -inf
      %v2472 = vmax.f32 %v2470, %v2471
      %v2473 = vsel %vm1636, %v1370, -inf
      %v2474 = vmax.f32 %v2472, %v2473
      %v2475 = vrot.slane %v2474, 4
      %v2476 = vmax.f32 %v2474, %v2475
      %v2477 = vrot.slane %v2476, 2
      %v2478 = vmax.f32 %v2476, %v2477
      %v2479 = vrot.slane %v2478, 1
      %v2480 = vmax.f32 %v2478, %v2479
      %v2481 = vsel %vm1562, %v1371, -inf
      %v2482 = vsel %vm1562, %v1372, -inf
      %v2483 = vmax.f32 %v2481, %v2482
      %v2484 = vsel %vm1562, %v1373, -inf
      %v2485 = vmax.f32 %v2483, %v2484
      %v2486 = vsel %vm1562, %v1374, -inf
      %v2487 = vmax.f32 %v2485, %v2486
      %v2488 = vsel %vm1562, %v1375, -inf
      %v2489 = vmax.f32 %v2487, %v2488
      %v2490 = vsel %vm1562, %v1376, -inf
      %v2491 = vmax.f32 %v2489, %v2490
      %v2492 = vsel %vm1562, %v1377, -inf
      %v2493 = vmax.f32 %v2491, %v2492
      %v2494 = vsel %vm1562, %v1378, -inf
      %v2495 = vmax.f32 %v2493, %v2494
      %v2496 = vsel %vm1562, %v1379, -inf
      %v2497 = vmax.f32 %v2495, %v2496
      %v2498 = vsel %vm1562, %v1380, -inf
      %v2499 = vmax.f32 %v2497, %v2498
      %v2500 = vsel %vm1562, %v1381, -inf
      %v2501 = vmax.f32 %v2499, %v2500
      %v2502 = vsel %vm1562, %v1382, -inf
      %v2503 = vmax.f32 %v2501, %v2502
      %v2504 = vsel %vm1562, %v1383, -inf
      %v2505 = vmax.f32 %v2503, %v2504
      %v2506 = vsel %vm1562, %v1384, -inf
      %v2507 = vmax.f32 %v2505, %v2506
      %v2508 = vsel %vm1562, %v1385, -inf
      %v2509 = vmax.f32 %v2507, %v2508
      %v2510 = vsel %vm1562, %v1386, -inf
      %v2511 = vmax.f32 %v2509, %v2510
      %v2512 = vsel %vm1562, %v1387, -inf
      %v2513 = vmax.f32 %v2511, %v2512
      %v2514 = vsel %vm1562, %v1388, -inf
      %v2515 = vmax.f32 %v2513, %v2514
      %v2516 = vsel %vm1562, %v1389, -inf
      %v2517 = vmax.f32 %v2515, %v2516
      %v2518 = vsel %vm1562, %v1390, -inf
      %v2519 = vmax.f32 %v2517, %v2518
      %v2520 = vsel %vm1562, %v1391, -inf
      %v2521 = vmax.f32 %v2519, %v2520
      %v2522 = vsel %vm1562, %v1392, -inf
      %v2523 = vmax.f32 %v2521, %v2522
      %v2524 = vsel %vm1562, %v1393, -inf
      %v2525 = vmax.f32 %v2523, %v2524
      %v2526 = vsel %vm1562, %v1394, -inf
      %v2527 = vmax.f32 %v2525, %v2526
      %v2528 = vsel %vm1562, %v1395, -inf
      %v2529 = vmax.f32 %v2527, %v2528
      %v2530 = vsel %vm1562, %v1396, -inf
      %v2531 = vmax.f32 %v2529, %v2530
      %v2532 = vsel %vm1562, %v1397, -inf
      %v2533 = vmax.f32 %v2531, %v2532
      %v2534 = vsel %vm1562, %v1398, -inf
      %v2535 = vmax.f32 %v2533, %v2534
      %v2536 = vsel %vm1562, %v1399, -inf
      %v2537 = vmax.f32 %v2535, %v2536
      %v2538 = vsel %vm1562, %v1400, -inf
      %v2539 = vmax.f32 %v2537, %v2538
      %v2540 = vsel %vm1562, %v1401, -inf
      %v2541 = vmax.f32 %v2539, %v2540
      %v2542 = vsel %vm1562, %v1402, -inf
      %v2543 = vmax.f32 %v2541, %v2542
      %v2544 = vsel %vm1562, %v1403, -inf
      %v2545 = vmax.f32 %v2543, %v2544
      %v2546 = vsel %vm1562, %v1404, -inf
      %v2547 = vmax.f32 %v2545, %v2546
      %v2548 = vsel %vm1562, %v1405, -inf
      %v2549 = vmax.f32 %v2547, %v2548
      %v2550 = vsel %vm1562, %v1406, -inf
      %v2551 = vmax.f32 %v2549, %v2550
      %v2552 = vsel %vm1562, %v1407, -inf
      %v2553 = vmax.f32 %v2551, %v2552
      %v2554 = vsel %vm1636, %v1408, -inf
      %v2555 = vmax.f32 %v2553, %v2554
      %v2556 = vrot.slane %v2555, 4
      %v2557 = vmax.f32 %v2555, %v2556
      %v2558 = vrot.slane %v2557, 2
      %v2559 = vmax.f32 %v2557, %v2558
      %v2560 = vrot.slane %v2559, 1
      %v2561 = vmax.f32 %v2559, %v2560
      %v2562 = vsel %vm1562, %v1409, -inf
      %v2563 = vsel %vm1562, %v1410, -inf
      %v2564 = vmax.f32 %v2562, %v2563
      %v2565 = vsel %vm1562, %v1411, -inf
      %v2566 = vmax.f32 %v2564, %v2565
      %v2567 = vsel %vm1562, %v1412, -inf
      %v2568 = vmax.f32 %v2566, %v2567
      %v2569 = vsel %vm1562, %v1413, -inf
      %v2570 = vmax.f32 %v2568, %v2569
      %v2571 = vsel %vm1562, %v1414, -inf
      %v2572 = vmax.f32 %v2570, %v2571
      %v2573 = vsel %vm1562, %v1415, -inf
      %v2574 = vmax.f32 %v2572, %v2573
      %v2575 = vsel %vm1562, %v1416, -inf
      %v2576 = vmax.f32 %v2574, %v2575
      %v2577 = vsel %vm1562, %v1417, -inf
      %v2578 = vmax.f32 %v2576, %v2577
      %v2579 = vsel %vm1562, %v1418, -inf
      %v2580 = vmax.f32 %v2578, %v2579
      %v2581 = vsel %vm1562, %v1419, -inf
      %v2582 = vmax.f32 %v2580, %v2581
      %v2583 = vsel %vm1562, %v1420, -inf
      %v2584 = vmax.f32 %v2582, %v2583
      %v2585 = vsel %vm1562, %v1421, -inf
      %v2586 = vmax.f32 %v2584, %v2585
      %v2587 = vsel %vm1562, %v1422, -inf
      %v2588 = vmax.f32 %v2586, %v2587
      %v2589 = vsel %vm1562, %v1423, -inf
      %v2590 = vmax.f32 %v2588, %v2589
      %v2591 = vsel %vm1562, %v1424, -inf
      %v2592 = vmax.f32 %v2590, %v2591
      %v2593 = vsel %vm1562, %v1425, -inf
      %v2594 = vmax.f32 %v2592, %v2593
      %v2595 = vsel %vm1562, %v1426, -inf
      %v2596 = vmax.f32 %v2594, %v2595
      %v2597 = vsel %vm1562, %v1427, -inf
      %v2598 = vmax.f32 %v2596, %v2597
      %v2599 = vsel %vm1562, %v1428, -inf
      %v2600 = vmax.f32 %v2598, %v2599
      %v2601 = vsel %vm1562, %v1429, -inf
      %v2602 = vmax.f32 %v2600, %v2601
      %v2603 = vsel %vm1562, %v1430, -inf
      %v2604 = vmax.f32 %v2602, %v2603
      %v2605 = vsel %vm1562, %v1431, -inf
      %v2606 = vmax.f32 %v2604, %v2605
      %v2607 = vsel %vm1562, %v1432, -inf
      %v2608 = vmax.f32 %v2606, %v2607
      %v2609 = vsel %vm1562, %v1433, -inf
      %v2610 = vmax.f32 %v2608, %v2609
      %v2611 = vsel %vm1562, %v1434, -inf
      %v2612 = vmax.f32 %v2610, %v2611
      %v2613 = vsel %vm1562, %v1435, -inf
      %v2614 = vmax.f32 %v2612, %v2613
      %v2615 = vsel %vm1562, %v1436, -inf
      %v2616 = vmax.f32 %v2614, %v2615
      %v2617 = vsel %vm1562, %v1437, -inf
      %v2618 = vmax.f32 %v2616, %v2617
      %v2619 = vsel %vm1562, %v1438, -inf
      %v2620 = vmax.f32 %v2618, %v2619
      %v2621 = vsel %vm1562, %v1439, -inf
      %v2622 = vmax.f32 %v2620, %v2621
      %v2623 = vsel %vm1562, %v1440, -inf
      %v2624 = vmax.f32 %v2622, %v2623
      %v2625 = vsel %vm1562, %v1441, -inf
      %v2626 = vmax.f32 %v2624, %v2625
      %v2627 = vsel %vm1562, %v1442, -inf
      %v2628 = vmax.f32 %v2626, %v2627
      %v2629 = vsel %vm1562, %v1443, -inf
      %v2630 = vmax.f32 %v2628, %v2629
      %v2631 = vsel %vm1562, %v1444, -inf
      %v2632 = vmax.f32 %v2630, %v2631
      %v2633 = vsel %vm1562, %v1445, -inf
      %v2634 = vmax.f32 %v2632, %v2633
      %v2635 = vsel %vm1636, %v1446, -inf
      %v2636 = vmax.f32 %v2634, %v2635
      %v2637 = vrot.slane %v2636, 4
      %v2638 = vmax.f32 %v2636, %v2637
      %v2639 = vrot.slane %v2638, 2
      %v2640 = vmax.f32 %v2638, %v2639
      %v2641 = vrot.slane %v2640, 1
      %v2642 = vmax.f32 %v2640, %v2641
      %v2643 = vsel %vm1562, %v1447, -inf
      %v2644 = vsel %vm1562, %v1448, -inf
      %v2645 = vmax.f32 %v2643, %v2644
      %v2646 = vsel %vm1562, %v1449, -inf
      %v2647 = vmax.f32 %v2645, %v2646
      %v2648 = vsel %vm1562, %v1450, -inf
      %v2649 = vmax.f32 %v2647, %v2648
      %v2650 = vsel %vm1562, %v1451, -inf
      %v2651 = vmax.f32 %v2649, %v2650
      %v2652 = vsel %vm1562, %v1452, -inf
      %v2653 = vmax.f32 %v2651, %v2652
      %v2654 = vsel %vm1562, %v1453, -inf
      %v2655 = vmax.f32 %v2653, %v2654
      %v2656 = vsel %vm1562, %v1454, -inf
      %v2657 = vmax.f32 %v2655, %v2656
      %v2658 = vsel %vm1562, %v1455, -inf
      %v2659 = vmax.f32 %v2657, %v2658
      %v2660 = vsel %vm1562, %v1456, -inf
      %v2661 = vmax.f32 %v2659, %v2660
      %v2662 = vsel %vm1562, %v1457, -inf
      %v2663 = vmax.f32 %v2661, %v2662
      %v2664 = vsel %vm1562, %v1458, -inf
      %v2665 = vmax.f32 %v2663, %v2664
      %v2666 = vsel %vm1562, %v1459, -inf
      %v2667 = vmax.f32 %v2665, %v2666
      %v2668 = vsel %vm1562, %v1460, -inf
      %v2669 = vmax.f32 %v2667, %v2668
      %v2670 = vsel %vm1562, %v1461, -inf
      %v2671 = vmax.f32 %v2669, %v2670
      %v2672 = vsel %vm1562, %v1462, -inf
      %v2673 = vmax.f32 %v2671, %v2672
      %v2674 = vsel %vm1562, %v1463, -inf
      %v2675 = vmax.f32 %v2673, %v2674
      %v2676 = vsel %vm1562, %v1464, -inf
      %v2677 = vmax.f32 %v2675, %v2676
      %v2678 = vsel %vm1562, %v1465, -inf
      %v2679 = vmax.f32 %v2677, %v2678
      %v2680 = vsel %vm1562, %v1466, -inf
      %v2681 = vmax.f32 %v2679, %v2680
      %v2682 = vsel %vm1562, %v1467, -inf
      %v2683 = vmax.f32 %v2681, %v2682
      %v2684 = vsel %vm1562, %v1468, -inf
      %v2685 = vmax.f32 %v2683, %v2684
      %v2686 = vsel %vm1562, %v1469, -inf
      %v2687 = vmax.f32 %v2685, %v2686
      %v2688 = vsel %vm1562, %v1470, -inf
      %v2689 = vmax.f32 %v2687, %v2688
      %v2690 = vsel %vm1562, %v1471, -inf
      %v2691 = vmax.f32 %v2689, %v2690
      %v2692 = vsel %vm1562, %v1472, -inf
      %v2693 = vmax.f32 %v2691, %v2692
      %v2694 = vsel %vm1562, %v1473, -inf
      %v2695 = vmax.f32 %v2693, %v2694
      %v2696 = vsel %vm1562, %v1474, -inf
      %v2697 = vmax.f32 %v2695, %v2696
      %v2698 = vsel %vm1562, %v1475, -inf
      %v2699 = vmax.f32 %v2697, %v2698
      %v2700 = vsel %vm1562, %v1476, -inf
      %v2701 = vmax.f32 %v2699, %v2700
      %v2702 = vsel %vm1562, %v1477, -inf
      %v2703 = vmax.f32 %v2701, %v2702
      %v2704 = vsel %vm1562, %v1478, -inf
      %v2705 = vmax.f32 %v2703, %v2704
      %v2706 = vsel %vm1562, %v1479, -inf
      %v2707 = vmax.f32 %v2705, %v2706
      %v2708 = vsel %vm1562, %v1480, -inf
      %v2709 = vmax.f32 %v2707, %v2708
      %v2710 = vsel %vm1562, %v1481, -inf
      %v2711 = vmax.f32 %v2709, %v2710
      %v2712 = vsel %vm1562, %v1482, -inf
      %v2713 = vmax.f32 %v2711, %v2712
      %v2714 = vsel %vm1562, %v1483, -inf
      %v2715 = vmax.f32 %v2713, %v2714
      %v2716 = vsel %vm1636, %v1484, -inf
      %v2717 = vmax.f32 %v2715, %v2716
      %v2718 = vrot.slane %v2717, 4
      %v2719 = vmax.f32 %v2717, %v2718
      %v2720 = vrot.slane %v2719, 2
      %v2721 = vmax.f32 %v2719, %v2720
      %v2722 = vrot.slane %v2721, 1
      %v2723 = vmax.f32 %v2721, %v2722
      %v2724 = vsel %vm1562, %v1485, -inf
      %v2725 = vsel %vm1562, %v1486, -inf
      %v2726 = vmax.f32 %v2724, %v2725
      %v2727 = vsel %vm1562, %v1487, -inf
      %v2728 = vmax.f32 %v2726, %v2727
      %v2729 = vsel %vm1562, %v1488, -inf
      %v2730 = vmax.f32 %v2728, %v2729
      %v2731 = vsel %vm1562, %v1489, -inf
      %v2732 = vmax.f32 %v2730, %v2731
      %v2733 = vsel %vm1562, %v1490, -inf
      %v2734 = vmax.f32 %v2732, %v2733
      %v2735 = vsel %vm1562, %v1491, -inf
      %v2736 = vmax.f32 %v2734, %v2735
      %v2737 = vsel %vm1562, %v1492, -inf
      %v2738 = vmax.f32 %v2736, %v2737
      %v2739 = vsel %vm1562, %v1493, -inf
      %v2740 = vmax.f32 %v2738, %v2739
      %v2741 = vsel %vm1562, %v1494, -inf
      %v2742 = vmax.f32 %v2740, %v2741
      %v2743 = vsel %vm1562, %v1495, -inf
      %v2744 = vmax.f32 %v2742, %v2743
      %v2745 = vsel %vm1562, %v1496, -inf
      %v2746 = vmax.f32 %v2744, %v2745
      %v2747 = vsel %vm1562, %v1497, -inf
      %v2748 = vmax.f32 %v2746, %v2747
      %v2749 = vsel %vm1562, %v1498, -inf
      %v2750 = vmax.f32 %v2748, %v2749
      %v2751 = vsel %vm1562, %v1499, -inf
      %v2752 = vmax.f32 %v2750, %v2751
      %v2753 = vsel %vm1562, %v1500, -inf
      %v2754 = vmax.f32 %v2752, %v2753
      %v2755 = vsel %vm1562, %v1501, -inf
      %v2756 = vmax.f32 %v2754, %v2755
      %v2757 = vsel %vm1562, %v1502, -inf
      %v2758 = vmax.f32 %v2756, %v2757
      %v2759 = vsel %vm1562, %v1503, -inf
      %v2760 = vmax.f32 %v2758, %v2759
      %v2761 = vsel %vm1562, %v1504, -inf
      %v2762 = vmax.f32 %v2760, %v2761
      %v2763 = vsel %vm1562, %v1505, -inf
      %v2764 = vmax.f32 %v2762, %v2763
      %v2765 = vsel %vm1562, %v1506, -inf
      %v2766 = vmax.f32 %v2764, %v2765
      %v2767 = vsel %vm1562, %v1507, -inf
      %v2768 = vmax.f32 %v2766, %v2767
      %v2769 = vsel %vm1562, %v1508, -inf
      %v2770 = vmax.f32 %v2768, %v2769
      %v2771 = vsel %vm1562, %v1509, -inf
      %v2772 = vmax.f32 %v2770, %v2771
      %v2773 = vsel %vm1562, %v1510, -inf
      %v2774 = vmax.f32 %v2772, %v2773
      %v2775 = vsel %vm1562, %v1511, -inf
      %v2776 = vmax.f32 %v2774, %v2775
      %v2777 = vsel %vm1562, %v1512, -inf
      %v2778 = vmax.f32 %v2776, %v2777
      %v2779 = vsel %vm1562, %v1513, -inf
      %v2780 = vmax.f32 %v2778, %v2779
      %v2781 = vsel %vm1562, %v1514, -inf
      %v2782 = vmax.f32 %v2780, %v2781
      %v2783 = vsel %vm1562, %v1515, -inf
      %v2784 = vmax.f32 %v2782, %v2783
      %v2785 = vsel %vm1562, %v1516, -inf
      %v2786 = vmax.f32 %v2784, %v2785
      %v2787 = vsel %vm1562, %v1517, -inf
      %v2788 = vmax.f32 %v2786, %v2787
      %v2789 = vsel %vm1562, %v1518, -inf
      %v2790 = vmax.f32 %v2788, %v2789
      %v2791 = vsel %vm1562, %v1519, -inf
      %v2792 = vmax.f32 %v2790, %v2791
      %v2793 = vsel %vm1562, %v1520, -inf
      %v2794 = vmax.f32 %v2792, %v2793
      %v2795 = vsel %vm1562, %v1521, -inf
      %v2796 = vmax.f32 %v2794, %v2795
      %v2797 = vsel %vm1636, %v1522, -inf
      %v2798 = vmax.f32 %v2796, %v2797
      %v2799 = vrot.slane %v2798, 4
      %v2800 = vmax.f32 %v2798, %v2799
      %v2801 = vrot.slane %v2800, 2
      %v2802 = vmax.f32 %v2800, %v2801
      %v2803 = vrot.slane %v2802, 1
      %v2804 = vmax.f32 %v2802, %v2803
      %v2805 = vsel %vm1562, %v1523, -inf
      %v2806 = vsel %vm1562, %v1524, -inf
      %v2807 = vmax.f32 %v2805, %v2806
      %v2808 = vsel %vm1562, %v1525, -inf
      %v2809 = vmax.f32 %v2807, %v2808
      %v2810 = vsel %vm1562, %v1526, -inf
      %v2811 = vmax.f32 %v2809, %v2810
      %v2812 = vsel %vm1562, %v1527, -inf
      %v2813 = vmax.f32 %v2811, %v2812
      %v2814 = vsel %vm1562, %v1528, -inf
      %v2815 = vmax.f32 %v2813, %v2814
      %v2816 = vsel %vm1562, %v1529, -inf
      %v2817 = vmax.f32 %v2815, %v2816
      %v2818 = vsel %vm1562, %v1530, -inf
      %v2819 = vmax.f32 %v2817, %v2818
      %v2820 = vsel %vm1562, %v1531, -inf
      %v2821 = vmax.f32 %v2819, %v2820
      %v2822 = vsel %vm1562, %v1532, -inf
      %v2823 = vmax.f32 %v2821, %v2822
      %v2824 = vsel %vm1562, %v1533, -inf
      %v2825 = vmax.f32 %v2823, %v2824
      %v2826 = vsel %vm1562, %v1534, -inf
      %v2827 = vmax.f32 %v2825, %v2826
      %v2828 = vsel %vm1562, %v1535, -inf
      %v2829 = vmax.f32 %v2827, %v2828
      %v2830 = vsel %vm1562, %v1536, -inf
      %v2831 = vmax.f32 %v2829, %v2830
      %v2832 = vsel %vm1562, %v1537, -inf
      %v2833 = vmax.f32 %v2831, %v2832
      %v2834 = vsel %vm1562, %v1538, -inf
      %v2835 = vmax.f32 %v2833, %v2834
      %v2836 = vsel %vm1562, %v1539, -inf
      %v2837 = vmax.f32 %v2835, %v2836
      %v2838 = vsel %vm1562, %v1540, -inf
      %v2839 = vmax.f32 %v2837, %v2838
      %v2840 = vsel %vm1562, %v1541, -inf
      %v2841 = vmax.f32 %v2839, %v2840
      %v2842 = vsel %vm1562, %v1542, -inf
      %v2843 = vmax.f32 %v2841, %v2842
      %v2844 = vsel %vm1562, %v1543, -inf
      %v2845 = vmax.f32 %v2843, %v2844
      %v2846 = vsel %vm1562, %v1544, -inf
      %v2847 = vmax.f32 %v2845, %v2846
      %v2848 = vsel %vm1562, %v1545, -inf
      %v2849 = vmax.f32 %v2847, %v2848
      %v2850 = vsel %vm1562, %v1546, -inf
      %v2851 = vmax.f32 %v2849, %v2850
      %v2852 = vsel %vm1562, %v1547, -inf
      %v2853 = vmax.f32 %v2851, %v2852
      %v2854 = vsel %vm1562, %v1548, -inf
      %v2855 = vmax.f32 %v2853, %v2854
      %v2856 = vsel %vm1562, %v1549, -inf
      %v2857 = vmax.f32 %v2855, %v2856
      %v2858 = vsel %vm1562, %v1550, -inf
      %v2859 = vmax.f32 %v2857, %v2858
      %v2860 = vsel %vm1562, %v1551, -inf
      %v2861 = vmax.f32 %v2859, %v2860
      %v2862 = vsel %vm1562, %v1552, -inf
      %v2863 = vmax.f32 %v2861, %v2862
      %v2864 = vsel %vm1562, %v1553, -inf
      %v2865 = vmax.f32 %v2863, %v2864
      %v2866 = vsel %vm1562, %v1554, -inf
      %v2867 = vmax.f32 %v2865, %v2866
      %v2868 = vsel %vm1562, %v1555, -inf
      %v2869 = vmax.f32 %v2867, %v2868
      %v2870 = vsel %vm1562, %v1556, -inf
      %v2871 = vmax.f32 %v2869, %v2870
      %v2872 = vsel %vm1562, %v1557, -inf
      %v2873 = vmax.f32 %v2871, %v2872
      %v2874 = vsel %vm1562, %v1558, -inf
      %v2875 = vmax.f32 %v2873, %v2874
      %v2876 = vsel %vm1562, %v1559, -inf
      %v2877 = vmax.f32 %v2875, %v2876
      %v2878 = vsel %vm1636, %v1560, -inf
      %v2879 = vmax.f32 %v2877, %v2878
      %v2880 = vrot.slane %v2879, 4
      %v2881 = vmax.f32 %v2879, %v2880
      %v2882 = vrot.slane %v2881, 2
      %v2883 = vmax.f32 %v2881, %v2882
      %v2884 = vrot.slane %v2883, 1
      %v2885 = vmax.f32 %v2883, %v2884
      %v2894 = vsel %vm2220, %v2399, %v2318
      %v2895 = vsel %vm2222, %v2480, %v2894
      %v2896 = vsel %vm2224, %v2561, %v2895
      %v2897 = vsel %vm2226, %v2642, %v2896
      %v2898 = vsel %vm2228, %v2723, %v2897
      %v2899 = vsel %vm2230, %v2804, %v2898
      %v2900 = vsel %vm2232, %v2885, %v2899
      %v2902 = vmax.f32 %v2237, %v2900
      %2903 = vst.msk [vmem:[#allocation3] sm:$0xff] %vm1562, %v2902
      // Predicated region
      $region41: #{plastic_hinge_counts.1} parent=35 // pred_check
        %p2904 = pneg %p338
      $region42: #{plastic_hinge_counts.1} parent=35 // pred_check_branch
        %2906 = sbr.rel (%p2904) target = $region44
      $region43: #{plastic_hinge_counts.1} parent=35 // pred_region
        %v2907 = vld [vmem:[#allocation2] sm:$0xff]
        %v2908 = vld [vmem:[#allocation3] sm:$0xff]
        %v2909 = vld [vmem:[%s289] sm:$0xff]
        %s2910 = sld [smem:[#allocation4]]
        %v2911 = vstv %s2910
        %v2912 = vmul.f32 %v2911, %v2909
        %s2913 = smul.u32 %s20, 8
        %s2914 = ssub.s32 10, %s2913
        %v2915 = vlaneseq
        %v2916 = vshrl.u32 %v2915, 7
        %v2917 = vstv %s2914
        %vm2918 = vcmp.lt.s32.totalorder %v2916, %v2917
        %vm2919 = vcmp.ne.f32.partialorder %v2909, 0.0
        %vm2920 = vmand %vm2919, %vm2918
        %p2921 = scmp.lt.s32.totalorder %s2914, 8
        %s2922 = scalar_select %p2921, %s2914, 8
        %s2923 = smul.u32 %s2922, 6
        %vm2924 = vcmp.ge.f32.partialorder %v2908, %v2912
        %vm2925 = vmand %vm2924, %vm2920
        %vm2926 = vcmp.ge.f32.partialorder %v2907, %v2912
        %vm2927 = vmand %vm2926, %vm2920
        %vm2928 = vmand %vm2925, %vm2927
        %v2929 = vsel %vm2928, 1, 0
        %v2930 = vsel %vm1562, %v2929, 0
        %v2931 = vand.u32 %v2930, 65535
        %v2932 = vshrl.u32 %v2930, 16
        %v2933 = vcvt.s32.f32 %v2931
        %v2934 = vcvt.s32.f32 %v2932
        %2935 = vadd.xlane.f32.xlu0 %v2933
        %v2936 = vpop.xlane.xlu0 %2935
        %2937 = vadd.xlane.f32.xlu0 %v2934
        %v2938 = vpop.xlane.xlu0 %2937
        %v2939 = vcvt.f32.s32 %v2936
        %v2940 = vcvt.f32.s32 %v2938
        %v2941 = vshll.u32 %v2940, 16
        %v2942 = vadd.s32 %v2941, %v2939
        %v2943 = vrot.slane %v2942, 4
        %v2944 = vadd.s32 %v2942, %v2943
        %v2945 = vrot.slane %v2944, 2
        %v2946 = vadd.s32 %v2944, %v2945
        %v2947 = vrot.slane %v2946, 1
        %v2948 = vadd.s32 %v2946, %v2947
        %s2949 = vtos %v2948
        %v2950 = vsel %vm2925, 1, 0
        %v2951 = vsel %vm1562, %v2950, 0
        %v2952 = vand.u32 %v2951, 65535
        %v2953 = vshrl.u32 %v2951, 16
        %v2954 = vcvt.s32.f32 %v2952
        %v2955 = vcvt.s32.f32 %v2953
        %2956 = vadd.xlane.f32.xlu0 %v2954
        %v2957 = vpop.xlane.xlu0 %2956
        %2958 = vadd.xlane.f32.xlu0 %v2955
        %v2959 = vpop.xlane.xlu0 %2958
        %v2960 = vcvt.f32.s32 %v2957
        %v2961 = vcvt.f32.s32 %v2959
        %v2962 = vshll.u32 %v2961, 16
        %v2963 = vadd.s32 %v2962, %v2960
        %v2964 = vrot.slane %v2963, 4
        %v2965 = vadd.s32 %v2963, %v2964
        %v2966 = vrot.slane %v2965, 2
        %v2967 = vadd.s32 %v2965, %v2966
        %v2968 = vrot.slane %v2967, 1
        %v2969 = vadd.s32 %v2967, %v2968
        %s2970 = vtos %v2969
        %v2971 = vsel %vm2927, 1, 0
        %v2972 = vsel %vm1562, %v2971, 0
        %v2973 = vand.u32 %v2972, 65535
        %v2974 = vshrl.u32 %v2972, 16
        %v2975 = vcvt.s32.f32 %v2973
        %v2976 = vcvt.s32.f32 %v2974
        %2977 = vadd.xlane.f32.xlu0 %v2975
        %v2978 = vpop.xlane.xlu0 %2977
        %2979 = vadd.xlane.f32.xlu0 %v2976
        %v2980 = vpop.xlane.xlu0 %2979
        %v2981 = vcvt.f32.s32 %v2978
        %v2982 = vcvt.f32.s32 %v2980
        %v2983 = vshll.u32 %v2982, 16
        %v2984 = vadd.s32 %v2983, %v2981
        %v2985 = vrot.slane %v2984, 4
        %v2986 = vadd.s32 %v2984, %v2985
        %v2987 = vrot.slane %v2986, 2
        %v2988 = vadd.s32 %v2986, %v2987
        %v2989 = vrot.slane %v2988, 1
        %v2990 = vadd.s32 %v2988, %v2989
        %s2991 = vtos %v2990
        %s2992 = ssub.s32 %s2991, %s2949
        %s2993 = ssub.s32 %s2970, %s2949
        %s2994 = ssub.s32 %s2923, %s2970
        %s2995 = ssub.s32 %s2994, %s2991
        %s2996 = sadd.s32 %s2995, %s2949
        %v2997 = vlaneseq
        %v2998 = vand.u32 %v2997, 127
        %vm2999 = vcmp.eq.s32.totalorder %v2916, 0
        %vm3000 = vcmp.eq.s32.totalorder %v2998, 0
        %vm3001 = vmand %vm2999, %vm3000
        %v3002 = vstv %s2949
        %v3003 = vsel %vm3001, %v3002, 0
        %vm3004 = vcmp.eq.s32.totalorder %v2998, 1
        %vm3005 = vmand %vm2999, %vm3004
        %v3006 = vstv %s2992
        %v3007 = vsel %vm3005, %v3006, 0
        %v3008 = vadd.s32 %v3003, %v3007
        %vm3009 = vcmp.eq.s32.totalorder %v2998, 2
        %vm3010 = vmand %vm2999, %vm3009
        %v3011 = vstv %s2993
        %v3012 = vsel %vm3010, %v3011, 0
        %v3013 = vadd.s32 %v3008, %v3012
        %vm3014 = vcmp.eq.s32.totalorder %v2998, 3
        %vm3015 = vmand %vm2999, %vm3014
        %v3016 = vstv %s2996
        %v3017 = vsel %vm3015, %v3016, 0
        %v3018 = vadd.s32 %v3013, %v3017
        %3019 = vst [vmem:[%s337] sm:$0xff] %v3018
      $region44: #{plastic_hinge_counts.1} parent=35 // pred_fallthru
        _
      %p3020 = scmp.lt.s32.totalorder %s20, 1
      %s3021 = scalar_select %p3020, %s20, 1
      %s3022 = smul.addr %s3021, 8
      %s3023 = scalar_lea.vmem %s4, %s3022
      // Predicated region
      $region45: #{plastic_hinge_counts.1} parent=35 // pred_check
        %p3024 = pneg %p149
      $region46: #{plastic_hinge_counts.1} parent=35 // pred_check_branch
        %3026 = sbr.rel (%p3024) target = $region48
      $region47: #{plastic_hinge_counts.1} parent=35 // pred_region
        _
      $region48: #{plastic_hinge_counts.1} parent=35 // pred_fallthru
        _
    $region36: #{plastic_hinge_counts.1} parent=5 // pred_fallthru
      _
    %p3027 = scmp.le.s32.totalorder 2, %s11
    // Predicated region
    $region49: #{plastic_hinge_counts.1} parent=5 // pred_check
      %p3028 = pneg %p3027
    $region50: #{plastic_hinge_counts.1} parent=5 // pred_check_branch
      %3030 = sbr.rel (%p3028) target = $region52
    $region51: #{plastic_hinge_counts.1} parent=5 // pred_region
      %s3031 = ssub.s32 %s11, 2
      // Predicated region
      $region53: #{plastic_hinge_counts.1} parent=51 // pred_check
        %p3032 = pneg %p155
      $region54: #{plastic_hinge_counts.1} parent=51 // pred_check_branch
        %3034 = sbr.rel (%p3032) target = $region56
      $region55: #{plastic_hinge_counts.1} parent=51 // pred_region
        %p3035 = scmp.lt.s32.totalorder %s22, 1
        %s3036 = scalar_select %p3035, %s22, 1
        %s3037 = smul.addr %s3036, 8
        %s3038 = scalar_lea.vmem %s4, %s3037
      $region56: #{plastic_hinge_counts.1} parent=51 // pred_fallthru
        _
    $region52: #{plastic_hinge_counts.1} parent=5 // pred_fallthru
      _
  $region6: #{plastic_hinge_counts.1} parent=0 // loop_footer
    %s15 = sadd.s32 1, %s11
  $region7: #{plastic_hinge_counts.1} parent=0 // loop_footer_branch
    %10 = sbr.rel target = $region3
  $region8: #{plastic_hinge_counts.1} parent=0 // loop_exit
    _

</llo_original>
